<compile_context>
chip_gen: v5e
topology: v5e:2x2
jax: 0.10.0
libtpu: 0.0.40
codegen_flags: <defaults>
</compile_context>

<pallas_src>
import functools
import numpy as np

import jax
import jax.numpy as jnp
from jax.experimental import pallas as pl
from jax.experimental.pallas import tpu as pltpu


# ----------------------------------------------------------------------------
# Fixed sin/cos positional embeddings (exact re-implementation of the torch fns)
# ----------------------------------------------------------------------------
def fixed_sincos2d_embeddings(ncols: int, nrows: int, dim: int) -> np.ndarray:
    freqs = 1 / 10000 ** np.linspace(0, 1, dim // 4)
    x = np.outer(np.arange(0, nrows, dtype=np.float32), freqs)
    y = np.outer(np.arange(0, ncols, dtype=np.float32), freqs)
    x = np.broadcast_to(x[None, :, :], (ncols, nrows, dim // 4))
    y = np.broadcast_to(y[:, None, :], (ncols, nrows, dim // 4))
    return np.concatenate((np.sin(x), np.cos(x), np.sin(y), np.cos(y)), axis=2).astype(np.float32)


def fixed_sincos1d_embeddings(max_len: int, dim: int) -> np.ndarray:
    freqs = 1 / 10000 ** np.linspace(0, 1, dim // 2)
    pos = np.arange(0, max_len, dtype=np.float32)[:, None]
    pos_enc = np.dot(pos, freqs[None, :])
    return np.concatenate([np.sin(pos_enc), np.cos(pos_enc)], axis=1).astype(np.float32)


# ----------------------------------------------------------------------------
# In-kernel helpers (traced inside the Pallas kernel)
# ----------------------------------------------------------------------------
_LN_EPS = 1e-5
_INV_SQRT2 = float(1.0 / np.sqrt(2.0))


def _layer_norm(x, w, b):
    # two-pass (mean, centered variance) like torch.nn.LayerNorm; rsqrt routes to the EUP.
    mu = jnp.mean(x, axis=-1, keepdims=True)
    xc = x - mu
    var = jnp.mean(xc * xc, axis=-1, keepdims=True)
    return xc * jax.lax.rsqrt(var + _LN_EPS) * w + b


def _gelu_exact(x):
    # Matches torch.nn.functional.gelu default (erf formulation).
    return 0.5 * x * (1.0 + jax.lax.erf(x * _INV_SQRT2))


# ----------------------------------------------------------------------------
# Fused transformer kernel: grid = (batch,), all layers unrolled in-kernel
# ----------------------------------------------------------------------------
def vit_fused_kernel(x0_ref, kbias_ref, wcat_ref, w2_ref, vecs_ref, normwb_ref,
                     out_ref, scores_ref, ctx_ref, *, heads: int):
    S_pad, D = out_ref.shape
    L = wcat_ref.shape[0]
    H = w2_ref.shape[1]
    hd = D // heads
    scale = 1.0 / float(np.sqrt(hd))

    x = x0_ref[...]                               # (S_pad, D), assembled sequence
    kbias = kbias_ref[...]                        # (1, S_pad): 0 real keys, -1e30 padded keys

    for l in range(L):                            # static unrolled layer loop (L = 2)
        wcat = wcat_ref[l]                        # (D, 3D + D + H) = [wqkv | wo | w1]
        w2 = w2_ref[l]                            # (H, D)
        vecs = vecs_ref[l]                        # (8, VEC_W) packed bias/LN vectors
        wqkv = wcat[:, :3 * D]
        wo = wcat[:, 3 * D:4 * D]
        w1 = wcat[:, 4 * D:4 * D + H]
        ln1w, ln1b = vecs[0:1, :D], vecs[1:2, :D]
        bqkv = vecs[2:3, :3 * D]
        bo = vecs[3:4, :D]
        ln2w, ln2b = vecs[4:5, :D], vecs[5:6, :D]
        b1 = vecs[6:7, :H]
        b2 = vecs[7:8, :D]

        # ---- attention sub-block ----
        h = _layer_norm(x, ln1w, ln1b)
        qkv = jnp.dot(h, wqkv, preferred_element_type=jnp.float32) + bqkv   # (S_pad, 3D)

        # stack all head scores into one (heads*S_pad, S_pad) scratch, softmax once
        for hi in range(heads):
            qh = qkv[:, hi * hd:(hi + 1) * hd]
            kh = qkv[:, D + hi * hd:D + (hi + 1) * hd]
            scores_ref[hi * S_pad:(hi + 1) * S_pad, :] = (
                jnp.einsum("qd,kd->qk", qh, kh,
                           preferred_element_type=jnp.float32) * scale)
        s = scores_ref[...] + kbias               # mask padded key columns (all heads at once)
        s = s - jnp.max(s, axis=-1, keepdims=True)
        p = jnp.exp(s)
        p = p / jnp.sum(p, axis=-1, keepdims=True)   # exact divide (fp32 parity)

        # each head's context written into its lane slice of a preallocated scratch
        for hi in range(heads):
            vh = qkv[:, 2 * D + hi * hd:2 * D + (hi + 1) * hd]
            ctx_ref[:, hi * hd:(hi + 1) * hd] = jnp.dot(
                p[hi * S_pad:(hi + 1) * S_pad, :], vh,
                preferred_element_type=jnp.float32)
        x = x + jnp.dot(ctx_ref[...], wo, preferred_element_type=jnp.float32) + bo

        # ---- feed-forward sub-block ----
        h2 = _layer_norm(x, ln2w, ln2b)
        u = jnp.dot(h2, w1, preferred_element_type=jnp.float32) + b1
        u = _gelu_exact(u)
        x = x + jnp.dot(u, w2, preferred_element_type=jnp.float32) + b2

    # ---- final LayerNorm ----
    out_ref[...] = _layer_norm(x, normwb_ref[0:1, :], normwb_ref[1:2, :])


# ----------------------------------------------------------------------------
# pallas_call wrapper
# ----------------------------------------------------------------------------
def vit_fused_call(x0, key_bias, wcat, w2s, vecs, normwb, *, heads):
    B, S_pad, D = x0.shape
    const2 = lambda b: (0, 0)
    const3 = lambda b: (0, 0, 0)
    batch3 = lambda b: (b, 0, 0)

    kern = functools.partial(vit_fused_kernel, heads=heads)
    return pl.pallas_call(
        kern,
        grid=(B,),
        in_specs=[
            pl.BlockSpec((None, S_pad, D), batch3),   # assembled input sequence (this batch el.)
            pl.BlockSpec((1, S_pad), const2),         # additive key-padding mask
            pl.BlockSpec(wcat.shape, const3),         # stacked [wqkv | wo | w1] slab (all layers)
            pl.BlockSpec(w2s.shape, const3),          # stacked w2 (all layers)
            pl.BlockSpec(vecs.shape, const3),         # stacked bias / LN vector slab (all layers)
            pl.BlockSpec(normwb.shape, const2),       # final norm weight & bias
        ],
        out_specs=pl.BlockSpec((None, S_pad, D), batch3),
        out_shape=jax.ShapeDtypeStruct((B, S_pad, D), jnp.float32),
        scratch_shapes=[
            pltpu.VMEM((heads * S_pad, S_pad), jnp.float32),   # stacked head scores
            pltpu.VMEM((S_pad, D), jnp.float32),               # per-layer attention context
        ],
        compiler_params=pltpu.CompilerParams(
            dimension_semantics=("parallel",)),       # batch split across TCs on v7x
    )(x0, key_bias, wcat, w2s, vecs, normwb)


# ----------------------------------------------------------------------------
# Model: parameter construction + forward
# ----------------------------------------------------------------------------
class Cfg:
    layers = 2
    dim = 32
    heads = 4
    patch_size = 4
    image_size = 16
    max_len = 16
    truncation_len = 8
    text_vocab_size = 100

    @property
    def hidden_dim(self):
        return 4 * self.dim

    @property
    def num_patches(self):
        return (self.image_size // self.patch_size,) * 2


def make_params(cfg, key):
    D, H, L = cfg.dim, cfg.hidden_dim, cfg.layers
    ps = cfg.patch_size
    ki = iter(jax.random.split(key, 4 + L * 8))

    def lin(k, fan_in, fan_out):
        # deterministic synthetic weights; stored pre-transposed as (in, out)
        return jax.random.normal(k, (fan_in, fan_out), jnp.float32) * 0.02

    params = {
        # PatchEmbed: Conv2d(1, D, ps, stride=ps) folded to a (ps*ps, D) matmul
        "patch_w": lin(next(ki), ps * ps, D),
        "patch_b": jax.random.normal(next(ki), (1, D), jnp.float32) * 0.02,
        "cls_token": jnp.zeros((1, 1, D), jnp.float32),
        "wpe": jnp.asarray(
            fixed_sincos2d_embeddings(*cfg.num_patches, cfg.dim).reshape(-1, D)),
        # TextEmbed
        "text_wte": jax.random.normal(next(ki), (cfg.text_vocab_size, D), jnp.float32) * 0.02,
        "text_pos": jnp.asarray(fixed_sincos1d_embeddings(cfg.max_len, D)),
        # type embeddings (zeros, as in the module)
        "img_type": jnp.zeros((1, 1, D), jnp.float32),
        "txt_type": jnp.zeros((1, 1, D), jnp.float32),
        # final norm
        "norm_w": jnp.ones((1, D), jnp.float32),
        "norm_b": jnp.zeros((1, D), jnp.float32),
    }

    # --- per-layer weights, packed into three stacked slabs for the kernel ---
    VEC_W = -(-max(3 * D, H, 128) // 128) * 128          # lane-padded vector-slab width

    def row(v):
        return jnp.pad(v, ((0, 0), (0, VEC_W - v.shape[1])))

    wcat_l, w2_l, vecs_l = [], [], []
    for _ in range(L):
        wq = lin(next(ki), D, D); bq = jax.random.normal(next(ki), (1, D), jnp.float32) * 0.02
        wk = lin(next(ki), D, D); bk = jnp.zeros((1, D), jnp.float32)
        wv = lin(next(ki), D, D); bv = jnp.zeros((1, D), jnp.float32)
        wo = lin(next(ki), D, D); bo = jnp.zeros((1, D), jnp.float32)
        w1 = lin(next(ki), D, H); b1 = jax.random.normal(next(ki), (1, H), jnp.float32) * 0.02
        w2 = lin(next(ki), H, D); b2 = jnp.zeros((1, D), jnp.float32)
        ln1_w = jnp.ones((1, D), jnp.float32); ln1_b = jnp.zeros((1, D), jnp.float32)
        ln2_w = jnp.ones((1, D), jnp.float32); ln2_b = jnp.zeros((1, D), jnp.float32)

        wqkv = jnp.concatenate([wq, wk, wv], axis=1)              # (D, 3D) fused QKV
        bqkv = jnp.concatenate([bq, bk, bv], axis=1)              # (1, 3D)
        wcat_l.append(jnp.concatenate([wqkv, wo, w1], axis=1))    # (D, 3D + D + H)
        w2_l.append(w2)                                           # (H, D)
        vecs_l.append(jnp.concatenate(
            [row(ln1_w), row(ln1_b), row(bqkv), row(bo),
             row(ln2_w), row(ln2_b), row(b1), row(b2)], axis=0))  # (8, VEC_W)

    params["wcat"] = jnp.stack(wcat_l, axis=0)    # (L, D, 3D + D + H)
    params["w2s"] = jnp.stack(w2_l, axis=0)       # (L, H, D)
    params["vecs"] = jnp.stack(vecs_l, axis=0)    # (L, 8, VEC_W)
    params["normwb"] = jnp.concatenate([params["norm_w"], params["norm_b"]], axis=0)  # (2, D)
    return params


def vit_forward(params, cfg, images, texts):
    B = images.shape[0]
    ps = cfg.patch_size
    nh = nw = cfg.image_size // ps
    P = nh * nw
    T = texts.shape[1]
    D = cfg.dim
    S = 1 + P + T
    S_pad = ((S + 7) // 8) * 8          # sublane-align the sequence (25 -> 32)

    # --- glue: unfold NCHW image into non-overlapping patches ---
    patches = images.reshape(B, 1, nh, ps, nw, ps)
    patches = patches.transpose(0, 2, 4, 1, 3, 5).reshape(B, P, ps * ps)

    # --- glue: patch projection + biases (done ONCE in XLA, not per layer step) ---
    img_bias = params["wpe"] + params["patch_b"] + params["img_type"][0]          # (P, D)
    img_x = jnp.einsum("bpc,cd->bpd", patches, params["patch_w"]) + img_bias      # (B, P, D)
    # --- glue: embedding gather (data-dependent gather stays in XLA) ---
    txt_x = (params["text_wte"][texts] + params["text_pos"][:T, :]
             + params["txt_type"][0])                                             # (B, T, D)
    cls_tok = jnp.broadcast_to(params["cls_token"], (B, 1, D))                    # (B, 1, D)
    # --- glue: assemble the padded input sequence (one aligned block per batch element) ---
    x0 = jnp.concatenate(
        [cls_tok, img_x, txt_x, jnp.zeros((B, S_pad - S, D), jnp.float32)], axis=1)
    # additive softmax mask for the padded key positions
    key_bias = jnp.where(jnp.arange(S_pad) < S, 0.0, -1e30)
    key_bias = key_bias.astype(jnp.float32).reshape(1, S_pad)

    out_padded = vit_fused_call(
        x0, key_bias, params["wcat"], params["w2s"], params["vecs"], params["normwb"],
        heads=cfg.heads)
    return out_padded[:, :S, :]


if __name__ == "__main__":
    cfg = Cfg()
    key = jax.random.PRNGKey(0)
    k_param, k_img, k_txt = jax.random.split(key, 3)

    params = make_params(cfg, k_param)
    images = jax.random.normal(k_img, (2, 1, cfg.image_size, cfg.image_size), jnp.float32)
    texts = jax.random.randint(k_txt, (2, cfg.truncation_len), 0, cfg.text_vocab_size, jnp.int32)

    fwd = jax.jit(lambda p, im, tx: vit_forward(p, cfg, im, tx))
    out = fwd(params, images, texts)
    jax.block_until_ready(out)
    assert out.shape == (2, 1 + (cfg.image_size // cfg.patch_size) ** 2 + cfg.truncation_len, cfg.dim)
    print("KERNEL_OK")
</pallas_src>

<mosaic_0001>
module attributes {stable_mosaic.version = 11 : i64} {
  func.func @vit_fused_kernel(%arg0: i32, %arg1: memref<1x32x32xf32, #tpu.memory_space<vmem>>, %arg2: memref<1x32xf32, #tpu.memory_space<vmem>>, %arg3: memref<2x32x256xf32, #tpu.memory_space<vmem>>, %arg4: memref<2x128x32xf32, #tpu.memory_space<vmem>>, %arg5: memref<2x8x128xf32, #tpu.memory_space<vmem>>, %arg6: memref<2x32xf32, #tpu.memory_space<vmem>>, %arg7: memref<1x32x32xf32, #tpu.memory_space<vmem>>, %arg8: memref<128x32xf32, #tpu.memory_space<vmem>>, %arg9: memref<32x32xf32, #tpu.memory_space<vmem>>) attributes {dimension_semantics = [#tpu.dimension_semantics<parallel>], iteration_bounds = array<i64: 2>, scalar_prefetch = 0 : i64, scratch_operands = 2 : i64, tpu.core_type = #tpu.core_type<tc>, window_params = [{transform_indices = @transform_0, window_bounds = array<i64: 1, 32, 32>}, {pipeline_mode = #tpu.pipeline_mode<synchronous>, transform_indices = @transform_1, window_bounds = array<i64: 1, 32>}, {pipeline_mode = #tpu.pipeline_mode<synchronous>, transform_indices = @transform_2, window_bounds = array<i64: 2, 32, 256>}, {pipeline_mode = #tpu.pipeline_mode<synchronous>, transform_indices = @transform_3, window_bounds = array<i64: 2, 128, 32>}, {pipeline_mode = #tpu.pipeline_mode<synchronous>, transform_indices = @transform_4, window_bounds = array<i64: 2, 8, 128>}, {pipeline_mode = #tpu.pipeline_mode<synchronous>, transform_indices = @transform_5, window_bounds = array<i64: 2, 32>}, {transform_indices = @transform_6, window_bounds = array<i64: 1, 32, 32>}]} {
    %c0 = arith.constant 0 : index
    %c0_0 = arith.constant 0 : index
    %c0_1 = arith.constant 0 : index
    %0 = vector.load %arg1[%c0, %c0_0, %c0_1] : memref<1x32x32xf32, #tpu.memory_space<vmem>>, vector<1x32x32xf32>
    %1 = vector.shape_cast %0 : vector<1x32x32xf32> to vector<32x32xf32>
    %c0_2 = arith.constant 0 : index
    %c0_3 = arith.constant 0 : index
    %2 = vector.load %arg2[%c0_2, %c0_3] : memref<1x32xf32, #tpu.memory_space<vmem>>, vector<1x32xf32>
    %c0_4 = arith.constant 0 : index
    %c0_5 = arith.constant 0 : index
    %c0_6 = arith.constant 0 : index
    %3 = vector.load %arg3[%c0_4, %c0_5, %c0_6] : memref<2x32x256xf32, #tpu.memory_space<vmem>>, vector<1x32x256xf32>
    %4 = vector.shape_cast %3 : vector<1x32x256xf32> to vector<32x256xf32>
    %c0_7 = arith.constant 0 : index
    %c0_8 = arith.constant 0 : index
    %c0_9 = arith.constant 0 : index
    %5 = vector.load %arg4[%c0_7, %c0_8, %c0_9] : memref<2x128x32xf32, #tpu.memory_space<vmem>>, vector<1x128x32xf32>
    %6 = vector.shape_cast %5 : vector<1x128x32xf32> to vector<128x32xf32>
    %c0_10 = arith.constant 0 : index
    %c0_11 = arith.constant 0 : index
    %c0_12 = arith.constant 0 : index
    %7 = vector.load %arg5[%c0_10, %c0_11, %c0_12] : memref<2x8x128xf32, #tpu.memory_space<vmem>>, vector<1x8x128xf32>
    %8 = vector.shape_cast %7 : vector<1x8x128xf32> to vector<8x128xf32>
    %9 = vector.extract_strided_slice %4 {offsets = [0, 0], sizes = [32, 96], strides = [1, 1]} : vector<32x256xf32> to vector<32x96xf32>
    %10 = vector.extract_strided_slice %4 {offsets = [0, 96], sizes = [32, 32], strides = [1, 1]} : vector<32x256xf32> to vector<32x32xf32>
    %11 = vector.extract_strided_slice %4 {offsets = [0, 128], sizes = [32, 128], strides = [1, 1]} : vector<32x256xf32> to vector<32x128xf32>
    %12 = vector.extract_strided_slice %8 {offsets = [0, 0], sizes = [1, 32], strides = [1, 1]} : vector<8x128xf32> to vector<1x32xf32>
    %13 = vector.extract_strided_slice %8 {offsets = [1, 0], sizes = [1, 32], strides = [1, 1]} : vector<8x128xf32> to vector<1x32xf32>
    %14 = vector.extract_strided_slice %8 {offsets = [2, 0], sizes = [1, 96], strides = [1, 1]} : vector<8x128xf32> to vector<1x96xf32>
    %15 = vector.extract_strided_slice %8 {offsets = [3, 0], sizes = [1, 32], strides = [1, 1]} : vector<8x128xf32> to vector<1x32xf32>
    %16 = vector.extract_strided_slice %8 {offsets = [4, 0], sizes = [1, 32], strides = [1, 1]} : vector<8x128xf32> to vector<1x32xf32>
    %17 = vector.extract_strided_slice %8 {offsets = [5, 0], sizes = [1, 32], strides = [1, 1]} : vector<8x128xf32> to vector<1x32xf32>
    %18 = vector.extract_strided_slice %8 {offsets = [6, 0], sizes = [1, 128], strides = [1, 1]} : vector<8x128xf32> to vector<1x128xf32>
    %19 = vector.extract_strided_slice %8 {offsets = [7, 0], sizes = [1, 32], strides = [1, 1]} : vector<8x128xf32> to vector<1x32xf32>
    %cst = arith.constant dense<0.000000e+00> : vector<32xf32>
    %20 = vector.multi_reduction <add>, %1, %cst [1] : vector<32x32xf32> to vector<32xf32>
    %21 = vector.shape_cast %20 : vector<32xf32> to vector<32x1xf32>
    %cst_13 = arith.constant 3.200000e+01 : f32
    %22 = vector.broadcast %cst_13 : f32 to vector<32x1xf32>
    %23 = arith.divf %21, %22 : vector<32x1xf32>
    %24 = vector.broadcast %23 : vector<32x1xf32> to vector<32x32xf32>
    %25 = arith.subf %1, %24 : vector<32x32xf32>
    %26 = arith.mulf %25, %25 : vector<32x32xf32>
    %cst_14 = arith.constant dense<0.000000e+00> : vector<32xf32>
    %27 = vector.multi_reduction <add>, %26, %cst_14 [1] : vector<32x32xf32> to vector<32xf32>
    %28 = vector.shape_cast %27 : vector<32xf32> to vector<32x1xf32>
    %cst_15 = arith.constant 3.200000e+01 : f32
    %29 = vector.broadcast %cst_15 : f32 to vector<32x1xf32>
    %30 = arith.divf %28, %29 : vector<32x1xf32>
    %cst_16 = arith.constant 9.99999974E-6 : f32
    %31 = vector.broadcast %cst_16 : f32 to vector<32x1xf32>
    %32 = arith.addf %30, %31 : vector<32x1xf32>
    %33 = math.rsqrt %32 : vector<32x1xf32>
    %34 = vector.broadcast %33 : vector<32x1xf32> to vector<32x32xf32>
    %35 = arith.mulf %25, %34 : vector<32x32xf32>
    %36 = vector.broadcast %12 : vector<1x32xf32> to vector<32x32xf32>
    %37 = arith.mulf %35, %36 : vector<32x32xf32>
    %38 = vector.broadcast %13 : vector<1x32xf32> to vector<32x32xf32>
    %39 = arith.addf %37, %38 : vector<32x32xf32>
    %cst_17 = arith.constant dense<0.000000e+00> : vector<32x96xf32>
    %40 = tpu.matmul %39, %9, %cst_17 {dimension_numbers = #tpu.dot_dimension_numbers<[1], [0], [0], [1], [0, 0, 1, 1], [], []>} : vector<32x32xf32>, vector<32x96xf32>, vector<32x96xf32> -> vector<32x96xf32>
    %41 = vector.broadcast %14 : vector<1x96xf32> to vector<32x96xf32>
    %42 = arith.addf %40, %41 : vector<32x96xf32>
    %43 = vector.extract_strided_slice %42 {offsets = [0, 0], sizes = [32, 8], strides = [1, 1]} : vector<32x96xf32> to vector<32x8xf32>
    %44 = vector.extract_strided_slice %42 {offsets = [0, 32], sizes = [32, 8], strides = [1, 1]} : vector<32x96xf32> to vector<32x8xf32>
    "tpu.trace_start"() <{level = 10 : i32, message = "qd,kd->qk"}> : () -> ()
    %cst_18 = arith.constant dense<0.000000e+00> : vector<32x32xf32>
    %45 = tpu.matmul %43, %44, %cst_18 {dimension_numbers = #tpu.dot_dimension_numbers<[1], [1], [0], [0], [0, 0, 1, 0], [], []>} : vector<32x8xf32>, vector<32x8xf32>, vector<32x32xf32> -> vector<32x32xf32>
    "tpu.trace_stop"() : () -> ()
    %cst_19 = arith.constant 0.353553385 : f32
    %46 = vector.broadcast %cst_19 : f32 to vector<32x32xf32>
    %47 = arith.mulf %45, %46 : vector<32x32xf32>
    %c0_20 = arith.constant 0 : index
    %c0_21 = arith.constant 0 : index
    %48 = vector.load %arg8[%c0_20, %c0_21] : memref<128x32xf32, #tpu.memory_space<vmem>>, vector<32x32xf32>
    tpu.vector_store %arg8[%c0_20, %c0_21], %47 {strides = array<i32>} : memref<128x32xf32, #tpu.memory_space<vmem>>, vector<32x32xf32>,
    %49 = vector.extract_strided_slice %42 {offsets = [0, 8], sizes = [32, 8], strides = [1, 1]} : vector<32x96xf32> to vector<32x8xf32>
    %50 = vector.extract_strided_slice %42 {offsets = [0, 40], sizes = [32, 8], strides = [1, 1]} : vector<32x96xf32> to vector<32x8xf32>
    "tpu.trace_start"() <{level = 10 : i32, message = "qd,kd->qk"}> : () -> ()
    %cst_22 = arith.constant dense<0.000000e+00> : vector<32x32xf32>
    %51 = tpu.matmul %49, %50, %cst_22 {dimension_numbers = #tpu.dot_dimension_numbers<[1], [1], [0], [0], [0, 0, 1, 0], [], []>} : vector<32x8xf32>, vector<32x8xf32>, vector<32x32xf32> -> vector<32x32xf32>
    "tpu.trace_stop"() : () -> ()
    %cst_23 = arith.constant 0.353553385 : f32
    %52 = vector.broadcast %cst_23 : f32 to vector<32x32xf32>
    %53 = arith.mulf %51, %52 : vector<32x32xf32>
    %c32 = arith.constant 32 : index
    %c0_24 = arith.constant 0 : index
    %54 = vector.load %arg8[%c32, %c0_24] : memref<128x32xf32, #tpu.memory_space<vmem>>, vector<32x32xf32>
    tpu.vector_store %arg8[%c32, %c0_24], %53 {strides = array<i32>} : memref<128x32xf32, #tpu.memory_space<vmem>>, vector<32x32xf32>,
    %55 = vector.extract_strided_slice %42 {offsets = [0, 16], sizes = [32, 8], strides = [1, 1]} : vector<32x96xf32> to vector<32x8xf32>
    %56 = vector.extract_strided_slice %42 {offsets = [0, 48], sizes = [32, 8], strides = [1, 1]} : vector<32x96xf32> to vector<32x8xf32>
    "tpu.trace_start"() <{level = 10 : i32, message = "qd,kd->qk"}> : () -> ()
    %cst_25 = arith.constant dense<0.000000e+00> : vector<32x32xf32>
    %57 = tpu.matmul %55, %56, %cst_25 {dimension_numbers = #tpu.dot_dimension_numbers<[1], [1], [0], [0], [0, 0, 1, 0], [], []>} : vector<32x8xf32>, vector<32x8xf32>, vector<32x32xf32> -> vector<32x32xf32>
    "tpu.trace_stop"() : () -> ()
    %cst_26 = arith.constant 0.353553385 : f32
    %58 = vector.broadcast %cst_26 : f32 to vector<32x32xf32>
    %59 = arith.mulf %57, %58 : vector<32x32xf32>
    %c64 = arith.constant 64 : index
    %c0_27 = arith.constant 0 : index
    %60 = vector.load %arg8[%c64, %c0_27] : memref<128x32xf32, #tpu.memory_space<vmem>>, vector<32x32xf32>
    tpu.vector_store %arg8[%c64, %c0_27], %59 {strides = array<i32>} : memref<128x32xf32, #tpu.memory_space<vmem>>, vector<32x32xf32>,
    %61 = vector.extract_strided_slice %42 {offsets = [0, 24], sizes = [32, 8], strides = [1, 1]} : vector<32x96xf32> to vector<32x8xf32>
    %62 = vector.extract_strided_slice %42 {offsets = [0, 56], sizes = [32, 8], strides = [1, 1]} : vector<32x96xf32> to vector<32x8xf32>
    "tpu.trace_start"() <{level = 10 : i32, message = "qd,kd->qk"}> : () -> ()
    %cst_28 = arith.constant dense<0.000000e+00> : vector<32x32xf32>
    %63 = tpu.matmul %61, %62, %cst_28 {dimension_numbers = #tpu.dot_dimension_numbers<[1], [1], [0], [0], [0, 0, 1, 0], [], []>} : vector<32x8xf32>, vector<32x8xf32>, vector<32x32xf32> -> vector<32x32xf32>
    "tpu.trace_stop"() : () -> ()
    %cst_29 = arith.constant 0.353553385 : f32
    %64 = vector.broadcast %cst_29 : f32 to vector<32x32xf32>
    %65 = arith.mulf %63, %64 : vector<32x32xf32>
    %c96 = arith.constant 96 : index
    %c0_30 = arith.constant 0 : index
    %66 = vector.load %arg8[%c96, %c0_30] : memref<128x32xf32, #tpu.memory_space<vmem>>, vector<32x32xf32>
    tpu.vector_store %arg8[%c96, %c0_30], %65 {strides = array<i32>} : memref<128x32xf32, #tpu.memory_space<vmem>>, vector<32x32xf32>,
    %c0_31 = arith.constant 0 : index
    %c0_32 = arith.constant 0 : index
    %67 = vector.load %arg8[%c0_31, %c0_32] : memref<128x32xf32, #tpu.memory_space<vmem>>, vector<128x32xf32>
    %68 = vector.broadcast %2 : vector<1x32xf32> to vector<128x32xf32>
    %69 = arith.addf %67, %68 : vector<128x32xf32>
    %cst_33 = arith.constant dense<0xFF800000> : vector<128xf32>
    %70 = vector.multi_reduction <maximumf>, %69, %cst_33 [1] : vector<128x32xf32> to vector<128xf32>
    %71 = vector.shape_cast %70 : vector<128xf32> to vector<128x1xf32>
    %72 = vector.broadcast %71 : vector<128x1xf32> to vector<128x32xf32>
    %73 = arith.subf %69, %72 : vector<128x32xf32>
    %74 = math.exp %73 : vector<128x32xf32>
    %cst_34 = arith.constant dense<0.000000e+00> : vector<128xf32>
    %75 = vector.multi_reduction <add>, %74, %cst_34 [1] : vector<128x32xf32> to vector<128xf32>
    %76 = vector.shape_cast %75 : vector<128xf32> to vector<128x1xf32>
    %77 = vector.broadcast %76 : vector<128x1xf32> to vector<128x32xf32>
    %78 = arith.divf %74, %77 : vector<128x32xf32>
    %79 = vector.extract_strided_slice %42 {offsets = [0, 64], sizes = [32, 8], strides = [1, 1]} : vector<32x96xf32> to vector<32x8xf32>
    %80 = vector.extract_strided_slice %78 {offsets = [0, 0], sizes = [32, 32], strides = [1, 1]} : vector<128x32xf32> to vector<32x32xf32>
    %cst_35 = arith.constant dense<0.000000e+00> : vector<32x8xf32>
    %81 = tpu.matmul %80, %79, %cst_35 {dimension_numbers = #tpu.dot_dimension_numbers<[1], [0], [0], [1], [0, 0, 1, 1], [], []>} : vector<32x32xf32>, vector<32x8xf32>, vector<32x8xf32> -> vector<32x8xf32>
    %c0_36 = arith.constant 0 : index
    %c0_37 = arith.constant 0 : index
    %82 = vector.load %arg9[%c0_36, %c0_37] : memref<32x32xf32, #tpu.memory_space<vmem>>, vector<32x8xf32>
    tpu.vector_store %arg9[%c0_36, %c0_37], %81 {strides = array<i32>} : memref<32x32xf32, #tpu.memory_space<vmem>>, vector<32x8xf32>,
    %83 = vector.extract_strided_slice %42 {offsets = [0, 72], sizes = [32, 8], strides = [1, 1]} : vector<32x96xf32> to vector<32x8xf32>
    %84 = vector.extract_strided_slice %78 {offsets = [32, 0], sizes = [32, 32], strides = [1, 1]} : vector<128x32xf32> to vector<32x32xf32>
    %cst_38 = arith.constant dense<0.000000e+00> : vector<32x8xf32>
    %85 = tpu.matmul %84, %83, %cst_38 {dimension_numbers = #tpu.dot_dimension_numbers<[1], [0], [0], [1], [0, 0, 1, 1], [], []>} : vector<32x32xf32>, vector<32x8xf32>, vector<32x8xf32> -> vector<32x8xf32>
    %c0_39 = arith.constant 0 : index
    %c8 = arith.constant 8 : index
    %86 = vector.load %arg9[%c0_39, %c8] : memref<32x32xf32, #tpu.memory_space<vmem>>, vector<32x8xf32>
    tpu.vector_store %arg9[%c0_39, %c8], %85 {strides = array<i32>} : memref<32x32xf32, #tpu.memory_space<vmem>>, vector<32x8xf32>,
    %87 = vector.extract_strided_slice %42 {offsets = [0, 80], sizes = [32, 8], strides = [1, 1]} : vector<32x96xf32> to vector<32x8xf32>
    %88 = vector.extract_strided_slice %78 {offsets = [64, 0], sizes = [32, 32], strides = [1, 1]} : vector<128x32xf32> to vector<32x32xf32>
    %cst_40 = arith.constant dense<0.000000e+00> : vector<32x8xf32>
    %89 = tpu.matmul %88, %87, %cst_40 {dimension_numbers = #tpu.dot_dimension_numbers<[1], [0], [0], [1], [0, 0, 1, 1], [], []>} : vector<32x32xf32>, vector<32x8xf32>, vector<32x8xf32> -> vector<32x8xf32>
    %c0_41 = arith.constant 0 : index
    %c16 = arith.constant 16 : index
    %90 = vector.load %arg9[%c0_41, %c16] : memref<32x32xf32, #tpu.memory_space<vmem>>, vector<32x8xf32>
    tpu.vector_store %arg9[%c0_41, %c16], %89 {strides = array<i32>} : memref<32x32xf32, #tpu.memory_space<vmem>>, vector<32x8xf32>,
    %91 = vector.extract_strided_slice %42 {offsets = [0, 88], sizes = [32, 8], strides = [1, 1]} : vector<32x96xf32> to vector<32x8xf32>
    %92 = vector.extract_strided_slice %78 {offsets = [96, 0], sizes = [32, 32], strides = [1, 1]} : vector<128x32xf32> to vector<32x32xf32>
    %cst_42 = arith.constant dense<0.000000e+00> : vector<32x8xf32>
    %93 = tpu.matmul %92, %91, %cst_42 {dimension_numbers = #tpu.dot_dimension_numbers<[1], [0], [0], [1], [0, 0, 1, 1], [], []>} : vector<32x32xf32>, vector<32x8xf32>, vector<32x8xf32> -> vector<32x8xf32>
    %c0_43 = arith.constant 0 : index
    %c24 = arith.constant 24 : index
    %94 = vector.load %arg9[%c0_43, %c24] : memref<32x32xf32, #tpu.memory_space<vmem>>, vector<32x8xf32>
    tpu.vector_store %arg9[%c0_43, %c24], %93 {strides = array<i32>} : memref<32x32xf32, #tpu.memory_space<vmem>>, vector<32x8xf32>,
    %c0_44 = arith.constant 0 : index
    %c0_45 = arith.constant 0 : index
    %95 = vector.load %arg9[%c0_44, %c0_45] : memref<32x32xf32, #tpu.memory_space<vmem>>, vector<32x32xf32>
    %cst_46 = arith.constant dense<0.000000e+00> : vector<32x32xf32>
    %96 = tpu.matmul %95, %10, %cst_46 {dimension_numbers = #tpu.dot_dimension_numbers<[1], [0], [0], [1], [0, 0, 1, 1], [], []>} : vector<32x32xf32>, vector<32x32xf32>, vector<32x32xf32> -> vector<32x32xf32>
    %97 = arith.addf %1, %96 : vector<32x32xf32>
    %98 = vector.broadcast %15 : vector<1x32xf32> to vector<32x32xf32>
    %99 = arith.addf %97, %98 : vector<32x32xf32>
    %cst_47 = arith.constant dense<0.000000e+00> : vector<32xf32>
    %100 = vector.multi_reduction <add>, %99, %cst_47 [1] : vector<32x32xf32> to vector<32xf32>
    %101 = vector.shape_cast %100 : vector<32xf32> to vector<32x1xf32>
    %cst_48 = arith.constant 3.200000e+01 : f32
    %102 = vector.broadcast %cst_48 : f32 to vector<32x1xf32>
    %103 = arith.divf %101, %102 : vector<32x1xf32>
    %104 = vector.broadcast %103 : vector<32x1xf32> to vector<32x32xf32>
    %105 = arith.subf %99, %104 : vector<32x32xf32>
    %106 = arith.mulf %105, %105 : vector<32x32xf32>
    %cst_49 = arith.constant dense<0.000000e+00> : vector<32xf32>
    %107 = vector.multi_reduction <add>, %106, %cst_49 [1] : vector<32x32xf32> to vector<32xf32>
    %108 = vector.shape_cast %107 : vector<32xf32> to vector<32x1xf32>
    %cst_50 = arith.constant 3.200000e+01 : f32
    %109 = vector.broadcast %cst_50 : f32 to vector<32x1xf32>
    %110 = arith.divf %108, %109 : vector<32x1xf32>
    %cst_51 = arith.constant 9.99999974E-6 : f32
    %111 = vector.broadcast %cst_51 : f32 to vector<32x1xf32>
    %112 = arith.addf %110, %111 : vector<32x1xf32>
    %113 = math.rsqrt %112 : vector<32x1xf32>
    %114 = vector.broadcast %113 : vector<32x1xf32> to vector<32x32xf32>
    %115 = arith.mulf %105, %114 : vector<32x32xf32>
    %116 = vector.broadcast %16 : vector<1x32xf32> to vector<32x32xf32>
    %117 = arith.mulf %115, %116 : vector<32x32xf32>
    %118 = vector.broadcast %17 : vector<1x32xf32> to vector<32x32xf32>
    %119 = arith.addf %117, %118 : vector<32x32xf32>
    %cst_52 = arith.constant dense<0.000000e+00> : vector<32x128xf32>
    %120 = tpu.matmul %119, %11, %cst_52 {dimension_numbers = #tpu.dot_dimension_numbers<[1], [0], [0], [1], [0, 0, 1, 1], [], []>} : vector<32x32xf32>, vector<32x128xf32>, vector<32x128xf32> -> vector<32x128xf32>
    %121 = vector.broadcast %18 : vector<1x128xf32> to vector<32x128xf32>
    %122 = arith.addf %120, %121 : vector<32x128xf32>
    %cst_53 = arith.constant 5.000000e-01 : f32
    %123 = vector.broadcast %cst_53 : f32 to vector<32x128xf32>
    %124 = arith.mulf %123, %122 : vector<32x128xf32>
    %cst_54 = arith.constant 0.707106769 : f32
    %125 = vector.broadcast %cst_54 : f32 to vector<32x128xf32>
    %126 = arith.mulf %122, %125 : vector<32x128xf32>
    %127 = math.erf %126 : vector<32x128xf32>
    %cst_55 = arith.constant 1.000000e+00 : f32
    %128 = vector.broadcast %cst_55 : f32 to vector<32x128xf32>
    %129 = arith.addf %128, %127 : vector<32x128xf32>
    %130 = arith.mulf %124, %129 : vector<32x128xf32>
    %cst_56 = arith.constant dense<0.000000e+00> : vector<32x32xf32>
    %131 = tpu.matmul %130, %6, %cst_56 {dimension_numbers = #tpu.dot_dimension_numbers<[1], [0], [0], [1], [0, 0, 1, 1], [], []>} : vector<32x128xf32>, vector<128x32xf32>, vector<32x32xf32> -> vector<32x32xf32>
    %132 = arith.addf %99, %131 : vector<32x32xf32>
    %133 = vector.broadcast %19 : vector<1x32xf32> to vector<32x32xf32>
    %134 = arith.addf %132, %133 : vector<32x32xf32>
    %c1 = arith.constant 1 : index
    %c0_57 = arith.constant 0 : index
    %c0_58 = arith.constant 0 : index
    %135 = vector.load %arg3[%c1, %c0_57, %c0_58] : memref<2x32x256xf32, #tpu.memory_space<vmem>>, vector<1x32x256xf32>
    %136 = vector.shape_cast %135 : vector<1x32x256xf32> to vector<32x256xf32>
    %c1_59 = arith.constant 1 : index
    %c0_60 = arith.constant 0 : index
    %c0_61 = arith.constant 0 : index
    %137 = vector.load %arg4[%c1_59, %c0_60, %c0_61] : memref<2x128x32xf32, #tpu.memory_space<vmem>>, vector<1x128x32xf32>
    %138 = vector.shape_cast %137 : vector<1x128x32xf32> to vector<128x32xf32>
    %c1_62 = arith.constant 1 : index
    %c0_63 = arith.constant 0 : index
    %c0_64 = arith.constant 0 : index
    %139 = vector.load %arg5[%c1_62, %c0_63, %c0_64] : memref<2x8x128xf32, #tpu.memory_space<vmem>>, vector<1x8x128xf32>
    %140 = vector.shape_cast %139 : vector<1x8x128xf32> to vector<8x128xf32>
    %141 = vector.extract_strided_slice %136 {offsets = [0, 0], sizes = [32, 96], strides = [1, 1]} : vector<32x256xf32> to vector<32x96xf32>
    %142 = vector.extract_strided_slice %136 {offsets = [0, 96], sizes = [32, 32], strides = [1, 1]} : vector<32x256xf32> to vector<32x32xf32>
    %143 = vector.extract_strided_slice %136 {offsets = [0, 128], sizes = [32, 128], strides = [1, 1]} : vector<32x256xf32> to vector<32x128xf32>
    %144 = vector.extract_strided_slice %140 {offsets = [0, 0], sizes = [1, 32], strides = [1, 1]} : vector<8x128xf32> to vector<1x32xf32>
    %145 = vector.extract_strided_slice %140 {offsets = [1, 0], sizes = [1, 32], strides = [1, 1]} : vector<8x128xf32> to vector<1x32xf32>
    %146 = vector.extract_strided_slice %140 {offsets = [2, 0], sizes = [1, 96], strides = [1, 1]} : vector<8x128xf32> to vector<1x96xf32>
    %147 = vector.extract_strided_slice %140 {offsets = [3, 0], sizes = [1, 32], strides = [1, 1]} : vector<8x128xf32> to vector<1x32xf32>
    %148 = vector.extract_strided_slice %140 {offsets = [4, 0], sizes = [1, 32], strides = [1, 1]} : vector<8x128xf32> to vector<1x32xf32>
    %149 = vector.extract_strided_slice %140 {offsets = [5, 0], sizes = [1, 32], strides = [1, 1]} : vector<8x128xf32> to vector<1x32xf32>
    %150 = vector.extract_strided_slice %140 {offsets = [6, 0], sizes = [1, 128], strides = [1, 1]} : vector<8x128xf32> to vector<1x128xf32>
    %151 = vector.extract_strided_slice %140 {offsets = [7, 0], sizes = [1, 32], strides = [1, 1]} : vector<8x128xf32> to vector<1x32xf32>
    %cst_65 = arith.constant dense<0.000000e+00> : vector<32xf32>
    %152 = vector.multi_reduction <add>, %134, %cst_65 [1] : vector<32x32xf32> to vector<32xf32>
    %153 = vector.shape_cast %152 : vector<32xf32> to vector<32x1xf32>
    %cst_66 = arith.constant 3.200000e+01 : f32
    %154 = vector.broadcast %cst_66 : f32 to vector<32x1xf32>
    %155 = arith.divf %153, %154 : vector<32x1xf32>
    %156 = vector.broadcast %155 : vector<32x1xf32> to vector<32x32xf32>
    %157 = arith.subf %134, %156 : vector<32x32xf32>
    %158 = arith.mulf %157, %157 : vector<32x32xf32>
    %cst_67 = arith.constant dense<0.000000e+00> : vector<32xf32>
    %159 = vector.multi_reduction <add>, %158, %cst_67 [1] : vector<32x32xf32> to vector<32xf32>
    %160 = vector.shape_cast %159 : vector<32xf32> to vector<32x1xf32>
    %cst_68 = arith.constant 3.200000e+01 : f32
    %161 = vector.broadcast %cst_68 : f32 to vector<32x1xf32>
    %162 = arith.divf %160, %161 : vector<32x1xf32>
    %cst_69 = arith.constant 9.99999974E-6 : f32
    %163 = vector.broadcast %cst_69 : f32 to vector<32x1xf32>
    %164 = arith.addf %162, %163 : vector<32x1xf32>
    %165 = math.rsqrt %164 : vector<32x1xf32>
    %166 = vector.broadcast %165 : vector<32x1xf32> to vector<32x32xf32>
    %167 = arith.mulf %157, %166 : vector<32x32xf32>
    %168 = vector.broadcast %144 : vector<1x32xf32> to vector<32x32xf32>
    %169 = arith.mulf %167, %168 : vector<32x32xf32>
    %170 = vector.broadcast %145 : vector<1x32xf32> to vector<32x32xf32>
    %171 = arith.addf %169, %170 : vector<32x32xf32>
    %cst_70 = arith.constant dense<0.000000e+00> : vector<32x96xf32>
    %172 = tpu.matmul %171, %141, %cst_70 {dimension_numbers = #tpu.dot_dimension_numbers<[1], [0], [0], [1], [0, 0, 1, 1], [], []>} : vector<32x32xf32>, vector<32x96xf32>, vector<32x96xf32> -> vector<32x96xf32>
    %173 = vector.broadcast %146 : vector<1x96xf32> to vector<32x96xf32>
    %174 = arith.addf %172, %173 : vector<32x96xf32>
    %175 = vector.extract_strided_slice %174 {offsets = [0, 0], sizes = [32, 8], strides = [1, 1]} : vector<32x96xf32> to vector<32x8xf32>
    %176 = vector.extract_strided_slice %174 {offsets = [0, 32], sizes = [32, 8], strides = [1, 1]} : vector<32x96xf32> to vector<32x8xf32>
    "tpu.trace_start"() <{level = 10 : i32, message = "qd,kd->qk"}> : () -> ()
    %cst_71 = arith.constant dense<0.000000e+00> : vector<32x32xf32>
    %177 = tpu.matmul %175, %176, %cst_71 {dimension_numbers = #tpu.dot_dimension_numbers<[1], [1], [0], [0], [0, 0, 1, 0], [], []>} : vector<32x8xf32>, vector<32x8xf32>, vector<32x32xf32> -> vector<32x32xf32>
    "tpu.trace_stop"() : () -> ()
    %cst_72 = arith.constant 0.353553385 : f32
    %178 = vector.broadcast %cst_72 : f32 to vector<32x32xf32>
    %179 = arith.mulf %177, %178 : vector<32x32xf32>
    %c0_73 = arith.constant 0 : index
    %c0_74 = arith.constant 0 : index
    %180 = vector.load %arg8[%c0_73, %c0_74] : memref<128x32xf32, #tpu.memory_space<vmem>>, vector<32x32xf32>
    tpu.vector_store %arg8[%c0_73, %c0_74], %179 {strides = array<i32>} : memref<128x32xf32, #tpu.memory_space<vmem>>, vector<32x32xf32>,
    %181 = vector.extract_strided_slice %174 {offsets = [0, 8], sizes = [32, 8], strides = [1, 1]} : vector<32x96xf32> to vector<32x8xf32>
    %182 = vector.extract_strided_slice %174 {offsets = [0, 40], sizes = [32, 8], strides = [1, 1]} : vector<32x96xf32> to vector<32x8xf32>
    "tpu.trace_start"() <{level = 10 : i32, message = "qd,kd->qk"}> : () -> ()
    %cst_75 = arith.constant dense<0.000000e+00> : vector<32x32xf32>
    %183 = tpu.matmul %181, %182, %cst_75 {dimension_numbers = #tpu.dot_dimension_numbers<[1], [1], [0], [0], [0, 0, 1, 0], [], []>} : vector<32x8xf32>, vector<32x8xf32>, vector<32x32xf32> -> vector<32x32xf32>
    "tpu.trace_stop"() : () -> ()
    %cst_76 = arith.constant 0.353553385 : f32
    %184 = vector.broadcast %cst_76 : f32 to vector<32x32xf32>
    %185 = arith.mulf %183, %184 : vector<32x32xf32>
    %c32_77 = arith.constant 32 : index
    %c0_78 = arith.constant 0 : index
    %186 = vector.load %arg8[%c32_77, %c0_78] : memref<128x32xf32, #tpu.memory_space<vmem>>, vector<32x32xf32>
    tpu.vector_store %arg8[%c32_77, %c0_78], %185 {strides = array<i32>} : memref<128x32xf32, #tpu.memory_space<vmem>>, vector<32x32xf32>,
    %187 = vector.extract_strided_slice %174 {offsets = [0, 16], sizes = [32, 8], strides = [1, 1]} : vector<32x96xf32> to vector<32x8xf32>
    %188 = vector.extract_strided_slice %174 {offsets = [0, 48], sizes = [32, 8], strides = [1, 1]} : vector<32x96xf32> to vector<32x8xf32>
    "tpu.trace_start"() <{level = 10 : i32, message = "qd,kd->qk"}> : () -> ()
    %cst_79 = arith.constant dense<0.000000e+00> : vector<32x32xf32>
    %189 = tpu.matmul %187, %188, %cst_79 {dimension_numbers = #tpu.dot_dimension_numbers<[1], [1], [0], [0], [0, 0, 1, 0], [], []>} : vector<32x8xf32>, vector<32x8xf32>, vector<32x32xf32> -> vector<32x32xf32>
    "tpu.trace_stop"() : () -> ()
    %cst_80 = arith.constant 0.353553385 : f32
    %190 = vector.broadcast %cst_80 : f32 to vector<32x32xf32>
    %191 = arith.mulf %189, %190 : vector<32x32xf32>
    %c64_81 = arith.constant 64 : index
    %c0_82 = arith.constant 0 : index
    %192 = vector.load %arg8[%c64_81, %c0_82] : memref<128x32xf32, #tpu.memory_space<vmem>>, vector<32x32xf32>
    tpu.vector_store %arg8[%c64_81, %c0_82], %191 {strides = array<i32>} : memref<128x32xf32, #tpu.memory_space<vmem>>, vector<32x32xf32>,
    %193 = vector.extract_strided_slice %174 {offsets = [0, 24], sizes = [32, 8], strides = [1, 1]} : vector<32x96xf32> to vector<32x8xf32>
    %194 = vector.extract_strided_slice %174 {offsets = [0, 56], sizes = [32, 8], strides = [1, 1]} : vector<32x96xf32> to vector<32x8xf32>
    "tpu.trace_start"() <{level = 10 : i32, message = "qd,kd->qk"}> : () -> ()
    %cst_83 = arith.constant dense<0.000000e+00> : vector<32x32xf32>
    %195 = tpu.matmul %193, %194, %cst_83 {dimension_numbers = #tpu.dot_dimension_numbers<[1], [1], [0], [0], [0, 0, 1, 0], [], []>} : vector<32x8xf32>, vector<32x8xf32>, vector<32x32xf32> -> vector<32x32xf32>
    "tpu.trace_stop"() : () -> ()
    %cst_84 = arith.constant 0.353553385 : f32
    %196 = vector.broadcast %cst_84 : f32 to vector<32x32xf32>
    %197 = arith.mulf %195, %196 : vector<32x32xf32>
    %c96_85 = arith.constant 96 : index
    %c0_86 = arith.constant 0 : index
    %198 = vector.load %arg8[%c96_85, %c0_86] : memref<128x32xf32, #tpu.memory_space<vmem>>, vector<32x32xf32>
    tpu.vector_store %arg8[%c96_85, %c0_86], %197 {strides = array<i32>} : memref<128x32xf32, #tpu.memory_space<vmem>>, vector<32x32xf32>,
    %c0_87 = arith.constant 0 : index
    %c0_88 = arith.constant 0 : index
    %199 = vector.load %arg8[%c0_87, %c0_88] : memref<128x32xf32, #tpu.memory_space<vmem>>, vector<128x32xf32>
    %200 = vector.broadcast %2 : vector<1x32xf32> to vector<128x32xf32>
    %201 = arith.addf %199, %200 : vector<128x32xf32>
    %cst_89 = arith.constant dense<0xFF800000> : vector<128xf32>
    %202 = vector.multi_reduction <maximumf>, %201, %cst_89 [1] : vector<128x32xf32> to vector<128xf32>
    %203 = vector.shape_cast %202 : vector<128xf32> to vector<128x1xf32>
    %204 = vector.broadcast %203 : vector<128x1xf32> to vector<128x32xf32>
    %205 = arith.subf %201, %204 : vector<128x32xf32>
    %206 = math.exp %205 : vector<128x32xf32>
    %cst_90 = arith.constant dense<0.000000e+00> : vector<128xf32>
    %207 = vector.multi_reduction <add>, %206, %cst_90 [1] : vector<128x32xf32> to vector<128xf32>
    %208 = vector.shape_cast %207 : vector<128xf32> to vector<128x1xf32>
    %209 = vector.broadcast %208 : vector<128x1xf32> to vector<128x32xf32>
    %210 = arith.divf %206, %209 : vector<128x32xf32>
    %211 = vector.extract_strided_slice %174 {offsets = [0, 64], sizes = [32, 8], strides = [1, 1]} : vector<32x96xf32> to vector<32x8xf32>
    %212 = vector.extract_strided_slice %210 {offsets = [0, 0], sizes = [32, 32], strides = [1, 1]} : vector<128x32xf32> to vector<32x32xf32>
    %cst_91 = arith.constant dense<0.000000e+00> : vector<32x8xf32>
    %213 = tpu.matmul %212, %211, %cst_91 {dimension_numbers = #tpu.dot_dimension_numbers<[1], [0], [0], [1], [0, 0, 1, 1], [], []>} : vector<32x32xf32>, vector<32x8xf32>, vector<32x8xf32> -> vector<32x8xf32>
    %c0_92 = arith.constant 0 : index
    %c0_93 = arith.constant 0 : index
    %214 = vector.load %arg9[%c0_92, %c0_93] : memref<32x32xf32, #tpu.memory_space<vmem>>, vector<32x8xf32>
    tpu.vector_store %arg9[%c0_92, %c0_93], %213 {strides = array<i32>} : memref<32x32xf32, #tpu.memory_space<vmem>>, vector<32x8xf32>,
    %215 = vector.extract_strided_slice %174 {offsets = [0, 72], sizes = [32, 8], strides = [1, 1]} : vector<32x96xf32> to vector<32x8xf32>
    %216 = vector.extract_strided_slice %210 {offsets = [32, 0], sizes = [32, 32], strides = [1, 1]} : vector<128x32xf32> to vector<32x32xf32>
    %cst_94 = arith.constant dense<0.000000e+00> : vector<32x8xf32>
    %217 = tpu.matmul %216, %215, %cst_94 {dimension_numbers = #tpu.dot_dimension_numbers<[1], [0], [0], [1], [0, 0, 1, 1], [], []>} : vector<32x32xf32>, vector<32x8xf32>, vector<32x8xf32> -> vector<32x8xf32>
    %c0_95 = arith.constant 0 : index
    %c8_96 = arith.constant 8 : index
    %218 = vector.load %arg9[%c0_95, %c8_96] : memref<32x32xf32, #tpu.memory_space<vmem>>, vector<32x8xf32>
    tpu.vector_store %arg9[%c0_95, %c8_96], %217 {strides = array<i32>} : memref<32x32xf32, #tpu.memory_space<vmem>>, vector<32x8xf32>,
    %219 = vector.extract_strided_slice %174 {offsets = [0, 80], sizes = [32, 8], strides = [1, 1]} : vector<32x96xf32> to vector<32x8xf32>
    %220 = vector.extract_strided_slice %210 {offsets = [64, 0], sizes = [32, 32], strides = [1, 1]} : vector<128x32xf32> to vector<32x32xf32>
    %cst_97 = arith.constant dense<0.000000e+00> : vector<32x8xf32>
    %221 = tpu.matmul %220, %219, %cst_97 {dimension_numbers = #tpu.dot_dimension_numbers<[1], [0], [0], [1], [0, 0, 1, 1], [], []>} : vector<32x32xf32>, vector<32x8xf32>, vector<32x8xf32> -> vector<32x8xf32>
    %c0_98 = arith.constant 0 : index
    %c16_99 = arith.constant 16 : index
    %222 = vector.load %arg9[%c0_98, %c16_99] : memref<32x32xf32, #tpu.memory_space<vmem>>, vector<32x8xf32>
    tpu.vector_store %arg9[%c0_98, %c16_99], %221 {strides = array<i32>} : memref<32x32xf32, #tpu.memory_space<vmem>>, vector<32x8xf32>,
    %223 = vector.extract_strided_slice %174 {offsets = [0, 88], sizes = [32, 8], strides = [1, 1]} : vector<32x96xf32> to vector<32x8xf32>
    %224 = vector.extract_strided_slice %210 {offsets = [96, 0], sizes = [32, 32], strides = [1, 1]} : vector<128x32xf32> to vector<32x32xf32>
    %cst_100 = arith.constant dense<0.000000e+00> : vector<32x8xf32>
    %225 = tpu.matmul %224, %223, %cst_100 {dimension_numbers = #tpu.dot_dimension_numbers<[1], [0], [0], [1], [0, 0, 1, 1], [], []>} : vector<32x32xf32>, vector<32x8xf32>, vector<32x8xf32> -> vector<32x8xf32>
    %c0_101 = arith.constant 0 : index
    %c24_102 = arith.constant 24 : index
    %226 = vector.load %arg9[%c0_101, %c24_102] : memref<32x32xf32, #tpu.memory_space<vmem>>, vector<32x8xf32>
    tpu.vector_store %arg9[%c0_101, %c24_102], %225 {strides = array<i32>} : memref<32x32xf32, #tpu.memory_space<vmem>>, vector<32x8xf32>,
    %c0_103 = arith.constant 0 : index
    %c0_104 = arith.constant 0 : index
    %227 = vector.load %arg9[%c0_103, %c0_104] : memref<32x32xf32, #tpu.memory_space<vmem>>, vector<32x32xf32>
    %cst_105 = arith.constant dense<0.000000e+00> : vector<32x32xf32>
    %228 = tpu.matmul %227, %142, %cst_105 {dimension_numbers = #tpu.dot_dimension_numbers<[1], [0], [0], [1], [0, 0, 1, 1], [], []>} : vector<32x32xf32>, vector<32x32xf32>, vector<32x32xf32> -> vector<32x32xf32>
    %229 = arith.addf %134, %228 : vector<32x32xf32>
    %230 = vector.broadcast %147 : vector<1x32xf32> to vector<32x32xf32>
    %231 = arith.addf %229, %230 : vector<32x32xf32>
    %cst_106 = arith.constant dense<0.000000e+00> : vector<32xf32>
    %232 = vector.multi_reduction <add>, %231, %cst_106 [1] : vector<32x32xf32> to vector<32xf32>
    %233 = vector.shape_cast %232 : vector<32xf32> to vector<32x1xf32>
    %cst_107 = arith.constant 3.200000e+01 : f32
    %234 = vector.broadcast %cst_107 : f32 to vector<32x1xf32>
    %235 = arith.divf %233, %234 : vector<32x1xf32>
    %236 = vector.broadcast %235 : vector<32x1xf32> to vector<32x32xf32>
    %237 = arith.subf %231, %236 : vector<32x32xf32>
    %238 = arith.mulf %237, %237 : vector<32x32xf32>
    %cst_108 = arith.constant dense<0.000000e+00> : vector<32xf32>
    %239 = vector.multi_reduction <add>, %238, %cst_108 [1] : vector<32x32xf32> to vector<32xf32>
    %240 = vector.shape_cast %239 : vector<32xf32> to vector<32x1xf32>
    %cst_109 = arith.constant 3.200000e+01 : f32
    %241 = vector.broadcast %cst_109 : f32 to vector<32x1xf32>
    %242 = arith.divf %240, %241 : vector<32x1xf32>
    %cst_110 = arith.constant 9.99999974E-6 : f32
    %243 = vector.broadcast %cst_110 : f32 to vector<32x1xf32>
    %244 = arith.addf %242, %243 : vector<32x1xf32>
    %245 = math.rsqrt %244 : vector<32x1xf32>
    %246 = vector.broadcast %245 : vector<32x1xf32> to vector<32x32xf32>
    %247 = arith.mulf %237, %246 : vector<32x32xf32>
    %248 = vector.broadcast %148 : vector<1x32xf32> to vector<32x32xf32>
    %249 = arith.mulf %247, %248 : vector<32x32xf32>
    %250 = vector.broadcast %149 : vector<1x32xf32> to vector<32x32xf32>
    %251 = arith.addf %249, %250 : vector<32x32xf32>
    %cst_111 = arith.constant dense<0.000000e+00> : vector<32x128xf32>
    %252 = tpu.matmul %251, %143, %cst_111 {dimension_numbers = #tpu.dot_dimension_numbers<[1], [0], [0], [1], [0, 0, 1, 1], [], []>} : vector<32x32xf32>, vector<32x128xf32>, vector<32x128xf32> -> vector<32x128xf32>
    %253 = vector.broadcast %150 : vector<1x128xf32> to vector<32x128xf32>
    %254 = arith.addf %252, %253 : vector<32x128xf32>
    %cst_112 = arith.constant 5.000000e-01 : f32
    %255 = vector.broadcast %cst_112 : f32 to vector<32x128xf32>
    %256 = arith.mulf %255, %254 : vector<32x128xf32>
    %cst_113 = arith.constant 0.707106769 : f32
    %257 = vector.broadcast %cst_113 : f32 to vector<32x128xf32>
    %258 = arith.mulf %254, %257 : vector<32x128xf32>
    %259 = math.erf %258 : vector<32x128xf32>
    %cst_114 = arith.constant 1.000000e+00 : f32
    %260 = vector.broadcast %cst_114 : f32 to vector<32x128xf32>
    %261 = arith.addf %260, %259 : vector<32x128xf32>
    %262 = arith.mulf %256, %261 : vector<32x128xf32>
    %cst_115 = arith.constant dense<0.000000e+00> : vector<32x32xf32>
    %263 = tpu.matmul %262, %138, %cst_115 {dimension_numbers = #tpu.dot_dimension_numbers<[1], [0], [0], [1], [0, 0, 1, 1], [], []>} : vector<32x128xf32>, vector<128x32xf32>, vector<32x32xf32> -> vector<32x32xf32>
    %264 = arith.addf %231, %263 : vector<32x32xf32>
    %265 = vector.broadcast %151 : vector<1x32xf32> to vector<32x32xf32>
    %266 = arith.addf %264, %265 : vector<32x32xf32>
    %c0_116 = arith.constant 0 : index
    %c0_117 = arith.constant 0 : index
    %267 = vector.load %arg6[%c0_116, %c0_117] : memref<2x32xf32, #tpu.memory_space<vmem>>, vector<1x32xf32>
    %c1_118 = arith.constant 1 : index
    %c0_119 = arith.constant 0 : index
    %268 = vector.load %arg6[%c1_118, %c0_119] : memref<2x32xf32, #tpu.memory_space<vmem>>, vector<1x32xf32>
    %cst_120 = arith.constant dense<0.000000e+00> : vector<32xf32>
    %269 = vector.multi_reduction <add>, %266, %cst_120 [1] : vector<32x32xf32> to vector<32xf32>
    %270 = vector.shape_cast %269 : vector<32xf32> to vector<32x1xf32>
    %cst_121 = arith.constant 3.200000e+01 : f32
    %271 = vector.broadcast %cst_121 : f32 to vector<32x1xf32>
    %272 = arith.divf %270, %271 : vector<32x1xf32>
    %273 = vector.broadcast %272 : vector<32x1xf32> to vector<32x32xf32>
    %274 = arith.subf %266, %273 : vector<32x32xf32>
    %275 = arith.mulf %274, %274 : vector<32x32xf32>
    %cst_122 = arith.constant dense<0.000000e+00> : vector<32xf32>
    %276 = vector.multi_reduction <add>, %275, %cst_122 [1] : vector<32x32xf32> to vector<32xf32>
    %277 = vector.shape_cast %276 : vector<32xf32> to vector<32x1xf32>
    %cst_123 = arith.constant 3.200000e+01 : f32
    %278 = vector.broadcast %cst_123 : f32 to vector<32x1xf32>
    %279 = arith.divf %277, %278 : vector<32x1xf32>
    %cst_124 = arith.constant 9.99999974E-6 : f32
    %280 = vector.broadcast %cst_124 : f32 to vector<32x1xf32>
    %281 = arith.addf %279, %280 : vector<32x1xf32>
    %282 = math.rsqrt %281 : vector<32x1xf32>
    %283 = vector.broadcast %282 : vector<32x1xf32> to vector<32x32xf32>
    %284 = arith.mulf %274, %283 : vector<32x32xf32>
    %285 = vector.broadcast %267 : vector<1x32xf32> to vector<32x32xf32>
    %286 = arith.mulf %284, %285 : vector<32x32xf32>
    %287 = vector.broadcast %268 : vector<1x32xf32> to vector<32x32xf32>
    %288 = arith.addf %286, %287 : vector<32x32xf32>
    %c0_125 = arith.constant 0 : index
    %c0_126 = arith.constant 0 : index
    %c0_127 = arith.constant 0 : index
    %289 = vector.load %arg7[%c0_125, %c0_126, %c0_127] : memref<1x32x32xf32, #tpu.memory_space<vmem>>, vector<1x32x32xf32>
    %290 = vector.shape_cast %289 : vector<1x32x32xf32> to vector<32x32xf32>
    %291 = vector.shape_cast %288 : vector<32x32xf32> to vector<1x32x32xf32>
    tpu.vector_store %arg7[%c0_125, %c0_126, %c0_127], %291 {strides = array<i32>} : memref<1x32x32xf32, #tpu.memory_space<vmem>>, vector<1x32x32xf32>,
    return
  }
  func.func @transform_0(%arg0: i32) -> (i32, i32, i32) {
    %c0_i32 = arith.constant 0 : i32
    %c0_i32_0 = arith.constant 0 : i32
    %c0_i32_1 = arith.constant 0 : i32
    return %arg0, %c0_i32, %c0_i32_0 : i32, i32, i32
  }
  func.func @transform_1(%arg0: i32) -> (i32, i32) {
    %c0_i32 = arith.constant 0 : i32
    %c0_i32_0 = arith.constant 0 : i32
    %c0_i32_1 = arith.constant 0 : i32
    return %c0_i32, %c0_i32_0 : i32, i32
  }
  func.func @transform_2(%arg0: i32) -> (i32, i32, i32) {
    %c0_i32 = arith.constant 0 : i32
    %c0_i32_0 = arith.constant 0 : i32
    %c0_i32_1 = arith.constant 0 : i32
    %c0_i32_2 = arith.constant 0 : i32
    return %c0_i32, %c0_i32_0, %c0_i32_1 : i32, i32, i32
  }
  func.func @transform_3(%arg0: i32) -> (i32, i32, i32) {
    %c0_i32 = arith.constant 0 : i32
    %c0_i32_0 = arith.constant 0 : i32
    %c0_i32_1 = arith.constant 0 : i32
    %c0_i32_2 = arith.constant 0 : i32
    return %c0_i32, %c0_i32_0, %c0_i32_1 : i32, i32, i32
  }
  func.func @transform_4(%arg0: i32) -> (i32, i32, i32) {
    %c0_i32 = arith.constant 0 : i32
    %c0_i32_0 = arith.constant 0 : i32
    %c0_i32_1 = arith.constant 0 : i32
    %c0_i32_2 = arith.constant 0 : i32
    return %c0_i32, %c0_i32_0, %c0_i32_1 : i32, i32, i32
  }
  func.func @transform_5(%arg0: i32) -> (i32, i32) {
    %c0_i32 = arith.constant 0 : i32
    %c0_i32_0 = arith.constant 0 : i32
    %c0_i32_1 = arith.constant 0 : i32
    return %c0_i32, %c0_i32_0 : i32, i32
  }
  func.func @transform_6(%arg0: i32) -> (i32, i32, i32) {
    %c0_i32 = arith.constant 0 : i32
    %c0_i32_0 = arith.constant 0 : i32
    %c0_i32_1 = arith.constant 0 : i32
    return %arg0, %c0_i32, %c0_i32_0 : i32, i32, i32
  }
}

</mosaic_0001>

<llo_original>
// kernel: _lambda_.1
$region0: #{_lambda_.1}
  #allocation0 [shape = 'u32[]', space=smem, size = 0x4, offset = 0x4, fixed_abs, tag = 'smem constant byte address 0x4 - core index']
  #allocation1 [shape = 'u32[72,128]{1,0:T(1,128)}', space=vmem, size = 0x9000, scoped, tag = 'internal scratch']
  #allocation2 [shape = 'f32[128,32]{1,0:T(8,128)}', space=vmem, size = 0x10000, scoped, tag = 'scratch operand']
  #allocation3 [shape = 'f32[32,32]{1,0:T(8,128)}', space=vmem, size = 0x4000, scoped, tag = 'scratch operand']
  %s0 = inlined_call_operand.vmem [shape: f32[2,32,32], index: 0, kind: input, shape index: {}]
  %s1 = inlined_call_operand.vmem [shape: f32[1,32], index: 1, kind: input, shape index: {}]
  %s2 = inlined_call_operand.vmem [shape: f32[2,32,256], index: 2, kind: input, shape index: {}]
  %s3 = inlined_call_operand.vmem [shape: f32[2,128,32], index: 3, kind: input, shape index: {}]
  %s4 = inlined_call_operand.vmem [shape: f32[2,8,128], index: 4, kind: input, shape index: {}]
  %s5 = inlined_call_operand.vmem [shape: f32[2,32], index: 5, kind: input, shape index: {}]
  %s6 = inlined_call_operand.vmem [shape: f32[2,32,32], index: 6, kind: output, shape index: {}]
  %s7 = sld [smem:[#allocation0]]
  $region57: #{_lambda_.1} parent=0
    _
  %s9 = ssub.s32 1, %s7
  %s10 = scalar_select 0, %s9, %s7
  loop: start=0, step=1, limit=4
  $region2: #{_lambda_.1} parent=0 // loop_pre_header
    _
  $region3: #{_lambda_.1} parent=0 // loop_header
    %s12 = sphi 0, %s16
    %p13 = scmp.ge.s32.totalorder %s12, 4
    %s22 = sphi 0, %s24
    %s25 = sphi 0, %s22
    %s26 = sphi 0, %s25
    %s42 = sphi 0, %s26
    %s46 = sphi 0, %s46
    %s48 = sphi 0, %s46
    %s49 = sphi 0, %s48
    %s63 = sphi 0, %s49
    %s67 = sphi 0, %s67
    %s69 = sphi 0, %s67
    %s70 = sphi 0, %s69
    %s84 = sphi 0, %s70
    %s88 = sphi 0, %s88
    %s90 = sphi 0, %s88
    %s91 = sphi 0, %s90
    %s105 = sphi 0, %s91
    %s109 = sphi 0, %s109
    %s111 = sphi 0, %s109
    %s112 = sphi 0, %s111
    %s126 = sphi 0, %s112
    %s130 = sphi 0, %s130
    %s132 = sphi 0, %s130
    %s133 = sphi 0, %s132
    %s147 = sphi 0, %s133
    %s153 = sphi 0, %s155
    %s156 = sphi 0, %s153
    %s157 = sphi 0, %s156
    %s173 = sphi 0, %s157
  $region4: #{_lambda_.1} parent=0 // loop_header_branch
    %15 = sbr.rel (%p13) target = $region8
  $region5: #{_lambda_.1} parent=0 // loop_body
    %s17 = ssub.s32 %s12, 1
    %s18 = ssub.s32 %s12, 2
    %s19 = sadd.s32 %s12, 1
    %s20 = ssub.s32 %s12, %s19
    %p21 = scmp.eq.s32.totalorder %s20, 0
    %s23 = sadd.s32 %s22, 1
    %s24 = scalar_select %p21, %s22, %s23
    %p27 = pneg %p21
    %p28 = scmp.eq.s32.totalorder %s12, 1
    %p29 = por %p27, %p28
    %p30 = scmp.ne.s32.totalorder %s22, %s25
    %p31 = scmp.eq.s32.totalorder %s12, 0
    %p32 = por %p30, %p31
    %p33 = scmp.ne.s32.totalorder %s22, %s25
    %p34 = scmp.eq.s32.totalorder %s17, 1
    %p35 = por %p33, %p34
    %p36 = scmp.ne.s32.totalorder %s25, %s26
    %p37 = scmp.eq.s32.totalorder %s17, 0
    %p38 = por %p36, %p37
    %p39 = scmp.ne.s32.totalorder %s25, %s26
    %p40 = scmp.eq.s32.totalorder %s18, 1
    %p41 = por %p39, %p40
    %p43 = scmp.ne.s32.totalorder %s26, %s42
    %p44 = scmp.eq.s32.totalorder %s18, 0
    %p45 = por %p43, %p44
    %s47 = sadd.s32 %s46, 1
    %p50 = scmp.eq.s32.totalorder %s12, 1
    %p51 = scmp.ne.s32.totalorder %s46, %s48
    %p52 = scmp.eq.s32.totalorder %s12, 0
    %p53 = por %p51, %p52
    %p54 = scmp.ne.s32.totalorder %s46, %s48
    %p55 = scmp.eq.s32.totalorder %s17, 1
    %p56 = por %p54, %p55
    %p57 = scmp.ne.s32.totalorder %s48, %s49
    %p58 = scmp.eq.s32.totalorder %s17, 0
    %p59 = por %p57, %p58
    %p60 = scmp.ne.s32.totalorder %s48, %s49
    %p61 = scmp.eq.s32.totalorder %s18, 1
    %p62 = por %p60, %p61
    %p64 = scmp.ne.s32.totalorder %s49, %s63
    %p65 = scmp.eq.s32.totalorder %s18, 0
    %p66 = por %p64, %p65
    %s68 = sadd.s32 %s67, 1
    %p71 = scmp.eq.s32.totalorder %s12, 1
    %p72 = scmp.ne.s32.totalorder %s67, %s69
    %p73 = scmp.eq.s32.totalorder %s12, 0
    %p74 = por %p72, %p73
    %p75 = scmp.ne.s32.totalorder %s67, %s69
    %p76 = scmp.eq.s32.totalorder %s17, 1
    %p77 = por %p75, %p76
    %p78 = scmp.ne.s32.totalorder %s69, %s70
    %p79 = scmp.eq.s32.totalorder %s17, 0
    %p80 = por %p78, %p79
    %p81 = scmp.ne.s32.totalorder %s69, %s70
    %p82 = scmp.eq.s32.totalorder %s18, 1
    %p83 = por %p81, %p82
    %p85 = scmp.ne.s32.totalorder %s70, %s84
    %p86 = scmp.eq.s32.totalorder %s18, 0
    %p87 = por %p85, %p86
    %s89 = sadd.s32 %s88, 1
    %p92 = scmp.eq.s32.totalorder %s12, 1
    %p93 = scmp.ne.s32.totalorder %s88, %s90
    %p94 = scmp.eq.s32.totalorder %s12, 0
    %p95 = por %p93, %p94
    %p96 = scmp.ne.s32.totalorder %s88, %s90
    %p97 = scmp.eq.s32.totalorder %s17, 1
    %p98 = por %p96, %p97
    %p99 = scmp.ne.s32.totalorder %s90, %s91
    %p100 = scmp.eq.s32.totalorder %s17, 0
    %p101 = por %p99, %p100
    %p102 = scmp.ne.s32.totalorder %s90, %s91
    %p103 = scmp.eq.s32.totalorder %s18, 1
    %p104 = por %p102, %p103
    %p106 = scmp.ne.s32.totalorder %s91, %s105
    %p107 = scmp.eq.s32.totalorder %s18, 0
    %p108 = por %p106, %p107
    %s110 = sadd.s32 %s109, 1
    %p113 = scmp.eq.s32.totalorder %s12, 1
    %p114 = scmp.ne.s32.totalorder %s109, %s111
    %p115 = scmp.eq.s32.totalorder %s12, 0
    %p116 = por %p114, %p115
    %p117 = scmp.ne.s32.totalorder %s109, %s111
    %p118 = scmp.eq.s32.totalorder %s17, 1
    %p119 = por %p117, %p118
    %p120 = scmp.ne.s32.totalorder %s111, %s112
    %p121 = scmp.eq.s32.totalorder %s17, 0
    %p122 = por %p120, %p121
    %p123 = scmp.ne.s32.totalorder %s111, %s112
    %p124 = scmp.eq.s32.totalorder %s18, 1
    %p125 = por %p123, %p124
    %p127 = scmp.ne.s32.totalorder %s112, %s126
    %p128 = scmp.eq.s32.totalorder %s18, 0
    %p129 = por %p127, %p128
    %s131 = sadd.s32 %s130, 1
    %p134 = scmp.eq.s32.totalorder %s12, 1
    %p135 = scmp.ne.s32.totalorder %s130, %s132
    %p136 = scmp.eq.s32.totalorder %s12, 0
    %p137 = por %p135, %p136
    %p138 = scmp.ne.s32.totalorder %s130, %s132
    %p139 = scmp.eq.s32.totalorder %s17, 1
    %p140 = por %p138, %p139
    %p141 = scmp.ne.s32.totalorder %s132, %s133
    %p142 = scmp.eq.s32.totalorder %s17, 0
    %p143 = por %p141, %p142
    %p144 = scmp.ne.s32.totalorder %s132, %s133
    %p145 = scmp.eq.s32.totalorder %s18, 1
    %p146 = por %p144, %p145
    %p148 = scmp.ne.s32.totalorder %s133, %s147
    %p149 = scmp.eq.s32.totalorder %s18, 0
    %p150 = por %p148, %p149
    %s151 = ssub.s32 %s12, %s19
    %p152 = scmp.eq.s32.totalorder %s151, 0
    %s154 = sadd.s32 %s153, 1
    %s155 = scalar_select %p152, %s153, %s154
    %p158 = pneg %p152
    %p159 = scmp.eq.s32.totalorder %s12, 1
    %p160 = por %p158, %p159
    %p161 = scmp.ne.s32.totalorder %s153, %s156
    %p162 = scmp.eq.s32.totalorder %s12, 0
    %p163 = por %p161, %p162
    %p164 = scmp.ne.s32.totalorder %s153, %s156
    %p165 = scmp.eq.s32.totalorder %s17, 1
    %p166 = por %p164, %p165
    %p167 = scmp.ne.s32.totalorder %s156, %s157
    %p168 = scmp.eq.s32.totalorder %s17, 0
    %p169 = por %p167, %p168
    %p170 = scmp.ne.s32.totalorder %s156, %s157
    %p171 = scmp.eq.s32.totalorder %s18, 1
    %p172 = por %p170, %p171
    %p174 = scmp.ne.s32.totalorder %s157, %s173
    %p175 = scmp.eq.s32.totalorder %s18, 0
    %p176 = por %p174, %p175
    %p177 = scmp.le.s32.totalorder 1, %s12
    %p178 = scmp.lt.s32.totalorder %s12, 3
    %p179 = pnand %p177, %p178
    %p180 = pneg %p179
    // Predicated region
    $region9: #{_lambda_.1} parent=5 // pred_check
      _
    $region10: #{_lambda_.1} parent=5 // pred_check_branch
      %182 = sbr.rel (%p179) target = $region12
    $region11: #{_lambda_.1} parent=5 // pred_region
      %s183 = ssub.s32 %s12, 1
      // Predicated region
      $region13: #{_lambda_.1} parent=11 // pred_check
        %p184 = pneg %p59
      $region14: #{_lambda_.1} parent=11 // pred_check_branch
        %186 = sbr.rel (%p184) target = $region16
      $region15: #{_lambda_.1} parent=11 // pred_region
        _
      $region16: #{_lambda_.1} parent=11 // pred_fallthru
        _
      // Predicated region
      $region17: #{_lambda_.1} parent=11 // pred_check
        %p187 = pneg %p80
      $region18: #{_lambda_.1} parent=11 // pred_check_branch
        %189 = sbr.rel (%p187) target = $region20
      $region19: #{_lambda_.1} parent=11 // pred_region
        _
      $region20: #{_lambda_.1} parent=11 // pred_fallthru
        _
      // Predicated region
      $region21: #{_lambda_.1} parent=11 // pred_check
        %p190 = pneg %p101
      $region22: #{_lambda_.1} parent=11 // pred_check_branch
        %192 = sbr.rel (%p190) target = $region24
      $region23: #{_lambda_.1} parent=11 // pred_region
        _
      $region24: #{_lambda_.1} parent=11 // pred_fallthru
        _
      // Predicated region
      $region25: #{_lambda_.1} parent=11 // pred_check
        %p193 = pneg %p122
      $region26: #{_lambda_.1} parent=11 // pred_check_branch
        %195 = sbr.rel (%p193) target = $region28
      $region27: #{_lambda_.1} parent=11 // pred_region
        _
      $region28: #{_lambda_.1} parent=11 // pred_fallthru
        _
      // Predicated region
      $region29: #{_lambda_.1} parent=11 // pred_check
        %p196 = pneg %p143
      $region30: #{_lambda_.1} parent=11 // pred_check_branch
        %198 = sbr.rel (%p196) target = $region32
      $region31: #{_lambda_.1} parent=11 // pred_region
        _
      $region32: #{_lambda_.1} parent=11 // pred_fallthru
        _
    $region12: #{_lambda_.1} parent=5 // pred_fallthru
      _
    %p199 = scmp.lt.s32.totalorder %s12, 2
    // Predicated region
    $region33: #{_lambda_.1} parent=5 // pred_check
      %p200 = pneg %p199
    $region34: #{_lambda_.1} parent=5 // pred_check_branch
      %202 = sbr.rel (%p200) target = $region36
    $region35: #{_lambda_.1} parent=5 // pred_region
      // Predicated region
      $region37: #{_lambda_.1} parent=35 // pred_check
        %p203 = pneg %p32
      $region38: #{_lambda_.1} parent=35 // pred_check_branch
        %205 = sbr.rel (%p203) target = $region40
      $region39: #{_lambda_.1} parent=35 // pred_region
        %p206 = scmp.lt.s32.totalorder %s12, 1
        %s207 = scalar_select %p206, %s12, 1
        %s208 = smul.addr %s207, 4
        %s209 = smul.addr %s208, 8
        %s210 = scalar_lea.vmem %s0, %s209
      $region40: #{_lambda_.1} parent=35 // pred_fallthru
        _
    $region36: #{_lambda_.1} parent=5 // pred_fallthru
      _
    %p211 = scmp.le.s32.totalorder 1, %s12
    %p212 = scmp.lt.s32.totalorder %s12, 3
    %p213 = pnand %p211, %p212
    %p214 = pneg %p213
    // Predicated region
    $region41: #{_lambda_.1} parent=5 // pred_check
      _
    $region42: #{_lambda_.1} parent=5 // pred_check_branch
      %216 = sbr.rel (%p213) target = $region44
    $region43: #{_lambda_.1} parent=5 // pred_region
      %s217 = ssub.s32 %s12, 1
      %p218 = scmp.lt.s32.totalorder %s17, 1
      %s219 = scalar_select %p218, %s17, 1
      %s220 = smul.addr %s219, 4
      %s221 = smul.addr %s220, 8
      %s222 = scalar_lea.vmem %s0, %s221
      %p223 = pneg %p38
      %p224 = pneg %p35
      %p225 = pneg %p59
      %p226 = pneg %p56
      %p227 = pneg %p80
      %p228 = pneg %p77
      %p229 = pneg %p101
      %p230 = pneg %p98
      %p231 = pneg %p122
      %p232 = pneg %p119
      %p233 = pneg %p143
      %p234 = pneg %p140
      %p235 = pneg %p169
      %p236 = pneg %p166
      %p237 = scmp.lt.s32.totalorder %s17, 1
      %s238 = scalar_select %p237, %s17, 1
      %s239 = smul.addr %s238, 4
      %s240 = smul.addr %s239, 8
      %s241 = scalar_lea.vmem %s6, %s240
      %p242 = scmp.lt.s32.totalorder %s17, 1
      %s243 = scalar_select %p242, %s17, 1
      %s244 = smul.addr %s243, 4
      %s245 = smul.addr %s244, 8
      %s246 = scalar_lea.vmem %s0, %s245
      %p247 = scmp.lt.s32.totalorder %s17, 1
      %s248 = scalar_select %p247, %s17, 1
      %s249 = smul.addr %s248, 4
      %s250 = smul.addr %s249, 8
      %s251 = scalar_lea.vmem %s6, %s250
      %v252 = vld [vmem:[%s246] sm:$0xff]
      %v253 = vld [vmem:[%s246 + $0x8] sm:$0xff]
      %v254 = vld [vmem:[%s246 + $0x10] sm:$0xff]
      %v255 = vld [vmem:[%s246 + $0x18] sm:$0xff]
      %v256 = vld [vmem:[%s1] sm:$0x1]
      %v257 = vld [vmem:[%s2] sm:$0xff]
      %v258 = vld [vmem:[%s2 + $0x8] sm:$0xff]
      %v259 = vld [vmem:[%s2 + $0x10] sm:$0xff]
      %v260 = vld [vmem:[%s2 + $0x18] sm:$0xff]
      %v261 = vld [vmem:[%s2 + $0x20] sm:$0xff]
      %v262 = vld [vmem:[%s2 + $0x28] sm:$0xff]
      %v263 = vld [vmem:[%s2 + $0x30] sm:$0xff]
      %v264 = vld [vmem:[%s2 + $0x38] sm:$0xff]
      %v265 = vld [vmem:[%s3] sm:$0xff]
      %v266 = vld [vmem:[%s3 + $0x8] sm:$0xff]
      %v267 = vld [vmem:[%s3 + $0x10] sm:$0xff]
      %v268 = vld [vmem:[%s3 + $0x18] sm:$0xff]
      %v269 = vld [vmem:[%s3 + $0x20] sm:$0xff]
      %v270 = vld [vmem:[%s3 + $0x28] sm:$0xff]
      %v271 = vld [vmem:[%s3 + $0x30] sm:$0xff]
      %v272 = vld [vmem:[%s3 + $0x38] sm:$0xff]
      %v273 = vld [vmem:[%s3 + $0x40] sm:$0xff]
      %v274 = vld [vmem:[%s3 + $0x48] sm:$0xff]
      %v275 = vld [vmem:[%s3 + $0x50] sm:$0xff]
      %v276 = vld [vmem:[%s3 + $0x58] sm:$0xff]
      %v277 = vld [vmem:[%s3 + $0x60] sm:$0xff]
      %v278 = vld [vmem:[%s3 + $0x68] sm:$0xff]
      %v279 = vld [vmem:[%s3 + $0x70] sm:$0xff]
      %v280 = vld [vmem:[%s3 + $0x78] sm:$0xff]
      %v281 = vld [vmem:[%s4] sm:$0xff]
      %vm282 = vcmask 261120
      %v283 = vsel %vm282, %v252, 0.0
      %284 = vadd.xlane.f32.xlu0 %v283
      %v285 = vpop.xlane.xlu0 %284
      %v286 = vsel %vm282, %v253, 0.0
      %287 = vadd.xlane.f32.xlu0 %v286
      %v288 = vpop.xlane.xlu0 %287
      %v289 = vsel %vm282, %v254, 0.0
      %290 = vadd.xlane.f32.xlu0 %v289
      %v291 = vpop.xlane.xlu0 %290
      %v292 = vsel %vm282, %v255, 0.0
      %293 = vadd.xlane.f32.xlu0 %v292
      %v294 = vpop.xlane.xlu0 %293
      %v295 = vrcp.pop 32.0
      %v296 = vmul.f32 32.0, %v295
      %v297 = vsub.f32 1.0, %v296
      %v298 = vmul.f32 %v295, %v297
      %v299 = vadd.f32 %v295, %v298
      %vm300 = vweird.f32 %v295
      %v301 = vsel %vm300, %v295, %v299
      %v302 = vmul.f32 %v285, %v301
      %v303 = vmul.f32 %v288, %v301
      %v304 = vmul.f32 %v291, %v301
      %v305 = vmul.f32 %v294, %v301
      %v306 = vsub.f32 %v252, %v302
      %v307 = vsub.f32 %v253, %v303
      %v308 = vsub.f32 %v254, %v304
      %v309 = vsub.f32 %v255, %v305
      %v310 = vmul.f32 %v306, %v306
      %v311 = vmul.f32 %v307, %v307
      %v312 = vmul.f32 %v308, %v308
      %v313 = vmul.f32 %v309, %v309
      %v314 = vsel %vm282, %v310, 0.0
      %315 = vadd.xlane.f32.xlu0 %v314
      %v316 = vpop.xlane.xlu0 %315
      %v317 = vsel %vm282, %v311, 0.0
      %318 = vadd.xlane.f32.xlu0 %v317
      %v319 = vpop.xlane.xlu0 %318
      %v320 = vsel %vm282, %v312, 0.0
      %321 = vadd.xlane.f32.xlu0 %v320
      %v322 = vpop.xlane.xlu0 %321
      %v323 = vsel %vm282, %v313, 0.0
      %324 = vadd.xlane.f32.xlu0 %v323
      %v325 = vpop.xlane.xlu0 %324
      %v326 = vmul.f32 %v316, %v301
      %v327 = vmul.f32 %v319, %v301
      %v328 = vmul.f32 %v322, %v301
      %v329 = vmul.f32 %v325, %v301
      %v330 = vadd.f32 %v326, 1e-05
      %v331 = vadd.f32 %v327, 1e-05
      %v332 = vadd.f32 %v328, 1e-05
      %v333 = vadd.f32 %v329, 1e-05
      %v334 = vrsqrt.pop %v330
      %v335 = vmul.f32 %v334, %v330
      %v336 = vmul.f32 %v335, %v334
      %v337 = vmul.f32 0.5, %v336
      %v338 = vsub.f32 1.5, %v337
      %v339 = vmul.f32 %v334, %v338
      %vm340 = vweird.f32 %v330
      %vm341 = vweird.f32 %v334
      %vm342 = vmor %vm340, %vm341
      %v343 = vsel %vm342, %v334, %v339
      %v344 = vrsqrt.pop %v331
      %v345 = vmul.f32 %v344, %v331
      %v346 = vmul.f32 %v345, %v344
      %v347 = vmul.f32 0.5, %v346
      %v348 = vsub.f32 1.5, %v347
      %v349 = vmul.f32 %v344, %v348
      %vm350 = vweird.f32 %v331
      %vm351 = vweird.f32 %v344
      %vm352 = vmor %vm350, %vm351
      %v353 = vsel %vm352, %v344, %v349
      %v354 = vrsqrt.pop %v332
      %v355 = vmul.f32 %v354, %v332
      %v356 = vmul.f32 %v355, %v354
      %v357 = vmul.f32 0.5, %v356
      %v358 = vsub.f32 1.5, %v357
      %v359 = vmul.f32 %v354, %v358
      %vm360 = vweird.f32 %v332
      %vm361 = vweird.f32 %v354
      %vm362 = vmor %vm360, %vm361
      %v363 = vsel %vm362, %v354, %v359
      %v364 = vrsqrt.pop %v333
      %v365 = vmul.f32 %v364, %v333
      %v366 = vmul.f32 %v365, %v364
      %v367 = vmul.f32 0.5, %v366
      %v368 = vsub.f32 1.5, %v367
      %v369 = vmul.f32 %v364, %v368
      %vm370 = vweird.f32 %v333
      %vm371 = vweird.f32 %v364
      %vm372 = vmor %vm370, %vm371
      %v373 = vsel %vm372, %v364, %v369
      %v374 = vmul.f32 %v306, %v343
      %v375 = vmul.f32 %v307, %v353
      %v376 = vmul.f32 %v308, %v363
      %v377 = vmul.f32 %v309, %v373
      %v378 = vperm.slane %v281, 0
      %v379 = vmul.f32 %v374, %v378
      %v380 = vmul.f32 %v375, %v378
      %v381 = vmul.f32 %v376, %v378
      %v382 = vmul.f32 %v377, %v378
      %v383 = vperm.slane %v281, 1
      %v384 = vadd.f32 %v379, %v383
      %v385 = vadd.f32 %v380, %v383
      %v386 = vadd.f32 %v381, %v383
      %v387 = vadd.f32 %v382, %v383
      %v388 = vperm.slane %v281, 2
      %v390 = vsel %vm282, %v384, 0
      %v393 = vsel %vm282, %v385, 0
      %v396 = vsel %vm282, %v386, 0
      %v399 = vsel %vm282, %v387, 0
      %401 = vmatpush.msra.mxu0 0.0
      %402 = vmatpush.msra.mxu0 0.0
      %403 = vmatpush.msra.mxu0 0.0
      %404 = vmatpush.msra.mxu0 0.0
      %405 = vmatpush.msra.mxu0 0.0
      %406 = vmatpush.msra.mxu0 0.0
      %407 = vmatpush.msra.mxu0 0.0
      %408 = vmatpush.msra.mxu0 0.0
      %409 = vmatpush.msra.mxu0 0.0
      %410 = vmatpush.msra.mxu0 0.0
      %411 = vmatpush.msra.mxu0 0.0
      %412 = vmatpush.msra.mxu0 0.0
      %413 = vmatpush.msra.mxu0 %v263
      %414 = vmatpush.msra.mxu0 %v261
      %415 = vmatpush.msra.mxu0 %v259
      %416 = vmatpush.msra.mxu0 %v257
      %417 = vmatmul.f32.gmra.mxu0 %v390
      %v418 = vpop.f32.mrf.mxu0
      %v419 = vadd.f32 %v388, %v418
      %420 = vmatmul.f32.gmra.mxu0 %v393
      %v421 = vpop.f32.mrf.mxu0
      %v422 = vadd.f32 %v388, %v421
      %423 = vmatmul.f32.gmra.mxu0 %v396
      %v424 = vpop.f32.mrf.mxu0
      %v425 = vadd.f32 %v388, %v424
      %426 = vmatmul.f32.gmra.mxu0 %v399
      %v427 = vpop.f32.mrf.mxu0
      %v428 = vadd.f32 %v388, %v427
      %429 = vdwg.mxu0
      %434 = vrot.lane.b32.xlu0 %v419, 96
      %v435 = vpop.permute.xlu0 %434
      %436 = vrot.lane.b32.xlu0 %v422, 96
      %v437 = vpop.permute.xlu0 %436
      %438 = vrot.lane.b32.xlu0 %v425, 96
      %v439 = vpop.permute.xlu0 %438
      %440 = vrot.lane.b32.xlu0 %v428, 96
      %v441 = vpop.permute.xlu0 %440
      %vm442 = vcmask 64512
      %v443 = vsel %vm442, %v419, 0
      %v445 = vsel %vm442, %v422, 0
      %v447 = vsel %vm442, %v425, 0
      %v449 = vsel %vm442, %v428, 0
      %v451 = vsel %vm442, %v435, 0
      %v453 = vsel %vm442, %v437, 0
      %v455 = vsel %vm442, %v439, 0
      %v457 = vsel %vm442, %v441, 0
      %459 = vmatpush.xpose.msra.mxu0 0.0
      %460 = vmatpush.xpose.msra.mxu0 0.0
      %461 = vmatpush.xpose.msra.mxu0 0.0
      %462 = vmatpush.xpose.msra.mxu0 0.0
      %463 = vmatpush.xpose.msra.mxu0 0.0
      %464 = vmatpush.xpose.msra.mxu0 0.0
      %465 = vmatpush.xpose.msra.mxu0 0.0
      %466 = vmatpush.xpose.msra.mxu0 0.0
      %467 = vmatpush.xpose.msra.mxu0 0.0
      %468 = vmatpush.xpose.msra.mxu0 0.0
      %469 = vmatpush.xpose.msra.mxu0 0.0
      %470 = vmatpush.xpose.msra.mxu0 0.0
      %471 = vmatpush.xpose.msra.mxu0 %v457
      %472 = vmatpush.xpose.msra.mxu0 %v455
      %473 = vmatpush.xpose.msra.mxu0 %v453
      %474 = vmatpush.xpose.msra.mxu0 %v451
      %475 = vmatmul.f32.gmra.mxu0 %v443
      %v476 = vpop.f32.mrf.mxu0
      %v477 = vadd.f32 0.0, %v476
      %478 = vmatmul.f32.gmra.mxu0 %v445
      %v479 = vpop.f32.mrf.mxu0
      %v480 = vadd.f32 0.0, %v479
      %481 = vmatmul.f32.gmra.mxu0 %v447
      %v482 = vpop.f32.mrf.mxu0
      %v483 = vadd.f32 0.0, %v482
      %484 = vmatmul.f32.gmra.mxu0 %v449
      %v485 = vpop.f32.mrf.mxu0
      %v486 = vadd.f32 0.0, %v485
      %487 = vdwg.mxu0
      %v488 = vmul.f32 %v477, 0.35355338
      %v489 = vmul.f32 %v480, 0.35355338
      %v490 = vmul.f32 %v483, 0.35355338
      %v491 = vmul.f32 %v486, 0.35355338
      %492 = vst.msk [vmem:[#allocation2] sm:$0xff] %vm282, %v488
      %493 = vst.msk [vmem:[#allocation2 + $0x8] sm:$0xff] %vm282, %v489
      %494 = vst.msk [vmem:[#allocation2 + $0x10] sm:$0xff] %vm282, %v490
      %495 = vst.msk [vmem:[#allocation2 + $0x18] sm:$0xff] %vm282, %v491
      %496 = vrot.lane.b32.xlu0 %v419, 120
      %v497 = vpop.permute.xlu0 %496
      %498 = vrot.lane.b32.xlu0 %v422, 120
      %v499 = vpop.permute.xlu0 %498
      %500 = vrot.lane.b32.xlu0 %v425, 120
      %v501 = vpop.permute.xlu0 %500
      %502 = vrot.lane.b32.xlu0 %v428, 120
      %v503 = vpop.permute.xlu0 %502
      %504 = vrot.lane.b32.xlu0 %v419, 88
      %v505 = vpop.permute.xlu0 %504
      %506 = vrot.lane.b32.xlu0 %v422, 88
      %v507 = vpop.permute.xlu0 %506
      %508 = vrot.lane.b32.xlu0 %v425, 88
      %v509 = vpop.permute.xlu0 %508
      %510 = vrot.lane.b32.xlu0 %v428, 88
      %v511 = vpop.permute.xlu0 %510
      %v512 = vsel %vm442, %v497, 0
      %v514 = vsel %vm442, %v499, 0
      %v516 = vsel %vm442, %v501, 0
      %v518 = vsel %vm442, %v503, 0
      %v520 = vsel %vm442, %v505, 0
      %v522 = vsel %vm442, %v507, 0
      %v524 = vsel %vm442, %v509, 0
      %v526 = vsel %vm442, %v511, 0
      %528 = vmatpush.xpose.msra.mxu0 0.0
      %529 = vmatpush.xpose.msra.mxu0 0.0
      %530 = vmatpush.xpose.msra.mxu0 0.0
      %531 = vmatpush.xpose.msra.mxu0 0.0
      %532 = vmatpush.xpose.msra.mxu0 0.0
      %533 = vmatpush.xpose.msra.mxu0 0.0
      %534 = vmatpush.xpose.msra.mxu0 0.0
      %535 = vmatpush.xpose.msra.mxu0 0.0
      %536 = vmatpush.xpose.msra.mxu0 0.0
      %537 = vmatpush.xpose.msra.mxu0 0.0
      %538 = vmatpush.xpose.msra.mxu0 0.0
      %539 = vmatpush.xpose.msra.mxu0 0.0
      %540 = vmatpush.xpose.msra.mxu0 %v526
      %541 = vmatpush.xpose.msra.mxu0 %v524
      %542 = vmatpush.xpose.msra.mxu0 %v522
      %543 = vmatpush.xpose.msra.mxu0 %v520
      %544 = vmatmul.f32.gmra.mxu0 %v512
      %v545 = vpop.f32.mrf.mxu0
      %v546 = vadd.f32 0.0, %v545
      %547 = vmatmul.f32.gmra.mxu0 %v514
      %v548 = vpop.f32.mrf.mxu0
      %v549 = vadd.f32 0.0, %v548
      %550 = vmatmul.f32.gmra.mxu0 %v516
      %v551 = vpop.f32.mrf.mxu0
      %v552 = vadd.f32 0.0, %v551
      %553 = vmatmul.f32.gmra.mxu0 %v518
      %v554 = vpop.f32.mrf.mxu0
      %v555 = vadd.f32 0.0, %v554
      %556 = vdwg.mxu0
      %v557 = vmul.f32 %v546, 0.35355338
      %v558 = vmul.f32 %v549, 0.35355338
      %v559 = vmul.f32 %v552, 0.35355338
      %v560 = vmul.f32 %v555, 0.35355338
      %561 = vst.msk [vmem:[#allocation2 + $0x20] sm:$0xff] %vm282, %v557
      %562 = vst.msk [vmem:[#allocation2 + $0x28] sm:$0xff] %vm282, %v558
      %563 = vst.msk [vmem:[#allocation2 + $0x30] sm:$0xff] %vm282, %v559
      %564 = vst.msk [vmem:[#allocation2 + $0x38] sm:$0xff] %vm282, %v560
      %565 = vrot.lane.b32.xlu0 %v419, 112
      %v566 = vpop.permute.xlu0 %565
      %567 = vrot.lane.b32.xlu0 %v422, 112
      %v568 = vpop.permute.xlu0 %567
      %569 = vrot.lane.b32.xlu0 %v425, 112
      %v570 = vpop.permute.xlu0 %569
      %571 = vrot.lane.b32.xlu0 %v428, 112
      %v572 = vpop.permute.xlu0 %571
      %573 = vrot.lane.b32.xlu0 %v419, 80
      %v574 = vpop.permute.xlu0 %573
      %575 = vrot.lane.b32.xlu0 %v422, 80
      %v576 = vpop.permute.xlu0 %575
      %577 = vrot.lane.b32.xlu0 %v425, 80
      %v578 = vpop.permute.xlu0 %577
      %579 = vrot.lane.b32.xlu0 %v428, 80
      %v580 = vpop.permute.xlu0 %579
      %v581 = vsel %vm442, %v566, 0
      %v583 = vsel %vm442, %v568, 0
      %v585 = vsel %vm442, %v570, 0
      %v587 = vsel %vm442, %v572, 0
      %v589 = vsel %vm442, %v574, 0
      %v591 = vsel %vm442, %v576, 0
      %v593 = vsel %vm442, %v578, 0
      %v595 = vsel %vm442, %v580, 0
      %597 = vmatpush.xpose.msra.mxu0 0.0
      %598 = vmatpush.xpose.msra.mxu0 0.0
      %599 = vmatpush.xpose.msra.mxu0 0.0
      %600 = vmatpush.xpose.msra.mxu0 0.0
      %601 = vmatpush.xpose.msra.mxu0 0.0
      %602 = vmatpush.xpose.msra.mxu0 0.0
      %603 = vmatpush.xpose.msra.mxu0 0.0
      %604 = vmatpush.xpose.msra.mxu0 0.0
      %605 = vmatpush.xpose.msra.mxu0 0.0
      %606 = vmatpush.xpose.msra.mxu0 0.0
      %607 = vmatpush.xpose.msra.mxu0 0.0
      %608 = vmatpush.xpose.msra.mxu0 0.0
      %609 = vmatpush.xpose.msra.mxu0 %v595
      %610 = vmatpush.xpose.msra.mxu0 %v593
      %611 = vmatpush.xpose.msra.mxu0 %v591
      %612 = vmatpush.xpose.msra.mxu0 %v589
      %613 = vmatmul.f32.gmra.mxu0 %v581
      %v614 = vpop.f32.mrf.mxu0
      %v615 = vadd.f32 0.0, %v614
      %616 = vmatmul.f32.gmra.mxu0 %v583
      %v617 = vpop.f32.mrf.mxu0
      %v618 = vadd.f32 0.0, %v617
      %619 = vmatmul.f32.gmra.mxu0 %v585
      %v620 = vpop.f32.mrf.mxu0
      %v621 = vadd.f32 0.0, %v620
      %622 = vmatmul.f32.gmra.mxu0 %v587
      %v623 = vpop.f32.mrf.mxu0
      %v624 = vadd.f32 0.0, %v623
      %625 = vdwg.mxu0
      %v626 = vmul.f32 %v615, 0.35355338
      %v627 = vmul.f32 %v618, 0.35355338
      %v628 = vmul.f32 %v621, 0.35355338
      %v629 = vmul.f32 %v624, 0.35355338
      %630 = vst.msk [vmem:[#allocation2 + $0x40] sm:$0xff] %vm282, %v626
      %631 = vst.msk [vmem:[#allocation2 + $0x48] sm:$0xff] %vm282, %v627
      %632 = vst.msk [vmem:[#allocation2 + $0x50] sm:$0xff] %vm282, %v628
      %633 = vst.msk [vmem:[#allocation2 + $0x58] sm:$0xff] %vm282, %v629
      %634 = vrot.lane.b32.xlu0 %v419, 104
      %v635 = vpop.permute.xlu0 %634
      %636 = vrot.lane.b32.xlu0 %v422, 104
      %v637 = vpop.permute.xlu0 %636
      %638 = vrot.lane.b32.xlu0 %v425, 104
      %v639 = vpop.permute.xlu0 %638
      %640 = vrot.lane.b32.xlu0 %v428, 104
      %v641 = vpop.permute.xlu0 %640
      %642 = vrot.lane.b32.xlu0 %v419, 72
      %v643 = vpop.permute.xlu0 %642
      %644 = vrot.lane.b32.xlu0 %v422, 72
      %v645 = vpop.permute.xlu0 %644
      %646 = vrot.lane.b32.xlu0 %v425, 72
      %v647 = vpop.permute.xlu0 %646
      %648 = vrot.lane.b32.xlu0 %v428, 72
      %v649 = vpop.permute.xlu0 %648
      %v650 = vsel %vm442, %v635, 0
      %v652 = vsel %vm442, %v637, 0
      %v654 = vsel %vm442, %v639, 0
      %v656 = vsel %vm442, %v641, 0
      %v658 = vsel %vm442, %v643, 0
      %v660 = vsel %vm442, %v645, 0
      %v662 = vsel %vm442, %v647, 0
      %v664 = vsel %vm442, %v649, 0
      %666 = vmatpush.xpose.msra.mxu0 0.0
      %667 = vmatpush.xpose.msra.mxu0 0.0
      %668 = vmatpush.xpose.msra.mxu0 0.0
      %669 = vmatpush.xpose.msra.mxu0 0.0
      %670 = vmatpush.xpose.msra.mxu0 0.0
      %671 = vmatpush.xpose.msra.mxu0 0.0
      %672 = vmatpush.xpose.msra.mxu0 0.0
      %673 = vmatpush.xpose.msra.mxu0 0.0
      %674 = vmatpush.xpose.msra.mxu0 0.0
      %675 = vmatpush.xpose.msra.mxu0 0.0
      %676 = vmatpush.xpose.msra.mxu0 0.0
      %677 = vmatpush.xpose.msra.mxu0 0.0
      %678 = vmatpush.xpose.msra.mxu0 %v664
      %679 = vmatpush.xpose.msra.mxu0 %v662
      %680 = vmatpush.xpose.msra.mxu0 %v660
      %681 = vmatpush.xpose.msra.mxu0 %v658
      %682 = vmatmul.f32.gmra.mxu0 %v650
      %v683 = vpop.f32.mrf.mxu0
      %v684 = vadd.f32 0.0, %v683
      %685 = vmatmul.f32.gmra.mxu0 %v652
      %v686 = vpop.f32.mrf.mxu0
      %v687 = vadd.f32 0.0, %v686
      %688 = vmatmul.f32.gmra.mxu0 %v654
      %v689 = vpop.f32.mrf.mxu0
      %v690 = vadd.f32 0.0, %v689
      %691 = vmatmul.f32.gmra.mxu0 %v656
      %v692 = vpop.f32.mrf.mxu0
      %v693 = vadd.f32 0.0, %v692
      %694 = vdwg.mxu0
      %v695 = vmul.f32 %v684, 0.35355338
      %v696 = vmul.f32 %v687, 0.35355338
      %v697 = vmul.f32 %v690, 0.35355338
      %v698 = vmul.f32 %v693, 0.35355338
      %699 = vst.msk [vmem:[#allocation2 + $0x60] sm:$0xff] %vm282, %v695
      %700 = vst.msk [vmem:[#allocation2 + $0x68] sm:$0xff] %vm282, %v696
      %701 = vst.msk [vmem:[#allocation2 + $0x70] sm:$0xff] %vm282, %v697
      %702 = vst.msk [vmem:[#allocation2 + $0x78] sm:$0xff] %vm282, %v698
      %v703 = vld [vmem:[#allocation2] sm:$0xff]
      %v704 = vld [vmem:[#allocation2 + $0x8] sm:$0xff]
      %v705 = vld [vmem:[#allocation2 + $0x10] sm:$0xff]
      %v706 = vld [vmem:[#allocation2 + $0x18] sm:$0xff]
      %v707 = vld [vmem:[#allocation2 + $0x20] sm:$0xff]
      %v708 = vld [vmem:[#allocation2 + $0x28] sm:$0xff]
      %v709 = vld [vmem:[#allocation2 + $0x30] sm:$0xff]
      %v710 = vld [vmem:[#allocation2 + $0x38] sm:$0xff]
      %v711 = vld [vmem:[#allocation2 + $0x40] sm:$0xff]
      %v712 = vld [vmem:[#allocation2 + $0x48] sm:$0xff]
      %v713 = vld [vmem:[#allocation2 + $0x50] sm:$0xff]
      %v714 = vld [vmem:[#allocation2 + $0x58] sm:$0xff]
      %v715 = vld [vmem:[#allocation2 + $0x60] sm:$0xff]
      %v716 = vld [vmem:[#allocation2 + $0x68] sm:$0xff]
      %v717 = vld [vmem:[#allocation2 + $0x70] sm:$0xff]
      %v718 = vld [vmem:[#allocation2 + $0x78] sm:$0xff]
      %v720 = vperm.slane %v256, 0
      %v722 = vadd.f32 %v703, %v720
      %v723 = vadd.f32 %v704, %v720
      %v724 = vadd.f32 %v705, %v720
      %v725 = vadd.f32 %v706, %v720
      %v726 = vadd.f32 %v707, %v720
      %v727 = vadd.f32 %v708, %v720
      %v728 = vadd.f32 %v709, %v720
      %v729 = vadd.f32 %v710, %v720
      %v730 = vadd.f32 %v711, %v720
      %v731 = vadd.f32 %v712, %v720
      %v732 = vadd.f32 %v713, %v720
      %v733 = vadd.f32 %v714, %v720
      %v734 = vadd.f32 %v715, %v720
      %v735 = vadd.f32 %v716, %v720
      %v736 = vadd.f32 %v717, %v720
      %v737 = vadd.f32 %v718, %v720
      %v738 = vsel %vm282, %v722, -inf
      %739 = vmax.xlane.f32.xlu0 %v738
      %v740 = vpop.xlane.xlu0 %739
      %v741 = vsel %vm282, %v723, -inf
      %742 = vmax.xlane.f32.xlu0 %v741
      %v743 = vpop.xlane.xlu0 %742
      %v744 = vsel %vm282, %v724, -inf
      %745 = vmax.xlane.f32.xlu0 %v744
      %v746 = vpop.xlane.xlu0 %745
      %v747 = vsel %vm282, %v725, -inf
      %748 = vmax.xlane.f32.xlu0 %v747
      %v749 = vpop.xlane.xlu0 %748
      %v750 = vsel %vm282, %v726, -inf
      %751 = vmax.xlane.f32.xlu0 %v750
      %v752 = vpop.xlane.xlu0 %751
      %v753 = vsel %vm282, %v727, -inf
      %754 = vmax.xlane.f32.xlu0 %v753
      %v755 = vpop.xlane.xlu0 %754
      %v756 = vsel %vm282, %v728, -inf
      %757 = vmax.xlane.f32.xlu0 %v756
      %v758 = vpop.xlane.xlu0 %757
      %v759 = vsel %vm282, %v729, -inf
      %760 = vmax.xlane.f32.xlu0 %v759
      %v761 = vpop.xlane.xlu0 %760
      %v762 = vsel %vm282, %v730, -inf
      %763 = vmax.xlane.f32.xlu0 %v762
      %v764 = vpop.xlane.xlu0 %763
      %v765 = vsel %vm282, %v731, -inf
      %766 = vmax.xlane.f32.xlu0 %v765
      %v767 = vpop.xlane.xlu0 %766
      %v768 = vsel %vm282, %v732, -inf
      %769 = vmax.xlane.f32.xlu0 %v768
      %v770 = vpop.xlane.xlu0 %769
      %v771 = vsel %vm282, %v733, -inf
      %772 = vmax.xlane.f32.xlu0 %v771
      %v773 = vpop.xlane.xlu0 %772
      %v774 = vsel %vm282, %v734, -inf
      %775 = vmax.xlane.f32.xlu0 %v774
      %v776 = vpop.xlane.xlu0 %775
      %v777 = vsel %vm282, %v735, -inf
      %778 = vmax.xlane.f32.xlu0 %v777
      %v779 = vpop.xlane.xlu0 %778
      %v780 = vsel %vm282, %v736, -inf
      %781 = vmax.xlane.f32.xlu0 %v780
      %v782 = vpop.xlane.xlu0 %781
      %v783 = vsel %vm282, %v737, -inf
      %784 = vmax.xlane.f32.xlu0 %v783
      %v785 = vpop.xlane.xlu0 %784
      %v786 = vsub.f32 %v722, %v740
      %v787 = vsub.f32 %v723, %v743
      %v788 = vsub.f32 %v724, %v746
      %v789 = vsub.f32 %v725, %v749
      %v790 = vsub.f32 %v726, %v752
      %v791 = vsub.f32 %v727, %v755
      %v792 = vsub.f32 %v728, %v758
      %v793 = vsub.f32 %v729, %v761
      %v794 = vsub.f32 %v730, %v764
      %v795 = vsub.f32 %v731, %v767
      %v796 = vsub.f32 %v732, %v770
      %v797 = vsub.f32 %v733, %v773
      %v798 = vsub.f32 %v734, %v776
      %v799 = vsub.f32 %v735, %v779
      %v800 = vsub.f32 %v736, %v782
      %v801 = vsub.f32 %v737, %v785
      %v802 = vmul.f32 %v786, 1.442695
      %v803 = vpow.pop %v802
      %v804 = vmul.f32 %v787, 1.442695
      %v805 = vpow.pop %v804
      %v806 = vmul.f32 %v788, 1.442695
      %v807 = vpow.pop %v806
      %v808 = vmul.f32 %v789, 1.442695
      %v809 = vpow.pop %v808
      %v810 = vmul.f32 %v790, 1.442695
      %v811 = vpow.pop %v810
      %v812 = vmul.f32 %v791, 1.442695
      %v813 = vpow.pop %v812
      %v814 = vmul.f32 %v792, 1.442695
      %v815 = vpow.pop %v814
      %v816 = vmul.f32 %v793, 1.442695
      %v817 = vpow.pop %v816
      %v818 = vmul.f32 %v794, 1.442695
      %v819 = vpow.pop %v818
      %v820 = vmul.f32 %v795, 1.442695
      %v821 = vpow.pop %v820
      %v822 = vmul.f32 %v796, 1.442695
      %v823 = vpow.pop %v822
      %v824 = vmul.f32 %v797, 1.442695
      %v825 = vpow.pop %v824
      %v826 = vmul.f32 %v798, 1.442695
      %v827 = vpow.pop %v826
      %v828 = vmul.f32 %v799, 1.442695
      %v829 = vpow.pop %v828
      %v830 = vmul.f32 %v800, 1.442695
      %v831 = vpow.pop %v830
      %v832 = vmul.f32 %v801, 1.442695
      %v833 = vpow.pop %v832
      %v834 = vsel %vm282, %v803, 0.0
      %835 = vadd.xlane.f32.xlu0 %v834
      %v836 = vpop.xlane.xlu0 %835
      %v837 = vsel %vm282, %v805, 0.0
      %838 = vadd.xlane.f32.xlu0 %v837
      %v839 = vpop.xlane.xlu0 %838
      %v840 = vsel %vm282, %v807, 0.0
      %841 = vadd.xlane.f32.xlu0 %v840
      %v842 = vpop.xlane.xlu0 %841
      %v843 = vsel %vm282, %v809, 0.0
      %844 = vadd.xlane.f32.xlu0 %v843
      %v845 = vpop.xlane.xlu0 %844
      %v846 = vsel %vm282, %v811, 0.0
      %847 = vadd.xlane.f32.xlu0 %v846
      %v848 = vpop.xlane.xlu0 %847
      %v849 = vsel %vm282, %v813, 0.0
      %850 = vadd.xlane.f32.xlu0 %v849
      %v851 = vpop.xlane.xlu0 %850
      %v852 = vsel %vm282, %v815, 0.0
      %853 = vadd.xlane.f32.xlu0 %v852
      %v854 = vpop.xlane.xlu0 %853
      %v855 = vsel %vm282, %v817, 0.0
      %856 = vadd.xlane.f32.xlu0 %v855
      %v857 = vpop.xlane.xlu0 %856
      %v858 = vsel %vm282, %v819, 0.0
      %859 = vadd.xlane.f32.xlu0 %v858
      %v860 = vpop.xlane.xlu0 %859
      %v861 = vsel %vm282, %v821, 0.0
      %862 = vadd.xlane.f32.xlu0 %v861
      %v863 = vpop.xlane.xlu0 %862
      %v864 = vsel %vm282, %v823, 0.0
      %865 = vadd.xlane.f32.xlu0 %v864
      %v866 = vpop.xlane.xlu0 %865
      %v867 = vsel %vm282, %v825, 0.0
      %868 = vadd.xlane.f32.xlu0 %v867
      %v869 = vpop.xlane.xlu0 %868
      %v870 = vsel %vm282, %v827, 0.0
      %871 = vadd.xlane.f32.xlu0 %v870
      %v872 = vpop.xlane.xlu0 %871
      %v873 = vsel %vm282, %v829, 0.0
      %874 = vadd.xlane.f32.xlu0 %v873
      %v875 = vpop.xlane.xlu0 %874
      %v876 = vsel %vm282, %v831, 0.0
      %877 = vadd.xlane.f32.xlu0 %v876
      %v878 = vpop.xlane.xlu0 %877
      %v879 = vsel %vm282, %v833, 0.0
      %880 = vadd.xlane.f32.xlu0 %v879
      %v881 = vpop.xlane.xlu0 %880
      %v882 = vrcp.pop %v836
      %v883 = vmul.f32 %v836, %v882
      %v884 = vsub.f32 1.0, %v883
      %v885 = vmul.f32 %v882, %v884
      %v886 = vadd.f32 %v882, %v885
      %vm887 = vweird.f32 %v836
      %vm888 = vweird.f32 %v882
      %vm889 = vmor %vm887, %vm888
      %v890 = vsel %vm889, %v882, %v886
      %v891 = vand.u32 2147483647, %v836
      %vm892 = vcmp.eq.f32.partialorder %v891, 8.507059e+37
      %v893 = vand.u32 %v836, 2147483648
      %v894 = vor.u32 1.1754944e-38, %v893
      %v895 = vsel %vm892, %v894, %v890
      %v896 = vmul.f32 %v803, %v895
      %v897 = vrcp.pop %v839
      %v898 = vmul.f32 %v839, %v897
      %v899 = vsub.f32 1.0, %v898
      %v900 = vmul.f32 %v897, %v899
      %v901 = vadd.f32 %v897, %v900
      %vm902 = vweird.f32 %v839
      %vm903 = vweird.f32 %v897
      %vm904 = vmor %vm902, %vm903
      %v905 = vsel %vm904, %v897, %v901
      %v906 = vand.u32 2147483647, %v839
      %vm907 = vcmp.eq.f32.partialorder %v906, 8.507059e+37
      %v908 = vand.u32 %v839, 2147483648
      %v909 = vor.u32 1.1754944e-38, %v908
      %v910 = vsel %vm907, %v909, %v905
      %v911 = vmul.f32 %v805, %v910
      %v912 = vrcp.pop %v842
      %v913 = vmul.f32 %v842, %v912
      %v914 = vsub.f32 1.0, %v913
      %v915 = vmul.f32 %v912, %v914
      %v916 = vadd.f32 %v912, %v915
      %vm917 = vweird.f32 %v842
      %vm918 = vweird.f32 %v912
      %vm919 = vmor %vm917, %vm918
      %v920 = vsel %vm919, %v912, %v916
      %v921 = vand.u32 2147483647, %v842
      %vm922 = vcmp.eq.f32.partialorder %v921, 8.507059e+37
      %v923 = vand.u32 %v842, 2147483648
      %v924 = vor.u32 1.1754944e-38, %v923
      %v925 = vsel %vm922, %v924, %v920
      %v926 = vmul.f32 %v807, %v925
      %v927 = vrcp.pop %v845
      %v928 = vmul.f32 %v845, %v927
      %v929 = vsub.f32 1.0, %v928
      %v930 = vmul.f32 %v927, %v929
      %v931 = vadd.f32 %v927, %v930
      %vm932 = vweird.f32 %v845
      %vm933 = vweird.f32 %v927
      %vm934 = vmor %vm932, %vm933
      %v935 = vsel %vm934, %v927, %v931
      %v936 = vand.u32 2147483647, %v845
      %vm937 = vcmp.eq.f32.partialorder %v936, 8.507059e+37
      %v938 = vand.u32 %v845, 2147483648
      %v939 = vor.u32 1.1754944e-38, %v938
      %v940 = vsel %vm937, %v939, %v935
      %v941 = vmul.f32 %v809, %v940
      %v942 = vrcp.pop %v848
      %v943 = vmul.f32 %v848, %v942
      %v944 = vsub.f32 1.0, %v943
      %v945 = vmul.f32 %v942, %v944
      %v946 = vadd.f32 %v942, %v945
      %vm947 = vweird.f32 %v848
      %vm948 = vweird.f32 %v942
      %vm949 = vmor %vm947, %vm948
      %v950 = vsel %vm949, %v942, %v946
      %v951 = vand.u32 2147483647, %v848
      %vm952 = vcmp.eq.f32.partialorder %v951, 8.507059e+37
      %v953 = vand.u32 %v848, 2147483648
      %v954 = vor.u32 1.1754944e-38, %v953
      %v955 = vsel %vm952, %v954, %v950
      %v956 = vmul.f32 %v811, %v955
      %v957 = vrcp.pop %v851
      %v958 = vmul.f32 %v851, %v957
      %v959 = vsub.f32 1.0, %v958
      %v960 = vmul.f32 %v957, %v959
      %v961 = vadd.f32 %v957, %v960
      %vm962 = vweird.f32 %v851
      %vm963 = vweird.f32 %v957
      %vm964 = vmor %vm962, %vm963
      %v965 = vsel %vm964, %v957, %v961
      %v966 = vand.u32 2147483647, %v851
      %vm967 = vcmp.eq.f32.partialorder %v966, 8.507059e+37
      %v968 = vand.u32 %v851, 2147483648
      %v969 = vor.u32 1.1754944e-38, %v968
      %v970 = vsel %vm967, %v969, %v965
      %v971 = vmul.f32 %v813, %v970
      %v972 = vrcp.pop %v854
      %v973 = vmul.f32 %v854, %v972
      %v974 = vsub.f32 1.0, %v973
      %v975 = vmul.f32 %v972, %v974
      %v976 = vadd.f32 %v972, %v975
      %vm977 = vweird.f32 %v854
      %vm978 = vweird.f32 %v972
      %vm979 = vmor %vm977, %vm978
      %v980 = vsel %vm979, %v972, %v976
      %v981 = vand.u32 2147483647, %v854
      %vm982 = vcmp.eq.f32.partialorder %v981, 8.507059e+37
      %v983 = vand.u32 %v854, 2147483648
      %v984 = vor.u32 1.1754944e-38, %v983
      %v985 = vsel %vm982, %v984, %v980
      %v986 = vmul.f32 %v815, %v985
      %v987 = vrcp.pop %v857
      %v988 = vmul.f32 %v857, %v987
      %v989 = vsub.f32 1.0, %v988
      %v990 = vmul.f32 %v987, %v989
      %v991 = vadd.f32 %v987, %v990
      %vm992 = vweird.f32 %v857
      %vm993 = vweird.f32 %v987
      %vm994 = vmor %vm992, %vm993
      %v995 = vsel %vm994, %v987, %v991
      %v996 = vand.u32 2147483647, %v857
      %vm997 = vcmp.eq.f32.partialorder %v996, 8.507059e+37
      %v998 = vand.u32 %v857, 2147483648
      %v999 = vor.u32 1.1754944e-38, %v998
      %v1000 = vsel %vm997, %v999, %v995
      %v1001 = vmul.f32 %v817, %v1000
      %v1002 = vrcp.pop %v860
      %v1003 = vmul.f32 %v860, %v1002
      %v1004 = vsub.f32 1.0, %v1003
      %v1005 = vmul.f32 %v1002, %v1004
      %v1006 = vadd.f32 %v1002, %v1005
      %vm1007 = vweird.f32 %v860
      %vm1008 = vweird.f32 %v1002
      %vm1009 = vmor %vm1007, %vm1008
      %v1010 = vsel %vm1009, %v1002, %v1006
      %v1011 = vand.u32 2147483647, %v860
      %vm1012 = vcmp.eq.f32.partialorder %v1011, 8.507059e+37
      %v1013 = vand.u32 %v860, 2147483648
      %v1014 = vor.u32 1.1754944e-38, %v1013
      %v1015 = vsel %vm1012, %v1014, %v1010
      %v1016 = vmul.f32 %v819, %v1015
      %v1017 = vrcp.pop %v863
      %v1018 = vmul.f32 %v863, %v1017
      %v1019 = vsub.f32 1.0, %v1018
      %v1020 = vmul.f32 %v1017, %v1019
      %v1021 = vadd.f32 %v1017, %v1020
      %vm1022 = vweird.f32 %v863
      %vm1023 = vweird.f32 %v1017
      %vm1024 = vmor %vm1022, %vm1023
      %v1025 = vsel %vm1024, %v1017, %v1021
      %v1026 = vand.u32 2147483647, %v863
      %vm1027 = vcmp.eq.f32.partialorder %v1026, 8.507059e+37
      %v1028 = vand.u32 %v863, 2147483648
      %v1029 = vor.u32 1.1754944e-38, %v1028
      %v1030 = vsel %vm1027, %v1029, %v1025
      %v1031 = vmul.f32 %v821, %v1030
      %v1032 = vrcp.pop %v866
      %v1033 = vmul.f32 %v866, %v1032
      %v1034 = vsub.f32 1.0, %v1033
      %v1035 = vmul.f32 %v1032, %v1034
      %v1036 = vadd.f32 %v1032, %v1035
      %vm1037 = vweird.f32 %v866
      %vm1038 = vweird.f32 %v1032
      %vm1039 = vmor %vm1037, %vm1038
      %v1040 = vsel %vm1039, %v1032, %v1036
      %v1041 = vand.u32 2147483647, %v866
      %vm1042 = vcmp.eq.f32.partialorder %v1041, 8.507059e+37
      %v1043 = vand.u32 %v866, 2147483648
      %v1044 = vor.u32 1.1754944e-38, %v1043
      %v1045 = vsel %vm1042, %v1044, %v1040
      %v1046 = vmul.f32 %v823, %v1045
      %v1047 = vrcp.pop %v869
      %v1048 = vmul.f32 %v869, %v1047
      %v1049 = vsub.f32 1.0, %v1048
      %v1050 = vmul.f32 %v1047, %v1049
      %v1051 = vadd.f32 %v1047, %v1050
      %vm1052 = vweird.f32 %v869
      %vm1053 = vweird.f32 %v1047
      %vm1054 = vmor %vm1052, %vm1053
      %v1055 = vsel %vm1054, %v1047, %v1051
      %v1056 = vand.u32 2147483647, %v869
      %vm1057 = vcmp.eq.f32.partialorder %v1056, 8.507059e+37
      %v1058 = vand.u32 %v869, 2147483648
      %v1059 = vor.u32 1.1754944e-38, %v1058
      %v1060 = vsel %vm1057, %v1059, %v1055
      %v1061 = vmul.f32 %v825, %v1060
      %v1062 = vrcp.pop %v872
      %v1063 = vmul.f32 %v872, %v1062
      %v1064 = vsub.f32 1.0, %v1063
      %v1065 = vmul.f32 %v1062, %v1064
      %v1066 = vadd.f32 %v1062, %v1065
      %vm1067 = vweird.f32 %v872
      %vm1068 = vweird.f32 %v1062
      %vm1069 = vmor %vm1067, %vm1068
      %v1070 = vsel %vm1069, %v1062, %v1066
      %v1071 = vand.u32 2147483647, %v872
      %vm1072 = vcmp.eq.f32.partialorder %v1071, 8.507059e+37
      %v1073 = vand.u32 %v872, 2147483648
      %v1074 = vor.u32 1.1754944e-38, %v1073
      %v1075 = vsel %vm1072, %v1074, %v1070
      %v1076 = vmul.f32 %v827, %v1075
      %v1077 = vrcp.pop %v875
      %v1078 = vmul.f32 %v875, %v1077
      %v1079 = vsub.f32 1.0, %v1078
      %v1080 = vmul.f32 %v1077, %v1079
      %v1081 = vadd.f32 %v1077, %v1080
      %vm1082 = vweird.f32 %v875
      %vm1083 = vweird.f32 %v1077
      %vm1084 = vmor %vm1082, %vm1083
      %v1085 = vsel %vm1084, %v1077, %v1081
      %v1086 = vand.u32 2147483647, %v875
      %vm1087 = vcmp.eq.f32.partialorder %v1086, 8.507059e+37
      %v1088 = vand.u32 %v875, 2147483648
      %v1089 = vor.u32 1.1754944e-38, %v1088
      %v1090 = vsel %vm1087, %v1089, %v1085
      %v1091 = vmul.f32 %v829, %v1090
      %v1092 = vrcp.pop %v878
      %v1093 = vmul.f32 %v878, %v1092
      %v1094 = vsub.f32 1.0, %v1093
      %v1095 = vmul.f32 %v1092, %v1094
      %v1096 = vadd.f32 %v1092, %v1095
      %vm1097 = vweird.f32 %v878
      %vm1098 = vweird.f32 %v1092
      %vm1099 = vmor %vm1097, %vm1098
      %v1100 = vsel %vm1099, %v1092, %v1096
      %v1101 = vand.u32 2147483647, %v878
      %vm1102 = vcmp.eq.f32.partialorder %v1101, 8.507059e+37
      %v1103 = vand.u32 %v878, 2147483648
      %v1104 = vor.u32 1.1754944e-38, %v1103
      %v1105 = vsel %vm1102, %v1104, %v1100
      %v1106 = vmul.f32 %v831, %v1105
      %v1107 = vrcp.pop %v881
      %v1108 = vmul.f32 %v881, %v1107
      %v1109 = vsub.f32 1.0, %v1108
      %v1110 = vmul.f32 %v1107, %v1109
      %v1111 = vadd.f32 %v1107, %v1110
      %vm1112 = vweird.f32 %v881
      %vm1113 = vweird.f32 %v1107
      %vm1114 = vmor %vm1112, %vm1113
      %v1115 = vsel %vm1114, %v1107, %v1111
      %v1116 = vand.u32 2147483647, %v881
      %vm1117 = vcmp.eq.f32.partialorder %v1116, 8.507059e+37
      %v1118 = vand.u32 %v881, 2147483648
      %v1119 = vor.u32 1.1754944e-38, %v1118
      %v1120 = vsel %vm1117, %v1119, %v1115
      %v1121 = vmul.f32 %v833, %v1120
      %1122 = vrot.lane.b32.xlu0 %v419, 64
      %v1123 = vpop.permute.xlu0 %1122
      %1124 = vrot.lane.b32.xlu0 %v422, 64
      %v1125 = vpop.permute.xlu0 %1124
      %1126 = vrot.lane.b32.xlu0 %v425, 64
      %v1127 = vpop.permute.xlu0 %1126
      %1128 = vrot.lane.b32.xlu0 %v428, 64
      %v1129 = vpop.permute.xlu0 %1128
      %v1135 = vsel %vm282, %v896, 0
      %v1138 = vsel %vm282, %v911, 0
      %v1141 = vsel %vm282, %v926, 0
      %v1144 = vsel %vm282, %v941, 0
      %1146 = vmatpush.msra.mxu0 0.0
      %1147 = vmatpush.msra.mxu0 0.0
      %1148 = vmatpush.msra.mxu0 0.0
      %1149 = vmatpush.msra.mxu0 0.0
      %1150 = vmatpush.msra.mxu0 0.0
      %1151 = vmatpush.msra.mxu0 0.0
      %1152 = vmatpush.msra.mxu0 0.0
      %1153 = vmatpush.msra.mxu0 0.0
      %1154 = vmatpush.msra.mxu0 0.0
      %1155 = vmatpush.msra.mxu0 0.0
      %1156 = vmatpush.msra.mxu0 0.0
      %1157 = vmatpush.msra.mxu0 0.0
      %1158 = vmatpush.msra.mxu0 %v1129
      %1159 = vmatpush.msra.mxu0 %v1127
      %1160 = vmatpush.msra.mxu0 %v1125
      %1161 = vmatpush.msra.mxu0 %v1123
      %1162 = vmatmul.f32.gmra.mxu0 %v1135
      %v1163 = vpop.f32.mrf.mxu0
      %v1164 = vadd.f32 0.0, %v1163
      %1165 = vmatmul.f32.gmra.mxu0 %v1138
      %v1166 = vpop.f32.mrf.mxu0
      %v1167 = vadd.f32 0.0, %v1166
      %1168 = vmatmul.f32.gmra.mxu0 %v1141
      %v1169 = vpop.f32.mrf.mxu0
      %v1170 = vadd.f32 0.0, %v1169
      %1171 = vmatmul.f32.gmra.mxu0 %v1144
      %v1172 = vpop.f32.mrf.mxu0
      %v1173 = vadd.f32 0.0, %v1172
      %1174 = vdwg.mxu0
      %1175 = vst.msk [vmem:[#allocation3] sm:$0xff] %vm442, %v1164
      %1176 = vst.msk [vmem:[#allocation3 + $0x8] sm:$0xff] %vm442, %v1167
      %1177 = vst.msk [vmem:[#allocation3 + $0x10] sm:$0xff] %vm442, %v1170
      %1178 = vst.msk [vmem:[#allocation3 + $0x18] sm:$0xff] %vm442, %v1173
      %1179 = vrot.lane.b32.xlu0 %v419, 56
      %v1180 = vpop.permute.xlu0 %1179
      %1181 = vrot.lane.b32.xlu0 %v422, 56
      %v1182 = vpop.permute.xlu0 %1181
      %1183 = vrot.lane.b32.xlu0 %v425, 56
      %v1184 = vpop.permute.xlu0 %1183
      %1185 = vrot.lane.b32.xlu0 %v428, 56
      %v1186 = vpop.permute.xlu0 %1185
      %v1192 = vsel %vm282, %v956, 0
      %v1195 = vsel %vm282, %v971, 0
      %v1198 = vsel %vm282, %v986, 0
      %v1201 = vsel %vm282, %v1001, 0
      %1203 = vmatpush.msra.mxu0 0.0
      %1204 = vmatpush.msra.mxu0 0.0
      %1205 = vmatpush.msra.mxu0 0.0
      %1206 = vmatpush.msra.mxu0 0.0
      %1207 = vmatpush.msra.mxu0 0.0
      %1208 = vmatpush.msra.mxu0 0.0
      %1209 = vmatpush.msra.mxu0 0.0
      %1210 = vmatpush.msra.mxu0 0.0
      %1211 = vmatpush.msra.mxu0 0.0
      %1212 = vmatpush.msra.mxu0 0.0
      %1213 = vmatpush.msra.mxu0 0.0
      %1214 = vmatpush.msra.mxu0 0.0
      %1215 = vmatpush.msra.mxu0 %v1186
      %1216 = vmatpush.msra.mxu0 %v1184
      %1217 = vmatpush.msra.mxu0 %v1182
      %1218 = vmatpush.msra.mxu0 %v1180
      %1219 = vmatmul.f32.gmra.mxu0 %v1192
      %v1220 = vpop.f32.mrf.mxu0
      %v1221 = vadd.f32 0.0, %v1220
      %1222 = vmatmul.f32.gmra.mxu0 %v1195
      %v1223 = vpop.f32.mrf.mxu0
      %v1224 = vadd.f32 0.0, %v1223
      %1225 = vmatmul.f32.gmra.mxu0 %v1198
      %v1226 = vpop.f32.mrf.mxu0
      %v1227 = vadd.f32 0.0, %v1226
      %1228 = vmatmul.f32.gmra.mxu0 %v1201
      %v1229 = vpop.f32.mrf.mxu0
      %v1230 = vadd.f32 0.0, %v1229
      %1231 = vdwg.mxu0
      %1236 = vrot.lane.b32.xlu0 %v1221, 8
      %v1237 = vpop.permute.xlu0 %1236
      %1238 = vrot.lane.b32.xlu0 %v1224, 8
      %v1239 = vpop.permute.xlu0 %1238
      %1240 = vrot.lane.b32.xlu0 %v1227, 8
      %v1241 = vpop.permute.xlu0 %1240
      %1242 = vrot.lane.b32.xlu0 %v1230, 8
      %v1243 = vpop.permute.xlu0 %1242
      %vm1248 = vcmask 130112
      %1249 = vst.msk [vmem:[#allocation3] sm:$0xff] %vm1248, %v1237
      %1250 = vst.msk [vmem:[#allocation3 + $0x8] sm:$0xff] %vm1248, %v1239
      %1251 = vst.msk [vmem:[#allocation3 + $0x10] sm:$0xff] %vm1248, %v1241
      %1252 = vst.msk [vmem:[#allocation3 + $0x18] sm:$0xff] %vm1248, %v1243
      %1253 = vrot.lane.b32.xlu0 %v419, 48
      %v1254 = vpop.permute.xlu0 %1253
      %1255 = vrot.lane.b32.xlu0 %v422, 48
      %v1256 = vpop.permute.xlu0 %1255
      %1257 = vrot.lane.b32.xlu0 %v425, 48
      %v1258 = vpop.permute.xlu0 %1257
      %1259 = vrot.lane.b32.xlu0 %v428, 48
      %v1260 = vpop.permute.xlu0 %1259
      %v1266 = vsel %vm282, %v1016, 0
      %v1269 = vsel %vm282, %v1031, 0
      %v1272 = vsel %vm282, %v1046, 0
      %v1275 = vsel %vm282, %v1061, 0
      %1277 = vmatpush.msra.mxu0 0.0
      %1278 = vmatpush.msra.mxu0 0.0
      %1279 = vmatpush.msra.mxu0 0.0
      %1280 = vmatpush.msra.mxu0 0.0
      %1281 = vmatpush.msra.mxu0 0.0
      %1282 = vmatpush.msra.mxu0 0.0
      %1283 = vmatpush.msra.mxu0 0.0
      %1284 = vmatpush.msra.mxu0 0.0
      %1285 = vmatpush.msra.mxu0 0.0
      %1286 = vmatpush.msra.mxu0 0.0
      %1287 = vmatpush.msra.mxu0 0.0
      %1288 = vmatpush.msra.mxu0 0.0
      %1289 = vmatpush.msra.mxu0 %v1260
      %1290 = vmatpush.msra.mxu0 %v1258
      %1291 = vmatpush.msra.mxu0 %v1256
      %1292 = vmatpush.msra.mxu0 %v1254
      %1293 = vmatmul.f32.gmra.mxu0 %v1266
      %v1294 = vpop.f32.mrf.mxu0
      %v1295 = vadd.f32 0.0, %v1294
      %1296 = vmatmul.f32.gmra.mxu0 %v1269
      %v1297 = vpop.f32.mrf.mxu0
      %v1298 = vadd.f32 0.0, %v1297
      %1299 = vmatmul.f32.gmra.mxu0 %v1272
      %v1300 = vpop.f32.mrf.mxu0
      %v1301 = vadd.f32 0.0, %v1300
      %1302 = vmatmul.f32.gmra.mxu0 %v1275
      %v1303 = vpop.f32.mrf.mxu0
      %v1304 = vadd.f32 0.0, %v1303
      %1305 = vdwg.mxu0
      %1310 = vrot.lane.b32.xlu0 %v1295, 16
      %v1311 = vpop.permute.xlu0 %1310
      %1312 = vrot.lane.b32.xlu0 %v1298, 16
      %v1313 = vpop.permute.xlu0 %1312
      %1314 = vrot.lane.b32.xlu0 %v1301, 16
      %v1315 = vpop.permute.xlu0 %1314
      %1316 = vrot.lane.b32.xlu0 %v1304, 16
      %v1317 = vpop.permute.xlu0 %1316
      %vm1322 = vcmask 195712
      %1323 = vst.msk [vmem:[#allocation3] sm:$0xff] %vm1322, %v1311
      %1324 = vst.msk [vmem:[#allocation3 + $0x8] sm:$0xff] %vm1322, %v1313
      %1325 = vst.msk [vmem:[#allocation3 + $0x10] sm:$0xff] %vm1322, %v1315
      %1326 = vst.msk [vmem:[#allocation3 + $0x18] sm:$0xff] %vm1322, %v1317
      %1327 = vrot.lane.b32.xlu0 %v419, 40
      %v1328 = vpop.permute.xlu0 %1327
      %1329 = vrot.lane.b32.xlu0 %v422, 40
      %v1330 = vpop.permute.xlu0 %1329
      %1331 = vrot.lane.b32.xlu0 %v425, 40
      %v1332 = vpop.permute.xlu0 %1331
      %1333 = vrot.lane.b32.xlu0 %v428, 40
      %v1334 = vpop.permute.xlu0 %1333
      %v1340 = vsel %vm282, %v1076, 0
      %v1343 = vsel %vm282, %v1091, 0
      %v1346 = vsel %vm282, %v1106, 0
      %v1349 = vsel %vm282, %v1121, 0
      %1351 = vmatpush.msra.mxu0 0.0
      %1352 = vmatpush.msra.mxu0 0.0
      %1353 = vmatpush.msra.mxu0 0.0
      %1354 = vmatpush.msra.mxu0 0.0
      %1355 = vmatpush.msra.mxu0 0.0
      %1356 = vmatpush.msra.mxu0 0.0
      %1357 = vmatpush.msra.mxu0 0.0
      %1358 = vmatpush.msra.mxu0 0.0
      %1359 = vmatpush.msra.mxu0 0.0
      %1360 = vmatpush.msra.mxu0 0.0
      %1361 = vmatpush.msra.mxu0 0.0
      %1362 = vmatpush.msra.mxu0 0.0
      %1363 = vmatpush.msra.mxu0 %v1334
      %1364 = vmatpush.msra.mxu0 %v1332
      %1365 = vmatpush.msra.mxu0 %v1330
      %1366 = vmatpush.msra.mxu0 %v1328
      %1367 = vmatmul.f32.gmra.mxu0 %v1340
      %v1368 = vpop.f32.mrf.mxu0
      %v1369 = vadd.f32 0.0, %v1368
      %1370 = vmatmul.f32.gmra.mxu0 %v1343
      %v1371 = vpop.f32.mrf.mxu0
      %v1372 = vadd.f32 0.0, %v1371
      %1373 = vmatmul.f32.gmra.mxu0 %v1346
      %v1374 = vpop.f32.mrf.mxu0
      %v1375 = vadd.f32 0.0, %v1374
      %1376 = vmatmul.f32.gmra.mxu0 %v1349
      %v1377 = vpop.f32.mrf.mxu0
      %v1378 = vadd.f32 0.0, %v1377
      %1379 = vdwg.mxu0
      %1384 = vrot.lane.b32.xlu0 %v1369, 24
      %v1385 = vpop.permute.xlu0 %1384
      %1386 = vrot.lane.b32.xlu0 %v1372, 24
      %v1387 = vpop.permute.xlu0 %1386
      %1388 = vrot.lane.b32.xlu0 %v1375, 24
      %v1389 = vpop.permute.xlu0 %1388
      %1390 = vrot.lane.b32.xlu0 %v1378, 24
      %v1391 = vpop.permute.xlu0 %1390
      %vm1396 = vcmask 261312
      %1397 = vst.msk [vmem:[#allocation3] sm:$0xff] %vm1396, %v1385
      %1398 = vst.msk [vmem:[#allocation3 + $0x8] sm:$0xff] %vm1396, %v1387
      %1399 = vst.msk [vmem:[#allocation3 + $0x10] sm:$0xff] %vm1396, %v1389
      %1400 = vst.msk [vmem:[#allocation3 + $0x18] sm:$0xff] %vm1396, %v1391
      %v1401 = vld [vmem:[#allocation3] sm:$0xff]
      %v1402 = vld [vmem:[#allocation3 + $0x8] sm:$0xff]
      %v1403 = vld [vmem:[#allocation3 + $0x10] sm:$0xff]
      %v1404 = vld [vmem:[#allocation3 + $0x18] sm:$0xff]
      %1409 = vrot.lane.b32.xlu0 %v257, 32
      %v1410 = vpop.permute.xlu0 %1409
      %1411 = vrot.lane.b32.xlu0 %v259, 32
      %v1412 = vpop.permute.xlu0 %1411
      %1413 = vrot.lane.b32.xlu0 %v261, 32
      %v1414 = vpop.permute.xlu0 %1413
      %1415 = vrot.lane.b32.xlu0 %v263, 32
      %v1416 = vpop.permute.xlu0 %1415
      %v1422 = vsel %vm282, %v1401, 0
      %v1425 = vsel %vm282, %v1402, 0
      %v1428 = vsel %vm282, %v1403, 0
      %v1431 = vsel %vm282, %v1404, 0
      %1433 = vmatpush.msra.mxu0 0.0
      %1434 = vmatpush.msra.mxu0 0.0
      %1435 = vmatpush.msra.mxu0 0.0
      %1436 = vmatpush.msra.mxu0 0.0
      %1437 = vmatpush.msra.mxu0 0.0
      %1438 = vmatpush.msra.mxu0 0.0
      %1439 = vmatpush.msra.mxu0 0.0
      %1440 = vmatpush.msra.mxu0 0.0
      %1441 = vmatpush.msra.mxu0 0.0
      %1442 = vmatpush.msra.mxu0 0.0
      %1443 = vmatpush.msra.mxu0 0.0
      %1444 = vmatpush.msra.mxu0 0.0
      %1445 = vmatpush.msra.mxu0 %v1416
      %1446 = vmatpush.msra.mxu0 %v1414
      %1447 = vmatpush.msra.mxu0 %v1412
      %1448 = vmatpush.msra.mxu0 %v1410
      %1449 = vmatmul.f32.gmra.mxu0 %v1422
      %v1450 = vpop.f32.mrf.mxu0
      %v1451 = vadd.f32 0.0, %v1450
      %1452 = vmatmul.f32.gmra.mxu0 %v1425
      %v1453 = vpop.f32.mrf.mxu0
      %v1454 = vadd.f32 0.0, %v1453
      %1455 = vmatmul.f32.gmra.mxu0 %v1428
      %v1456 = vpop.f32.mrf.mxu0
      %v1457 = vadd.f32 0.0, %v1456
      %1458 = vmatmul.f32.gmra.mxu0 %v1431
      %v1459 = vpop.f32.mrf.mxu0
      %v1460 = vadd.f32 0.0, %v1459
      %1461 = vdwg.mxu0
      %v1462 = vadd.f32 %v252, %v1451
      %v1463 = vadd.f32 %v253, %v1454
      %v1464 = vadd.f32 %v254, %v1457
      %v1465 = vadd.f32 %v255, %v1460
      %v1466 = vperm.slane %v281, 3
      %v1467 = vadd.f32 %v1462, %v1466
      %v1468 = vadd.f32 %v1463, %v1466
      %v1469 = vadd.f32 %v1464, %v1466
      %v1470 = vadd.f32 %v1465, %v1466
      %v1471 = vsel %vm282, %v1467, 0.0
      %1472 = vadd.xlane.f32.xlu0 %v1471
      %v1473 = vpop.xlane.xlu0 %1472
      %v1474 = vsel %vm282, %v1468, 0.0
      %1475 = vadd.xlane.f32.xlu0 %v1474
      %v1476 = vpop.xlane.xlu0 %1475
      %v1477 = vsel %vm282, %v1469, 0.0
      %1478 = vadd.xlane.f32.xlu0 %v1477
      %v1479 = vpop.xlane.xlu0 %1478
      %v1480 = vsel %vm282, %v1470, 0.0
      %1481 = vadd.xlane.f32.xlu0 %v1480
      %v1482 = vpop.xlane.xlu0 %1481
      %v1483 = vmul.f32 %v1473, %v301
      %v1484 = vmul.f32 %v1476, %v301
      %v1485 = vmul.f32 %v1479, %v301
      %v1486 = vmul.f32 %v1482, %v301
      %v1487 = vsub.f32 %v1467, %v1483
      %v1488 = vsub.f32 %v1468, %v1484
      %v1489 = vsub.f32 %v1469, %v1485
      %v1490 = vsub.f32 %v1470, %v1486
      %v1491 = vmul.f32 %v1487, %v1487
      %v1492 = vmul.f32 %v1488, %v1488
      %v1493 = vmul.f32 %v1489, %v1489
      %v1494 = vmul.f32 %v1490, %v1490
      %v1495 = vsel %vm282, %v1491, 0.0
      %1496 = vadd.xlane.f32.xlu0 %v1495
      %v1497 = vpop.xlane.xlu0 %1496
      %v1498 = vsel %vm282, %v1492, 0.0
      %1499 = vadd.xlane.f32.xlu0 %v1498
      %v1500 = vpop.xlane.xlu0 %1499
      %v1501 = vsel %vm282, %v1493, 0.0
      %1502 = vadd.xlane.f32.xlu0 %v1501
      %v1503 = vpop.xlane.xlu0 %1502
      %v1504 = vsel %vm282, %v1494, 0.0
      %1505 = vadd.xlane.f32.xlu0 %v1504
      %v1506 = vpop.xlane.xlu0 %1505
      %v1507 = vmul.f32 %v1497, %v301
      %v1508 = vmul.f32 %v1500, %v301
      %v1509 = vmul.f32 %v1503, %v301
      %v1510 = vmul.f32 %v1506, %v301
      %v1511 = vadd.f32 %v1507, 1e-05
      %v1512 = vadd.f32 %v1508, 1e-05
      %v1513 = vadd.f32 %v1509, 1e-05
      %v1514 = vadd.f32 %v1510, 1e-05
      %v1515 = vrsqrt.pop %v1511
      %v1516 = vmul.f32 %v1515, %v1511
      %v1517 = vmul.f32 %v1516, %v1515
      %v1518 = vmul.f32 0.5, %v1517
      %v1519 = vsub.f32 1.5, %v1518
      %v1520 = vmul.f32 %v1515, %v1519
      %vm1521 = vweird.f32 %v1511
      %vm1522 = vweird.f32 %v1515
      %vm1523 = vmor %vm1521, %vm1522
      %v1524 = vsel %vm1523, %v1515, %v1520
      %v1525 = vrsqrt.pop %v1512
      %v1526 = vmul.f32 %v1525, %v1512
      %v1527 = vmul.f32 %v1526, %v1525
      %v1528 = vmul.f32 0.5, %v1527
      %v1529 = vsub.f32 1.5, %v1528
      %v1530 = vmul.f32 %v1525, %v1529
      %vm1531 = vweird.f32 %v1512
      %vm1532 = vweird.f32 %v1525
      %vm1533 = vmor %vm1531, %vm1532
      %v1534 = vsel %vm1533, %v1525, %v1530
      %v1535 = vrsqrt.pop %v1513
      %v1536 = vmul.f32 %v1535, %v1513
      %v1537 = vmul.f32 %v1536, %v1535
      %v1538 = vmul.f32 0.5, %v1537
      %v1539 = vsub.f32 1.5, %v1538
      %v1540 = vmul.f32 %v1535, %v1539
      %vm1541 = vweird.f32 %v1513
      %vm1542 = vweird.f32 %v1535
      %vm1543 = vmor %vm1541, %vm1542
      %v1544 = vsel %vm1543, %v1535, %v1540
      %v1545 = vrsqrt.pop %v1514
      %v1546 = vmul.f32 %v1545, %v1514
      %v1547 = vmul.f32 %v1546, %v1545
      %v1548 = vmul.f32 0.5, %v1547
      %v1549 = vsub.f32 1.5, %v1548
      %v1550 = vmul.f32 %v1545, %v1549
      %vm1551 = vweird.f32 %v1514
      %vm1552 = vweird.f32 %v1545
      %vm1553 = vmor %vm1551, %vm1552
      %v1554 = vsel %vm1553, %v1545, %v1550
      %v1555 = vmul.f32 %v1487, %v1524
      %v1556 = vmul.f32 %v1488, %v1534
      %v1557 = vmul.f32 %v1489, %v1544
      %v1558 = vmul.f32 %v1490, %v1554
      %v1559 = vperm.slane %v281, 4
      %v1560 = vmul.f32 %v1555, %v1559
      %v1561 = vmul.f32 %v1556, %v1559
      %v1562 = vmul.f32 %v1557, %v1559
      %v1563 = vmul.f32 %v1558, %v1559
      %v1564 = vperm.slane %v281, 5
      %v1565 = vadd.f32 %v1560, %v1564
      %v1566 = vadd.f32 %v1561, %v1564
      %v1567 = vadd.f32 %v1562, %v1564
      %v1568 = vadd.f32 %v1563, %v1564
      %v1569 = vperm.slane %v281, 6
      %v1571 = vsel %vm282, %v1565, 0
      %v1574 = vsel %vm282, %v1566, 0
      %v1577 = vsel %vm282, %v1567, 0
      %v1580 = vsel %vm282, %v1568, 0
      %1582 = vmatpush.msra.mxu0 0.0
      %1583 = vmatpush.msra.mxu0 0.0
      %1584 = vmatpush.msra.mxu0 0.0
      %1585 = vmatpush.msra.mxu0 0.0
      %1586 = vmatpush.msra.mxu0 0.0
      %1587 = vmatpush.msra.mxu0 0.0
      %1588 = vmatpush.msra.mxu0 0.0
      %1589 = vmatpush.msra.mxu0 0.0
      %1590 = vmatpush.msra.mxu0 0.0
      %1591 = vmatpush.msra.mxu0 0.0
      %1592 = vmatpush.msra.mxu0 0.0
      %1593 = vmatpush.msra.mxu0 0.0
      %1594 = vmatpush.msra.mxu0 %v264
      %1595 = vmatpush.msra.mxu0 %v262
      %1596 = vmatpush.msra.mxu0 %v260
      %1597 = vmatpush.msra.mxu0 %v258
      %1598 = vmatmul.f32.gmra.mxu0 %v1571
      %v1599 = vpop.f32.mrf.mxu0
      %v1600 = vadd.f32 %v1569, %v1599
      %1601 = vmatmul.f32.gmra.mxu0 %v1574
      %v1602 = vpop.f32.mrf.mxu0
      %v1603 = vadd.f32 %v1569, %v1602
      %1604 = vmatmul.f32.gmra.mxu0 %v1577
      %v1605 = vpop.f32.mrf.mxu0
      %v1606 = vadd.f32 %v1569, %v1605
      %1607 = vmatmul.f32.gmra.mxu0 %v1580
      %v1608 = vpop.f32.mrf.mxu0
      %v1609 = vadd.f32 %v1569, %v1608
      %1610 = vdwg.mxu0
      %v1611 = vmul.f32 %v1600, 0.5
      %v1612 = vmul.f32 %v1603, 0.5
      %v1613 = vmul.f32 %v1606, 0.5
      %v1614 = vmul.f32 %v1609, 0.5
      %v1615 = vmul.f32 %v1600, 0.70710677
      %v1616 = vmul.f32 %v1603, 0.70710677
      %v1617 = vmul.f32 %v1606, 0.70710677
      %v1618 = vmul.f32 %v1609, 0.70710677
      %v1619 = vmul.f32 %v1615, %v1615
      %v1620 = vmin.f32 16.0, %v1619
      %v1621 = vmul.f32 %v1620, 2.1237322e-06
      %v1622 = vadd.f32 %v1621, 0.00028619796
      %v1623 = vmul.f32 %v1620, %v1622
      %v1624 = vadd.f32 %v1623, 0.0036580483
      %v1625 = vmul.f32 %v1620, %v1624
      %v1626 = vadd.f32 %v1625, 0.05243302
      %v1627 = vmul.f32 %v1620, %v1626
      %v1628 = vadd.f32 %v1627, 0.18741608
      %v1629 = vmul.f32 %v1620, %v1628
      %v1630 = vadd.f32 %v1629, 1.1283791
      %v1631 = vmul.f32 %v1615, %v1630
      %v1632 = vmul.f32 %v1620, 3.8918573e-05
      %v1633 = vadd.f32 %v1632, 0.001143296
      %v1634 = vmul.f32 %v1620, %v1633
      %v1635 = vadd.f32 %v1634, 0.014752088
      %v1636 = vmul.f32 %v1620, %v1635
      %v1637 = vadd.f32 %v1636, 0.112945676
      %v1638 = vmul.f32 %v1620, %v1637
      %v1639 = vadd.f32 %v1638, 0.4994258
      %v1640 = vmul.f32 %v1620, %v1639
      %v1641 = vadd.f32 %v1640, 1.0
      %v1642 = vrcp.pop %v1641
      %v1643 = vmul.f32 %v1641, %v1642
      %v1644 = vsub.f32 1.0, %v1643
      %v1645 = vmul.f32 %v1642, %v1644
      %v1646 = vadd.f32 %v1642, %v1645
      %vm1647 = vweird.f32 %v1641
      %vm1648 = vweird.f32 %v1642
      %vm1649 = vmor %vm1647, %vm1648
      %v1650 = vsel %vm1649, %v1642, %v1646
      %v1651 = vand.u32 2147483647, %v1641
      %vm1652 = vcmp.eq.f32.partialorder %v1651, 8.507059e+37
      %v1653 = vand.u32 %v1641, 2147483648
      %v1654 = vor.u32 1.1754944e-38, %v1653
      %v1655 = vsel %vm1652, %v1654, %v1650
      %v1656 = vmul.f32 %v1631, %v1655
      %v1657 = vmin.f32 %v1656, 1.0
      %v1658 = vmax.f32 %v1657, -1.0
      %v1659 = vmul.f32 %v1616, %v1616
      %v1660 = vmin.f32 16.0, %v1659
      %v1661 = vmul.f32 %v1660, 2.1237322e-06
      %v1662 = vadd.f32 %v1661, 0.00028619796
      %v1663 = vmul.f32 %v1660, %v1662
      %v1664 = vadd.f32 %v1663, 0.0036580483
      %v1665 = vmul.f32 %v1660, %v1664
      %v1666 = vadd.f32 %v1665, 0.05243302
      %v1667 = vmul.f32 %v1660, %v1666
      %v1668 = vadd.f32 %v1667, 0.18741608
      %v1669 = vmul.f32 %v1660, %v1668
      %v1670 = vadd.f32 %v1669, 1.1283791
      %v1671 = vmul.f32 %v1616, %v1670
      %v1672 = vmul.f32 %v1660, 3.8918573e-05
      %v1673 = vadd.f32 %v1672, 0.001143296
      %v1674 = vmul.f32 %v1660, %v1673
      %v1675 = vadd.f32 %v1674, 0.014752088
      %v1676 = vmul.f32 %v1660, %v1675
      %v1677 = vadd.f32 %v1676, 0.112945676
      %v1678 = vmul.f32 %v1660, %v1677
      %v1679 = vadd.f32 %v1678, 0.4994258
      %v1680 = vmul.f32 %v1660, %v1679
      %v1681 = vadd.f32 %v1680, 1.0
      %v1682 = vrcp.pop %v1681
      %v1683 = vmul.f32 %v1681, %v1682
      %v1684 = vsub.f32 1.0, %v1683
      %v1685 = vmul.f32 %v1682, %v1684
      %v1686 = vadd.f32 %v1682, %v1685
      %vm1687 = vweird.f32 %v1681
      %vm1688 = vweird.f32 %v1682
      %vm1689 = vmor %vm1687, %vm1688
      %v1690 = vsel %vm1689, %v1682, %v1686
      %v1691 = vand.u32 2147483647, %v1681
      %vm1692 = vcmp.eq.f32.partialorder %v1691, 8.507059e+37
      %v1693 = vand.u32 %v1681, 2147483648
      %v1694 = vor.u32 1.1754944e-38, %v1693
      %v1695 = vsel %vm1692, %v1694, %v1690
      %v1696 = vmul.f32 %v1671, %v1695
      %v1697 = vmin.f32 %v1696, 1.0
      %v1698 = vmax.f32 %v1697, -1.0
      %v1699 = vmul.f32 %v1617, %v1617
      %v1700 = vmin.f32 16.0, %v1699
      %v1701 = vmul.f32 %v1700, 2.1237322e-06
      %v1702 = vadd.f32 %v1701, 0.00028619796
      %v1703 = vmul.f32 %v1700, %v1702
      %v1704 = vadd.f32 %v1703, 0.0036580483
      %v1705 = vmul.f32 %v1700, %v1704
      %v1706 = vadd.f32 %v1705, 0.05243302
      %v1707 = vmul.f32 %v1700, %v1706
      %v1708 = vadd.f32 %v1707, 0.18741608
      %v1709 = vmul.f32 %v1700, %v1708
      %v1710 = vadd.f32 %v1709, 1.1283791
      %v1711 = vmul.f32 %v1617, %v1710
      %v1712 = vmul.f32 %v1700, 3.8918573e-05
      %v1713 = vadd.f32 %v1712, 0.001143296
      %v1714 = vmul.f32 %v1700, %v1713
      %v1715 = vadd.f32 %v1714, 0.014752088
      %v1716 = vmul.f32 %v1700, %v1715
      %v1717 = vadd.f32 %v1716, 0.112945676
      %v1718 = vmul.f32 %v1700, %v1717
      %v1719 = vadd.f32 %v1718, 0.4994258
      %v1720 = vmul.f32 %v1700, %v1719
      %v1721 = vadd.f32 %v1720, 1.0
      %v1722 = vrcp.pop %v1721
      %v1723 = vmul.f32 %v1721, %v1722
      %v1724 = vsub.f32 1.0, %v1723
      %v1725 = vmul.f32 %v1722, %v1724
      %v1726 = vadd.f32 %v1722, %v1725
      %vm1727 = vweird.f32 %v1721
      %vm1728 = vweird.f32 %v1722
      %vm1729 = vmor %vm1727, %vm1728
      %v1730 = vsel %vm1729, %v1722, %v1726
      %v1731 = vand.u32 2147483647, %v1721
      %vm1732 = vcmp.eq.f32.partialorder %v1731, 8.507059e+37
      %v1733 = vand.u32 %v1721, 2147483648
      %v1734 = vor.u32 1.1754944e-38, %v1733
      %v1735 = vsel %vm1732, %v1734, %v1730
      %v1736 = vmul.f32 %v1711, %v1735
      %v1737 = vmin.f32 %v1736, 1.0
      %v1738 = vmax.f32 %v1737, -1.0
      %v1739 = vmul.f32 %v1618, %v1618
      %v1740 = vmin.f32 16.0, %v1739
      %v1741 = vmul.f32 %v1740, 2.1237322e-06
      %v1742 = vadd.f32 %v1741, 0.00028619796
      %v1743 = vmul.f32 %v1740, %v1742
      %v1744 = vadd.f32 %v1743, 0.0036580483
      %v1745 = vmul.f32 %v1740, %v1744
      %v1746 = vadd.f32 %v1745, 0.05243302
      %v1747 = vmul.f32 %v1740, %v1746
      %v1748 = vadd.f32 %v1747, 0.18741608
      %v1749 = vmul.f32 %v1740, %v1748
      %v1750 = vadd.f32 %v1749, 1.1283791
      %v1751 = vmul.f32 %v1618, %v1750
      %v1752 = vmul.f32 %v1740, 3.8918573e-05
      %v1753 = vadd.f32 %v1752, 0.001143296
      %v1754 = vmul.f32 %v1740, %v1753
      %v1755 = vadd.f32 %v1754, 0.014752088
      %v1756 = vmul.f32 %v1740, %v1755
      %v1757 = vadd.f32 %v1756, 0.112945676
      %v1758 = vmul.f32 %v1740, %v1757
      %v1759 = vadd.f32 %v1758, 0.4994258
      %v1760 = vmul.f32 %v1740, %v1759
      %v1761 = vadd.f32 %v1760, 1.0
      %v1762 = vrcp.pop %v1761
      %v1763 = vmul.f32 %v1761, %v1762
      %v1764 = vsub.f32 1.0, %v1763
      %v1765 = vmul.f32 %v1762, %v1764
      %v1766 = vadd.f32 %v1762, %v1765
      %vm1767 = vweird.f32 %v1761
      %vm1768 = vweird.f32 %v1762
      %vm1769 = vmor %vm1767, %vm1768
      %v1770 = vsel %vm1769, %v1762, %v1766
      %v1771 = vand.u32 2147483647, %v1761
      %vm1772 = vcmp.eq.f32.partialorder %v1771, 8.507059e+37
      %v1773 = vand.u32 %v1761, 2147483648
      %v1774 = vor.u32 1.1754944e-38, %v1773
      %v1775 = vsel %vm1772, %v1774, %v1770
      %v1776 = vmul.f32 %v1751, %v1775
      %v1777 = vmin.f32 %v1776, 1.0
      %v1778 = vmax.f32 %v1777, -1.0
      %v1779 = vadd.f32 %v1658, 1.0
      %v1780 = vadd.f32 %v1698, 1.0
      %v1781 = vadd.f32 %v1738, 1.0
      %v1782 = vadd.f32 %v1778, 1.0
      %v1783 = vmul.f32 %v1611, %v1779
      %v1784 = vmul.f32 %v1612, %v1780
      %v1785 = vmul.f32 %v1613, %v1781
      %v1786 = vmul.f32 %v1614, %v1782
      %1787 = vmatpush.msra.mxu0 %v280
      %1788 = vmatpush.msra.mxu0 %v279
      %1789 = vmatpush.msra.mxu0 %v278
      %1790 = vmatpush.msra.mxu0 %v277
      %1791 = vmatpush.msra.mxu0 %v276
      %1792 = vmatpush.msra.mxu0 %v275
      %1793 = vmatpush.msra.mxu0 %v274
      %1794 = vmatpush.msra.mxu0 %v273
      %1795 = vmatpush.msra.mxu0 %v272
      %1796 = vmatpush.msra.mxu0 %v271
      %1797 = vmatpush.msra.mxu0 %v270
      %1798 = vmatpush.msra.mxu0 %v269
      %1799 = vmatpush.msra.mxu0 %v268
      %1800 = vmatpush.msra.mxu0 %v267
      %1801 = vmatpush.msra.mxu0 %v266
      %1802 = vmatpush.msra.mxu0 %v265
      %1803 = vmatmul.f32.gmra.mxu0 %v1783
      %v1804 = vpop.f32.mrf.mxu0
      %v1805 = vadd.f32 0.0, %v1804
      %1806 = vmatmul.f32.gmra.mxu0 %v1784
      %v1807 = vpop.f32.mrf.mxu0
      %v1808 = vadd.f32 0.0, %v1807
      %1809 = vmatmul.f32.gmra.mxu0 %v1785
      %v1810 = vpop.f32.mrf.mxu0
      %v1811 = vadd.f32 0.0, %v1810
      %1812 = vmatmul.f32.gmra.mxu0 %v1786
      %v1813 = vpop.f32.mrf.mxu0
      %v1814 = vadd.f32 0.0, %v1813
      %1815 = vdwg.mxu0
      %v1816 = vadd.f32 %v1467, %v1805
      %v1817 = vadd.f32 %v1468, %v1808
      %v1818 = vadd.f32 %v1469, %v1811
      %v1819 = vadd.f32 %v1470, %v1814
      %v1820 = vperm.slane %v281, 7
      %v1821 = vadd.f32 %v1816, %v1820
      %v1822 = vadd.f32 %v1817, %v1820
      %v1823 = vadd.f32 %v1818, %v1820
      %v1824 = vadd.f32 %v1819, %v1820
      %s1825 = scalar_lea.vmem %s2, 64
      %v1826 = vld [vmem:[%s1825] sm:$0xff]
      %v1827 = vld [vmem:[%s1825 + $0x8] sm:$0xff]
      %v1828 = vld [vmem:[%s1825 + $0x10] sm:$0xff]
      %v1829 = vld [vmem:[%s1825 + $0x18] sm:$0xff]
      %v1830 = vld [vmem:[%s1825 + $0x20] sm:$0xff]
      %v1831 = vld [vmem:[%s1825 + $0x28] sm:$0xff]
      %v1832 = vld [vmem:[%s1825 + $0x30] sm:$0xff]
      %v1833 = vld [vmem:[%s1825 + $0x38] sm:$0xff]
      %s1834 = scalar_lea.vmem %s3, 128
      %v1835 = vld [vmem:[%s1834] sm:$0xff]
      %v1836 = vld [vmem:[%s1834 + $0x8] sm:$0xff]
      %v1837 = vld [vmem:[%s1834 + $0x10] sm:$0xff]
      %v1838 = vld [vmem:[%s1834 + $0x18] sm:$0xff]
      %v1839 = vld [vmem:[%s1834 + $0x20] sm:$0xff]
      %v1840 = vld [vmem:[%s1834 + $0x28] sm:$0xff]
      %v1841 = vld [vmem:[%s1834 + $0x30] sm:$0xff]
      %v1842 = vld [vmem:[%s1834 + $0x38] sm:$0xff]
      %v1843 = vld [vmem:[%s1834 + $0x40] sm:$0xff]
      %v1844 = vld [vmem:[%s1834 + $0x48] sm:$0xff]
      %v1845 = vld [vmem:[%s1834 + $0x50] sm:$0xff]
      %v1846 = vld [vmem:[%s1834 + $0x58] sm:$0xff]
      %v1847 = vld [vmem:[%s1834 + $0x60] sm:$0xff]
      %v1848 = vld [vmem:[%s1834 + $0x68] sm:$0xff]
      %v1849 = vld [vmem:[%s1834 + $0x70] sm:$0xff]
      %v1850 = vld [vmem:[%s1834 + $0x78] sm:$0xff]
      %s1851 = scalar_lea.vmem %s4, 8
      %v1852 = vld [vmem:[%s1851] sm:$0xff]
      %v1853 = vsel %vm282, %v1821, 0.0
      %1854 = vadd.xlane.f32.xlu0 %v1853
      %v1855 = vpop.xlane.xlu0 %1854
      %v1856 = vsel %vm282, %v1822, 0.0
      %1857 = vadd.xlane.f32.xlu0 %v1856
      %v1858 = vpop.xlane.xlu0 %1857
      %v1859 = vsel %vm282, %v1823, 0.0
      %1860 = vadd.xlane.f32.xlu0 %v1859
      %v1861 = vpop.xlane.xlu0 %1860
      %v1862 = vsel %vm282, %v1824, 0.0
      %1863 = vadd.xlane.f32.xlu0 %v1862
      %v1864 = vpop.xlane.xlu0 %1863
      %v1865 = vmul.f32 %v1855, %v301
      %v1866 = vmul.f32 %v1858, %v301
      %v1867 = vmul.f32 %v1861, %v301
      %v1868 = vmul.f32 %v1864, %v301
      %v1869 = vsub.f32 %v1821, %v1865
      %v1870 = vsub.f32 %v1822, %v1866
      %v1871 = vsub.f32 %v1823, %v1867
      %v1872 = vsub.f32 %v1824, %v1868
      %v1873 = vmul.f32 %v1869, %v1869
      %v1874 = vmul.f32 %v1870, %v1870
      %v1875 = vmul.f32 %v1871, %v1871
      %v1876 = vmul.f32 %v1872, %v1872
      %v1877 = vsel %vm282, %v1873, 0.0
      %1878 = vadd.xlane.f32.xlu0 %v1877
      %v1879 = vpop.xlane.xlu0 %1878
      %v1880 = vsel %vm282, %v1874, 0.0
      %1881 = vadd.xlane.f32.xlu0 %v1880
      %v1882 = vpop.xlane.xlu0 %1881
      %v1883 = vsel %vm282, %v1875, 0.0
      %1884 = vadd.xlane.f32.xlu0 %v1883
      %v1885 = vpop.xlane.xlu0 %1884
      %v1886 = vsel %vm282, %v1876, 0.0
      %1887 = vadd.xlane.f32.xlu0 %v1886
      %v1888 = vpop.xlane.xlu0 %1887
      %v1889 = vmul.f32 %v1879, %v301
      %v1890 = vmul.f32 %v1882, %v301
      %v1891 = vmul.f32 %v1885, %v301
      %v1892 = vmul.f32 %v1888, %v301
      %v1893 = vadd.f32 %v1889, 1e-05
      %v1894 = vadd.f32 %v1890, 1e-05
      %v1895 = vadd.f32 %v1891, 1e-05
      %v1896 = vadd.f32 %v1892, 1e-05
      %v1897 = vrsqrt.pop %v1893
      %v1898 = vmul.f32 %v1897, %v1893
      %v1899 = vmul.f32 %v1898, %v1897
      %v1900 = vmul.f32 0.5, %v1899
      %v1901 = vsub.f32 1.5, %v1900
      %v1902 = vmul.f32 %v1897, %v1901
      %vm1903 = vweird.f32 %v1893
      %vm1904 = vweird.f32 %v1897
      %vm1905 = vmor %vm1903, %vm1904
      %v1906 = vsel %vm1905, %v1897, %v1902
      %v1907 = vrsqrt.pop %v1894
      %v1908 = vmul.f32 %v1907, %v1894
      %v1909 = vmul.f32 %v1908, %v1907
      %v1910 = vmul.f32 0.5, %v1909
      %v1911 = vsub.f32 1.5, %v1910
      %v1912 = vmul.f32 %v1907, %v1911
      %vm1913 = vweird.f32 %v1894
      %vm1914 = vweird.f32 %v1907
      %vm1915 = vmor %vm1913, %vm1914
      %v1916 = vsel %vm1915, %v1907, %v1912
      %v1917 = vrsqrt.pop %v1895
      %v1918 = vmul.f32 %v1917, %v1895
      %v1919 = vmul.f32 %v1918, %v1917
      %v1920 = vmul.f32 0.5, %v1919
      %v1921 = vsub.f32 1.5, %v1920
      %v1922 = vmul.f32 %v1917, %v1921
      %vm1923 = vweird.f32 %v1895
      %vm1924 = vweird.f32 %v1917
      %vm1925 = vmor %vm1923, %vm1924
      %v1926 = vsel %vm1925, %v1917, %v1922
      %v1927 = vrsqrt.pop %v1896
      %v1928 = vmul.f32 %v1927, %v1896
      %v1929 = vmul.f32 %v1928, %v1927
      %v1930 = vmul.f32 0.5, %v1929
      %v1931 = vsub.f32 1.5, %v1930
      %v1932 = vmul.f32 %v1927, %v1931
      %vm1933 = vweird.f32 %v1896
      %vm1934 = vweird.f32 %v1927
      %vm1935 = vmor %vm1933, %vm1934
      %v1936 = vsel %vm1935, %v1927, %v1932
      %v1937 = vmul.f32 %v1869, %v1906
      %v1938 = vmul.f32 %v1870, %v1916
      %v1939 = vmul.f32 %v1871, %v1926
      %v1940 = vmul.f32 %v1872, %v1936
      %v1941 = vperm.slane %v1852, 0
      %v1942 = vmul.f32 %v1937, %v1941
      %v1943 = vmul.f32 %v1938, %v1941
      %v1944 = vmul.f32 %v1939, %v1941
      %v1945 = vmul.f32 %v1940, %v1941
      %v1946 = vperm.slane %v1852, 1
      %v1947 = vadd.f32 %v1942, %v1946
      %v1948 = vadd.f32 %v1943, %v1946
      %v1949 = vadd.f32 %v1944, %v1946
      %v1950 = vadd.f32 %v1945, %v1946
      %v1951 = vperm.slane %v1852, 2
      %v1953 = vsel %vm282, %v1947, 0
      %v1956 = vsel %vm282, %v1948, 0
      %v1959 = vsel %vm282, %v1949, 0
      %v1962 = vsel %vm282, %v1950, 0
      %1964 = vmatpush.msra.mxu0 0.0
      %1965 = vmatpush.msra.mxu0 0.0
      %1966 = vmatpush.msra.mxu0 0.0
      %1967 = vmatpush.msra.mxu0 0.0
      %1968 = vmatpush.msra.mxu0 0.0
      %1969 = vmatpush.msra.mxu0 0.0
      %1970 = vmatpush.msra.mxu0 0.0
      %1971 = vmatpush.msra.mxu0 0.0
      %1972 = vmatpush.msra.mxu0 0.0
      %1973 = vmatpush.msra.mxu0 0.0
      %1974 = vmatpush.msra.mxu0 0.0
      %1975 = vmatpush.msra.mxu0 0.0
      %1976 = vmatpush.msra.mxu0 %v1832
      %1977 = vmatpush.msra.mxu0 %v1830
      %1978 = vmatpush.msra.mxu0 %v1828
      %1979 = vmatpush.msra.mxu0 %v1826
      %1980 = vmatmul.f32.gmra.mxu0 %v1953
      %v1981 = vpop.f32.mrf.mxu0
      %v1982 = vadd.f32 %v1951, %v1981
      %1983 = vmatmul.f32.gmra.mxu0 %v1956
      %v1984 = vpop.f32.mrf.mxu0
      %v1985 = vadd.f32 %v1951, %v1984
      %1986 = vmatmul.f32.gmra.mxu0 %v1959
      %v1987 = vpop.f32.mrf.mxu0
      %v1988 = vadd.f32 %v1951, %v1987
      %1989 = vmatmul.f32.gmra.mxu0 %v1962
      %v1990 = vpop.f32.mrf.mxu0
      %v1991 = vadd.f32 %v1951, %v1990
      %1992 = vdwg.mxu0
      %1997 = vrot.lane.b32.xlu0 %v1982, 96
      %v1998 = vpop.permute.xlu0 %1997
      %1999 = vrot.lane.b32.xlu0 %v1985, 96
      %v2000 = vpop.permute.xlu0 %1999
      %2001 = vrot.lane.b32.xlu0 %v1988, 96
      %v2002 = vpop.permute.xlu0 %2001
      %2003 = vrot.lane.b32.xlu0 %v1991, 96
      %v2004 = vpop.permute.xlu0 %2003
      %v2005 = vsel %vm442, %v1982, 0
      %v2007 = vsel %vm442, %v1985, 0
      %v2009 = vsel %vm442, %v1988, 0
      %v2011 = vsel %vm442, %v1991, 0
      %v2013 = vsel %vm442, %v1998, 0
      %v2015 = vsel %vm442, %v2000, 0
      %v2017 = vsel %vm442, %v2002, 0
      %v2019 = vsel %vm442, %v2004, 0
      %2021 = vmatpush.xpose.msra.mxu0 0.0
      %2022 = vmatpush.xpose.msra.mxu0 0.0
      %2023 = vmatpush.xpose.msra.mxu0 0.0
      %2024 = vmatpush.xpose.msra.mxu0 0.0
      %2025 = vmatpush.xpose.msra.mxu0 0.0
      %2026 = vmatpush.xpose.msra.mxu0 0.0
      %2027 = vmatpush.xpose.msra.mxu0 0.0
      %2028 = vmatpush.xpose.msra.mxu0 0.0
      %2029 = vmatpush.xpose.msra.mxu0 0.0
      %2030 = vmatpush.xpose.msra.mxu0 0.0
      %2031 = vmatpush.xpose.msra.mxu0 0.0
      %2032 = vmatpush.xpose.msra.mxu0 0.0
      %2033 = vmatpush.xpose.msra.mxu0 %v2019
      %2034 = vmatpush.xpose.msra.mxu0 %v2017
      %2035 = vmatpush.xpose.msra.mxu0 %v2015
      %2036 = vmatpush.xpose.msra.mxu0 %v2013
      %2037 = vmatmul.f32.gmra.mxu0 %v2005
      %v2038 = vpop.f32.mrf.mxu0
      %v2039 = vadd.f32 0.0, %v2038
      %2040 = vmatmul.f32.gmra.mxu0 %v2007
      %v2041 = vpop.f32.mrf.mxu0
      %v2042 = vadd.f32 0.0, %v2041
      %2043 = vmatmul.f32.gmra.mxu0 %v2009
      %v2044 = vpop.f32.mrf.mxu0
      %v2045 = vadd.f32 0.0, %v2044
      %2046 = vmatmul.f32.gmra.mxu0 %v2011
      %v2047 = vpop.f32.mrf.mxu0
      %v2048 = vadd.f32 0.0, %v2047
      %2049 = vdwg.mxu0
      %v2050 = vmul.f32 %v2039, 0.35355338
      %v2051 = vmul.f32 %v2042, 0.35355338
      %v2052 = vmul.f32 %v2045, 0.35355338
      %v2053 = vmul.f32 %v2048, 0.35355338
      %2054 = vst.msk [vmem:[#allocation2] sm:$0xff] %vm282, %v2050
      %2055 = vst.msk [vmem:[#allocation2 + $0x8] sm:$0xff] %vm282, %v2051
      %2056 = vst.msk [vmem:[#allocation2 + $0x10] sm:$0xff] %vm282, %v2052
      %2057 = vst.msk [vmem:[#allocation2 + $0x18] sm:$0xff] %vm282, %v2053
      %2058 = vrot.lane.b32.xlu0 %v1982, 120
      %v2059 = vpop.permute.xlu0 %2058
      %2060 = vrot.lane.b32.xlu0 %v1985, 120
      %v2061 = vpop.permute.xlu0 %2060
      %2062 = vrot.lane.b32.xlu0 %v1988, 120
      %v2063 = vpop.permute.xlu0 %2062
      %2064 = vrot.lane.b32.xlu0 %v1991, 120
      %v2065 = vpop.permute.xlu0 %2064
      %2066 = vrot.lane.b32.xlu0 %v1982, 88
      %v2067 = vpop.permute.xlu0 %2066
      %2068 = vrot.lane.b32.xlu0 %v1985, 88
      %v2069 = vpop.permute.xlu0 %2068
      %2070 = vrot.lane.b32.xlu0 %v1988, 88
      %v2071 = vpop.permute.xlu0 %2070
      %2072 = vrot.lane.b32.xlu0 %v1991, 88
      %v2073 = vpop.permute.xlu0 %2072
      %v2074 = vsel %vm442, %v2059, 0
      %v2076 = vsel %vm442, %v2061, 0
      %v2078 = vsel %vm442, %v2063, 0
      %v2080 = vsel %vm442, %v2065, 0
      %v2082 = vsel %vm442, %v2067, 0
      %v2084 = vsel %vm442, %v2069, 0
      %v2086 = vsel %vm442, %v2071, 0
      %v2088 = vsel %vm442, %v2073, 0
      %2090 = vmatpush.xpose.msra.mxu0 0.0
      %2091 = vmatpush.xpose.msra.mxu0 0.0
      %2092 = vmatpush.xpose.msra.mxu0 0.0
      %2093 = vmatpush.xpose.msra.mxu0 0.0
      %2094 = vmatpush.xpose.msra.mxu0 0.0
      %2095 = vmatpush.xpose.msra.mxu0 0.0
      %2096 = vmatpush.xpose.msra.mxu0 0.0
      %2097 = vmatpush.xpose.msra.mxu0 0.0
      %2098 = vmatpush.xpose.msra.mxu0 0.0
      %2099 = vmatpush.xpose.msra.mxu0 0.0
      %2100 = vmatpush.xpose.msra.mxu0 0.0
      %2101 = vmatpush.xpose.msra.mxu0 0.0
      %2102 = vmatpush.xpose.msra.mxu0 %v2088
      %2103 = vmatpush.xpose.msra.mxu0 %v2086
      %2104 = vmatpush.xpose.msra.mxu0 %v2084
      %2105 = vmatpush.xpose.msra.mxu0 %v2082
      %2106 = vmatmul.f32.gmra.mxu0 %v2074
      %v2107 = vpop.f32.mrf.mxu0
      %v2108 = vadd.f32 0.0, %v2107
      %2109 = vmatmul.f32.gmra.mxu0 %v2076
      %v2110 = vpop.f32.mrf.mxu0
      %v2111 = vadd.f32 0.0, %v2110
      %2112 = vmatmul.f32.gmra.mxu0 %v2078
      %v2113 = vpop.f32.mrf.mxu0
      %v2114 = vadd.f32 0.0, %v2113
      %2115 = vmatmul.f32.gmra.mxu0 %v2080
      %v2116 = vpop.f32.mrf.mxu0
      %v2117 = vadd.f32 0.0, %v2116
      %2118 = vdwg.mxu0
      %v2119 = vmul.f32 %v2108, 0.35355338
      %v2120 = vmul.f32 %v2111, 0.35355338
      %v2121 = vmul.f32 %v2114, 0.35355338
      %v2122 = vmul.f32 %v2117, 0.35355338
      %2123 = vst.msk [vmem:[#allocation2 + $0x20] sm:$0xff] %vm282, %v2119
      %2124 = vst.msk [vmem:[#allocation2 + $0x28] sm:$0xff] %vm282, %v2120
      %2125 = vst.msk [vmem:[#allocation2 + $0x30] sm:$0xff] %vm282, %v2121
      %2126 = vst.msk [vmem:[#allocation2 + $0x38] sm:$0xff] %vm282, %v2122
      %2127 = vrot.lane.b32.xlu0 %v1982, 112
      %v2128 = vpop.permute.xlu0 %2127
      %2129 = vrot.lane.b32.xlu0 %v1985, 112
      %v2130 = vpop.permute.xlu0 %2129
      %2131 = vrot.lane.b32.xlu0 %v1988, 112
      %v2132 = vpop.permute.xlu0 %2131
      %2133 = vrot.lane.b32.xlu0 %v1991, 112
      %v2134 = vpop.permute.xlu0 %2133
      %2135 = vrot.lane.b32.xlu0 %v1982, 80
      %v2136 = vpop.permute.xlu0 %2135
      %2137 = vrot.lane.b32.xlu0 %v1985, 80
      %v2138 = vpop.permute.xlu0 %2137
      %2139 = vrot.lane.b32.xlu0 %v1988, 80
      %v2140 = vpop.permute.xlu0 %2139
      %2141 = vrot.lane.b32.xlu0 %v1991, 80
      %v2142 = vpop.permute.xlu0 %2141
      %v2143 = vsel %vm442, %v2128, 0
      %v2145 = vsel %vm442, %v2130, 0
      %v2147 = vsel %vm442, %v2132, 0
      %v2149 = vsel %vm442, %v2134, 0
      %v2151 = vsel %vm442, %v2136, 0
      %v2153 = vsel %vm442, %v2138, 0
      %v2155 = vsel %vm442, %v2140, 0
      %v2157 = vsel %vm442, %v2142, 0
      %2159 = vmatpush.xpose.msra.mxu0 0.0
      %2160 = vmatpush.xpose.msra.mxu0 0.0
      %2161 = vmatpush.xpose.msra.mxu0 0.0
      %2162 = vmatpush.xpose.msra.mxu0 0.0
      %2163 = vmatpush.xpose.msra.mxu0 0.0
      %2164 = vmatpush.xpose.msra.mxu0 0.0
      %2165 = vmatpush.xpose.msra.mxu0 0.0
      %2166 = vmatpush.xpose.msra.mxu0 0.0
      %2167 = vmatpush.xpose.msra.mxu0 0.0
      %2168 = vmatpush.xpose.msra.mxu0 0.0
      %2169 = vmatpush.xpose.msra.mxu0 0.0
      %2170 = vmatpush.xpose.msra.mxu0 0.0
      %2171 = vmatpush.xpose.msra.mxu0 %v2157
      %2172 = vmatpush.xpose.msra.mxu0 %v2155
      %2173 = vmatpush.xpose.msra.mxu0 %v2153
      %2174 = vmatpush.xpose.msra.mxu0 %v2151
      %2175 = vmatmul.f32.gmra.mxu0 %v2143
      %v2176 = vpop.f32.mrf.mxu0
      %v2177 = vadd.f32 0.0, %v2176
      %2178 = vmatmul.f32.gmra.mxu0 %v2145
      %v2179 = vpop.f32.mrf.mxu0
      %v2180 = vadd.f32 0.0, %v2179
      %2181 = vmatmul.f32.gmra.mxu0 %v2147
      %v2182 = vpop.f32.mrf.mxu0
      %v2183 = vadd.f32 0.0, %v2182
      %2184 = vmatmul.f32.gmra.mxu0 %v2149
      %v2185 = vpop.f32.mrf.mxu0
      %v2186 = vadd.f32 0.0, %v2185
      %2187 = vdwg.mxu0
      %v2188 = vmul.f32 %v2177, 0.35355338
      %v2189 = vmul.f32 %v2180, 0.35355338
      %v2190 = vmul.f32 %v2183, 0.35355338
      %v2191 = vmul.f32 %v2186, 0.35355338
      %2192 = vst.msk [vmem:[#allocation2 + $0x40] sm:$0xff] %vm282, %v2188
      %2193 = vst.msk [vmem:[#allocation2 + $0x48] sm:$0xff] %vm282, %v2189
      %2194 = vst.msk [vmem:[#allocation2 + $0x50] sm:$0xff] %vm282, %v2190
      %2195 = vst.msk [vmem:[#allocation2 + $0x58] sm:$0xff] %vm282, %v2191
      %2196 = vrot.lane.b32.xlu0 %v1982, 104
      %v2197 = vpop.permute.xlu0 %2196
      %2198 = vrot.lane.b32.xlu0 %v1985, 104
      %v2199 = vpop.permute.xlu0 %2198
      %2200 = vrot.lane.b32.xlu0 %v1988, 104
      %v2201 = vpop.permute.xlu0 %2200
      %2202 = vrot.lane.b32.xlu0 %v1991, 104
      %v2203 = vpop.permute.xlu0 %2202
      %2204 = vrot.lane.b32.xlu0 %v1982, 72
      %v2205 = vpop.permute.xlu0 %2204
      %2206 = vrot.lane.b32.xlu0 %v1985, 72
      %v2207 = vpop.permute.xlu0 %2206
      %2208 = vrot.lane.b32.xlu0 %v1988, 72
      %v2209 = vpop.permute.xlu0 %2208
      %2210 = vrot.lane.b32.xlu0 %v1991, 72
      %v2211 = vpop.permute.xlu0 %2210
      %v2212 = vsel %vm442, %v2197, 0
      %v2214 = vsel %vm442, %v2199, 0
      %v2216 = vsel %vm442, %v2201, 0
      %v2218 = vsel %vm442, %v2203, 0
      %v2220 = vsel %vm442, %v2205, 0
      %v2222 = vsel %vm442, %v2207, 0
      %v2224 = vsel %vm442, %v2209, 0
      %v2226 = vsel %vm442, %v2211, 0
      %2228 = vmatpush.xpose.msra.mxu0 0.0
      %2229 = vmatpush.xpose.msra.mxu0 0.0
      %2230 = vmatpush.xpose.msra.mxu0 0.0
      %2231 = vmatpush.xpose.msra.mxu0 0.0
      %2232 = vmatpush.xpose.msra.mxu0 0.0
      %2233 = vmatpush.xpose.msra.mxu0 0.0
      %2234 = vmatpush.xpose.msra.mxu0 0.0
      %2235 = vmatpush.xpose.msra.mxu0 0.0
      %2236 = vmatpush.xpose.msra.mxu0 0.0
      %2237 = vmatpush.xpose.msra.mxu0 0.0
      %2238 = vmatpush.xpose.msra.mxu0 0.0
      %2239 = vmatpush.xpose.msra.mxu0 0.0
      %2240 = vmatpush.xpose.msra.mxu0 %v2226
      %2241 = vmatpush.xpose.msra.mxu0 %v2224
      %2242 = vmatpush.xpose.msra.mxu0 %v2222
      %2243 = vmatpush.xpose.msra.mxu0 %v2220
      %2244 = vmatmul.f32.gmra.mxu0 %v2212
      %v2245 = vpop.f32.mrf.mxu0
      %v2246 = vadd.f32 0.0, %v2245
      %2247 = vmatmul.f32.gmra.mxu0 %v2214
      %v2248 = vpop.f32.mrf.mxu0
      %v2249 = vadd.f32 0.0, %v2248
      %2250 = vmatmul.f32.gmra.mxu0 %v2216
      %v2251 = vpop.f32.mrf.mxu0
      %v2252 = vadd.f32 0.0, %v2251
      %2253 = vmatmul.f32.gmra.mxu0 %v2218
      %v2254 = vpop.f32.mrf.mxu0
      %v2255 = vadd.f32 0.0, %v2254
      %2256 = vdwg.mxu0
      %v2257 = vmul.f32 %v2246, 0.35355338
      %v2258 = vmul.f32 %v2249, 0.35355338
      %v2259 = vmul.f32 %v2252, 0.35355338
      %v2260 = vmul.f32 %v2255, 0.35355338
      %2261 = vst.msk [vmem:[#allocation2 + $0x60] sm:$0xff] %vm282, %v2257
      %2262 = vst.msk [vmem:[#allocation2 + $0x68] sm:$0xff] %vm282, %v2258
      %2263 = vst.msk [vmem:[#allocation2 + $0x70] sm:$0xff] %vm282, %v2259
      %2264 = vst.msk [vmem:[#allocation2 + $0x78] sm:$0xff] %vm282, %v2260
      %v2265 = vld [vmem:[#allocation2] sm:$0xff]
      %v2266 = vld [vmem:[#allocation2 + $0x8] sm:$0xff]
      %v2267 = vld [vmem:[#allocation2 + $0x10] sm:$0xff]
      %v2268 = vld [vmem:[#allocation2 + $0x18] sm:$0xff]
      %v2269 = vld [vmem:[#allocation2 + $0x20] sm:$0xff]
      %v2270 = vld [vmem:[#allocation2 + $0x28] sm:$0xff]
      %v2271 = vld [vmem:[#allocation2 + $0x30] sm:$0xff]
      %v2272 = vld [vmem:[#allocation2 + $0x38] sm:$0xff]
      %v2273 = vld [vmem:[#allocation2 + $0x40] sm:$0xff]
      %v2274 = vld [vmem:[#allocation2 + $0x48] sm:$0xff]
      %v2275 = vld [vmem:[#allocation2 + $0x50] sm:$0xff]
      %v2276 = vld [vmem:[#allocation2 + $0x58] sm:$0xff]
      %v2277 = vld [vmem:[#allocation2 + $0x60] sm:$0xff]
      %v2278 = vld [vmem:[#allocation2 + $0x68] sm:$0xff]
      %v2279 = vld [vmem:[#allocation2 + $0x70] sm:$0xff]
      %v2280 = vld [vmem:[#allocation2 + $0x78] sm:$0xff]
      %v2281 = vadd.f32 %v2265, %v720
      %v2282 = vadd.f32 %v2266, %v720
      %v2283 = vadd.f32 %v2267, %v720
      %v2284 = vadd.f32 %v2268, %v720
      %v2285 = vadd.f32 %v2269, %v720
      %v2286 = vadd.f32 %v2270, %v720
      %v2287 = vadd.f32 %v2271, %v720
      %v2288 = vadd.f32 %v2272, %v720
      %v2289 = vadd.f32 %v2273, %v720
      %v2290 = vadd.f32 %v2274, %v720
      %v2291 = vadd.f32 %v2275, %v720
      %v2292 = vadd.f32 %v2276, %v720
      %v2293 = vadd.f32 %v2277, %v720
      %v2294 = vadd.f32 %v2278, %v720
      %v2295 = vadd.f32 %v2279, %v720
      %v2296 = vadd.f32 %v2280, %v720
      %v2297 = vsel %vm282, %v2281, -inf
      %2298 = vmax.xlane.f32.xlu0 %v2297
      %v2299 = vpop.xlane.xlu0 %2298
      %v2300 = vsel %vm282, %v2282, -inf
      %2301 = vmax.xlane.f32.xlu0 %v2300
      %v2302 = vpop.xlane.xlu0 %2301
      %v2303 = vsel %vm282, %v2283, -inf
      %2304 = vmax.xlane.f32.xlu0 %v2303
      %v2305 = vpop.xlane.xlu0 %2304
      %v2306 = vsel %vm282, %v2284, -inf
      %2307 = vmax.xlane.f32.xlu0 %v2306
      %v2308 = vpop.xlane.xlu0 %2307
      %v2309 = vsel %vm282, %v2285, -inf
      %2310 = vmax.xlane.f32.xlu0 %v2309
      %v2311 = vpop.xlane.xlu0 %2310
      %v2312 = vsel %vm282, %v2286, -inf
      %2313 = vmax.xlane.f32.xlu0 %v2312
      %v2314 = vpop.xlane.xlu0 %2313
      %v2315 = vsel %vm282, %v2287, -inf
      %2316 = vmax.xlane.f32.xlu0 %v2315
      %v2317 = vpop.xlane.xlu0 %2316
      %v2318 = vsel %vm282, %v2288, -inf
      %2319 = vmax.xlane.f32.xlu0 %v2318
      %v2320 = vpop.xlane.xlu0 %2319
      %v2321 = vsel %vm282, %v2289, -inf
      %2322 = vmax.xlane.f32.xlu0 %v2321
      %v2323 = vpop.xlane.xlu0 %2322
      %v2324 = vsel %vm282, %v2290, -inf
      %2325 = vmax.xlane.f32.xlu0 %v2324
      %v2326 = vpop.xlane.xlu0 %2325
      %v2327 = vsel %vm282, %v2291, -inf
      %2328 = vmax.xlane.f32.xlu0 %v2327
      %v2329 = vpop.xlane.xlu0 %2328
      %v2330 = vsel %vm282, %v2292, -inf
      %2331 = vmax.xlane.f32.xlu0 %v2330
      %v2332 = vpop.xlane.xlu0 %2331
      %v2333 = vsel %vm282, %v2293, -inf
      %2334 = vmax.xlane.f32.xlu0 %v2333
      %v2335 = vpop.xlane.xlu0 %2334
      %v2336 = vsel %vm282, %v2294, -inf
      %2337 = vmax.xlane.f32.xlu0 %v2336
      %v2338 = vpop.xlane.xlu0 %2337
      %v2339 = vsel %vm282, %v2295, -inf
      %2340 = vmax.xlane.f32.xlu0 %v2339
      %v2341 = vpop.xlane.xlu0 %2340
      %v2342 = vsel %vm282, %v2296, -inf
      %2343 = vmax.xlane.f32.xlu0 %v2342
      %v2344 = vpop.xlane.xlu0 %2343
      %v2345 = vsub.f32 %v2281, %v2299
      %v2346 = vsub.f32 %v2282, %v2302
      %v2347 = vsub.f32 %v2283, %v2305
      %v2348 = vsub.f32 %v2284, %v2308
      %v2349 = vsub.f32 %v2285, %v2311
      %v2350 = vsub.f32 %v2286, %v2314
      %v2351 = vsub.f32 %v2287, %v2317
      %v2352 = vsub.f32 %v2288, %v2320
      %v2353 = vsub.f32 %v2289, %v2323
      %v2354 = vsub.f32 %v2290, %v2326
      %v2355 = vsub.f32 %v2291, %v2329
      %v2356 = vsub.f32 %v2292, %v2332
      %v2357 = vsub.f32 %v2293, %v2335
      %v2358 = vsub.f32 %v2294, %v2338
      %v2359 = vsub.f32 %v2295, %v2341
      %v2360 = vsub.f32 %v2296, %v2344
      %v2361 = vmul.f32 %v2345, 1.442695
      %v2362 = vpow.pop %v2361
      %v2363 = vmul.f32 %v2346, 1.442695
      %v2364 = vpow.pop %v2363
      %v2365 = vmul.f32 %v2347, 1.442695
      %v2366 = vpow.pop %v2365
      %v2367 = vmul.f32 %v2348, 1.442695
      %v2368 = vpow.pop %v2367
      %v2369 = vmul.f32 %v2349, 1.442695
      %v2370 = vpow.pop %v2369
      %v2371 = vmul.f32 %v2350, 1.442695
      %v2372 = vpow.pop %v2371
      %v2373 = vmul.f32 %v2351, 1.442695
      %v2374 = vpow.pop %v2373
      %v2375 = vmul.f32 %v2352, 1.442695
      %v2376 = vpow.pop %v2375
      %v2377 = vmul.f32 %v2353, 1.442695
      %v2378 = vpow.pop %v2377
      %v2379 = vmul.f32 %v2354, 1.442695
      %v2380 = vpow.pop %v2379
      %v2381 = vmul.f32 %v2355, 1.442695
      %v2382 = vpow.pop %v2381
      %v2383 = vmul.f32 %v2356, 1.442695
      %v2384 = vpow.pop %v2383
      %v2385 = vmul.f32 %v2357, 1.442695
      %v2386 = vpow.pop %v2385
      %v2387 = vmul.f32 %v2358, 1.442695
      %v2388 = vpow.pop %v2387
      %v2389 = vmul.f32 %v2359, 1.442695
      %v2390 = vpow.pop %v2389
      %v2391 = vmul.f32 %v2360, 1.442695
      %v2392 = vpow.pop %v2391
      %v2393 = vsel %vm282, %v2362, 0.0
      %2394 = vadd.xlane.f32.xlu0 %v2393
      %v2395 = vpop.xlane.xlu0 %2394
      %v2396 = vsel %vm282, %v2364, 0.0
      %2397 = vadd.xlane.f32.xlu0 %v2396
      %v2398 = vpop.xlane.xlu0 %2397
      %v2399 = vsel %vm282, %v2366, 0.0
      %2400 = vadd.xlane.f32.xlu0 %v2399
      %v2401 = vpop.xlane.xlu0 %2400
      %v2402 = vsel %vm282, %v2368, 0.0
      %2403 = vadd.xlane.f32.xlu0 %v2402
      %v2404 = vpop.xlane.xlu0 %2403
      %v2405 = vsel %vm282, %v2370, 0.0
      %2406 = vadd.xlane.f32.xlu0 %v2405
      %v2407 = vpop.xlane.xlu0 %2406
      %v2408 = vsel %vm282, %v2372, 0.0
      %2409 = vadd.xlane.f32.xlu0 %v2408
      %v2410 = vpop.xlane.xlu0 %2409
      %v2411 = vsel %vm282, %v2374, 0.0
      %2412 = vadd.xlane.f32.xlu0 %v2411
      %v2413 = vpop.xlane.xlu0 %2412
      %v2414 = vsel %vm282, %v2376, 0.0
      %2415 = vadd.xlane.f32.xlu0 %v2414
      %v2416 = vpop.xlane.xlu0 %2415
      %v2417 = vsel %vm282, %v2378, 0.0
      %2418 = vadd.xlane.f32.xlu0 %v2417
      %v2419 = vpop.xlane.xlu0 %2418
      %v2420 = vsel %vm282, %v2380, 0.0
      %2421 = vadd.xlane.f32.xlu0 %v2420
      %v2422 = vpop.xlane.xlu0 %2421
      %v2423 = vsel %vm282, %v2382, 0.0
      %2424 = vadd.xlane.f32.xlu0 %v2423
      %v2425 = vpop.xlane.xlu0 %2424
      %v2426 = vsel %vm282, %v2384, 0.0
      %2427 = vadd.xlane.f32.xlu0 %v2426
      %v2428 = vpop.xlane.xlu0 %2427
      %v2429 = vsel %vm282, %v2386, 0.0
      %2430 = vadd.xlane.f32.xlu0 %v2429
      %v2431 = vpop.xlane.xlu0 %2430
      %v2432 = vsel %vm282, %v2388, 0.0
      %2433 = vadd.xlane.f32.xlu0 %v2432
      %v2434 = vpop.xlane.xlu0 %2433
      %v2435 = vsel %vm282, %v2390, 0.0
      %2436 = vadd.xlane.f32.xlu0 %v2435
      %v2437 = vpop.xlane.xlu0 %2436
      %v2438 = vsel %vm282, %v2392, 0.0
      %2439 = vadd.xlane.f32.xlu0 %v2438
      %v2440 = vpop.xlane.xlu0 %2439
      %v2441 = vrcp.pop %v2395
      %v2442 = vmul.f32 %v2395, %v2441
      %v2443 = vsub.f32 1.0, %v2442
      %v2444 = vmul.f32 %v2441, %v2443
      %v2445 = vadd.f32 %v2441, %v2444
      %vm2446 = vweird.f32 %v2395
      %vm2447 = vweird.f32 %v2441
      %vm2448 = vmor %vm2446, %vm2447
      %v2449 = vsel %vm2448, %v2441, %v2445
      %v2450 = vand.u32 2147483647, %v2395
      %vm2451 = vcmp.eq.f32.partialorder %v2450, 8.507059e+37
      %v2452 = vand.u32 %v2395, 2147483648
      %v2453 = vor.u32 1.1754944e-38, %v2452
      %v2454 = vsel %vm2451, %v2453, %v2449
      %v2455 = vmul.f32 %v2362, %v2454
      %v2456 = vrcp.pop %v2398
      %v2457 = vmul.f32 %v2398, %v2456
      %v2458 = vsub.f32 1.0, %v2457
      %v2459 = vmul.f32 %v2456, %v2458
      %v2460 = vadd.f32 %v2456, %v2459
      %vm2461 = vweird.f32 %v2398
      %vm2462 = vweird.f32 %v2456
      %vm2463 = vmor %vm2461, %vm2462
      %v2464 = vsel %vm2463, %v2456, %v2460
      %v2465 = vand.u32 2147483647, %v2398
      %vm2466 = vcmp.eq.f32.partialorder %v2465, 8.507059e+37
      %v2467 = vand.u32 %v2398, 2147483648
      %v2468 = vor.u32 1.1754944e-38, %v2467
      %v2469 = vsel %vm2466, %v2468, %v2464
      %v2470 = vmul.f32 %v2364, %v2469
      %v2471 = vrcp.pop %v2401
      %v2472 = vmul.f32 %v2401, %v2471
      %v2473 = vsub.f32 1.0, %v2472
      %v2474 = vmul.f32 %v2471, %v2473
      %v2475 = vadd.f32 %v2471, %v2474
      %vm2476 = vweird.f32 %v2401
      %vm2477 = vweird.f32 %v2471
      %vm2478 = vmor %vm2476, %vm2477
      %v2479 = vsel %vm2478, %v2471, %v2475
      %v2480 = vand.u32 2147483647, %v2401
      %vm2481 = vcmp.eq.f32.partialorder %v2480, 8.507059e+37
      %v2482 = vand.u32 %v2401, 2147483648
      %v2483 = vor.u32 1.1754944e-38, %v2482
      %v2484 = vsel %vm2481, %v2483, %v2479
      %v2485 = vmul.f32 %v2366, %v2484
      %v2486 = vrcp.pop %v2404
      %v2487 = vmul.f32 %v2404, %v2486
      %v2488 = vsub.f32 1.0, %v2487
      %v2489 = vmul.f32 %v2486, %v2488
      %v2490 = vadd.f32 %v2486, %v2489
      %vm2491 = vweird.f32 %v2404
      %vm2492 = vweird.f32 %v2486
      %vm2493 = vmor %vm2491, %vm2492
      %v2494 = vsel %vm2493, %v2486, %v2490
      %v2495 = vand.u32 2147483647, %v2404
      %vm2496 = vcmp.eq.f32.partialorder %v2495, 8.507059e+37
      %v2497 = vand.u32 %v2404, 2147483648
      %v2498 = vor.u32 1.1754944e-38, %v2497
      %v2499 = vsel %vm2496, %v2498, %v2494
      %v2500 = vmul.f32 %v2368, %v2499
      %v2501 = vrcp.pop %v2407
      %v2502 = vmul.f32 %v2407, %v2501
      %v2503 = vsub.f32 1.0, %v2502
      %v2504 = vmul.f32 %v2501, %v2503
      %v2505 = vadd.f32 %v2501, %v2504
      %vm2506 = vweird.f32 %v2407
      %vm2507 = vweird.f32 %v2501
      %vm2508 = vmor %vm2506, %vm2507
      %v2509 = vsel %vm2508, %v2501, %v2505
      %v2510 = vand.u32 2147483647, %v2407
      %vm2511 = vcmp.eq.f32.partialorder %v2510, 8.507059e+37
      %v2512 = vand.u32 %v2407, 2147483648
      %v2513 = vor.u32 1.1754944e-38, %v2512
      %v2514 = vsel %vm2511, %v2513, %v2509
      %v2515 = vmul.f32 %v2370, %v2514
      %v2516 = vrcp.pop %v2410
      %v2517 = vmul.f32 %v2410, %v2516
      %v2518 = vsub.f32 1.0, %v2517
      %v2519 = vmul.f32 %v2516, %v2518
      %v2520 = vadd.f32 %v2516, %v2519
      %vm2521 = vweird.f32 %v2410
      %vm2522 = vweird.f32 %v2516
      %vm2523 = vmor %vm2521, %vm2522
      %v2524 = vsel %vm2523, %v2516, %v2520
      %v2525 = vand.u32 2147483647, %v2410
      %vm2526 = vcmp.eq.f32.partialorder %v2525, 8.507059e+37
      %v2527 = vand.u32 %v2410, 2147483648
      %v2528 = vor.u32 1.1754944e-38, %v2527
      %v2529 = vsel %vm2526, %v2528, %v2524
      %v2530 = vmul.f32 %v2372, %v2529
      %v2531 = vrcp.pop %v2413
      %v2532 = vmul.f32 %v2413, %v2531
      %v2533 = vsub.f32 1.0, %v2532
      %v2534 = vmul.f32 %v2531, %v2533
      %v2535 = vadd.f32 %v2531, %v2534
      %vm2536 = vweird.f32 %v2413
      %vm2537 = vweird.f32 %v2531
      %vm2538 = vmor %vm2536, %vm2537
      %v2539 = vsel %vm2538, %v2531, %v2535
      %v2540 = vand.u32 2147483647, %v2413
      %vm2541 = vcmp.eq.f32.partialorder %v2540, 8.507059e+37
      %v2542 = vand.u32 %v2413, 2147483648
      %v2543 = vor.u32 1.1754944e-38, %v2542
      %v2544 = vsel %vm2541, %v2543, %v2539
      %v2545 = vmul.f32 %v2374, %v2544
      %v2546 = vrcp.pop %v2416
      %v2547 = vmul.f32 %v2416, %v2546
      %v2548 = vsub.f32 1.0, %v2547
      %v2549 = vmul.f32 %v2546, %v2548
      %v2550 = vadd.f32 %v2546, %v2549
      %vm2551 = vweird.f32 %v2416
      %vm2552 = vweird.f32 %v2546
      %vm2553 = vmor %vm2551, %vm2552
      %v2554 = vsel %vm2553, %v2546, %v2550
      %v2555 = vand.u32 2147483647, %v2416
      %vm2556 = vcmp.eq.f32.partialorder %v2555, 8.507059e+37
      %v2557 = vand.u32 %v2416, 2147483648
      %v2558 = vor.u32 1.1754944e-38, %v2557
      %v2559 = vsel %vm2556, %v2558, %v2554
      %v2560 = vmul.f32 %v2376, %v2559
      %v2561 = vrcp.pop %v2419
      %v2562 = vmul.f32 %v2419, %v2561
      %v2563 = vsub.f32 1.0, %v2562
      %v2564 = vmul.f32 %v2561, %v2563
      %v2565 = vadd.f32 %v2561, %v2564
      %vm2566 = vweird.f32 %v2419
      %vm2567 = vweird.f32 %v2561
      %vm2568 = vmor %vm2566, %vm2567
      %v2569 = vsel %vm2568, %v2561, %v2565
      %v2570 = vand.u32 2147483647, %v2419
      %vm2571 = vcmp.eq.f32.partialorder %v2570, 8.507059e+37
      %v2572 = vand.u32 %v2419, 2147483648
      %v2573 = vor.u32 1.1754944e-38, %v2572
      %v2574 = vsel %vm2571, %v2573, %v2569
      %v2575 = vmul.f32 %v2378, %v2574
      %v2576 = vrcp.pop %v2422
      %v2577 = vmul.f32 %v2422, %v2576
      %v2578 = vsub.f32 1.0, %v2577
      %v2579 = vmul.f32 %v2576, %v2578
      %v2580 = vadd.f32 %v2576, %v2579
      %vm2581 = vweird.f32 %v2422
      %vm2582 = vweird.f32 %v2576
      %vm2583 = vmor %vm2581, %vm2582
      %v2584 = vsel %vm2583, %v2576, %v2580
      %v2585 = vand.u32 2147483647, %v2422
      %vm2586 = vcmp.eq.f32.partialorder %v2585, 8.507059e+37
      %v2587 = vand.u32 %v2422, 2147483648
      %v2588 = vor.u32 1.1754944e-38, %v2587
      %v2589 = vsel %vm2586, %v2588, %v2584
      %v2590 = vmul.f32 %v2380, %v2589
      %v2591 = vrcp.pop %v2425
      %v2592 = vmul.f32 %v2425, %v2591
      %v2593 = vsub.f32 1.0, %v2592
      %v2594 = vmul.f32 %v2591, %v2593
      %v2595 = vadd.f32 %v2591, %v2594
      %vm2596 = vweird.f32 %v2425
      %vm2597 = vweird.f32 %v2591
      %vm2598 = vmor %vm2596, %vm2597
      %v2599 = vsel %vm2598, %v2591, %v2595
      %v2600 = vand.u32 2147483647, %v2425
      %vm2601 = vcmp.eq.f32.partialorder %v2600, 8.507059e+37
      %v2602 = vand.u32 %v2425, 2147483648
      %v2603 = vor.u32 1.1754944e-38, %v2602
      %v2604 = vsel %vm2601, %v2603, %v2599
      %v2605 = vmul.f32 %v2382, %v2604
      %v2606 = vrcp.pop %v2428
      %v2607 = vmul.f32 %v2428, %v2606
      %v2608 = vsub.f32 1.0, %v2607
      %v2609 = vmul.f32 %v2606, %v2608
      %v2610 = vadd.f32 %v2606, %v2609
      %vm2611 = vweird.f32 %v2428
      %vm2612 = vweird.f32 %v2606
      %vm2613 = vmor %vm2611, %vm2612
      %v2614 = vsel %vm2613, %v2606, %v2610
      %v2615 = vand.u32 2147483647, %v2428
      %vm2616 = vcmp.eq.f32.partialorder %v2615, 8.507059e+37
      %v2617 = vand.u32 %v2428, 2147483648
      %v2618 = vor.u32 1.1754944e-38, %v2617
      %v2619 = vsel %vm2616, %v2618, %v2614
      %v2620 = vmul.f32 %v2384, %v2619
      %v2621 = vrcp.pop %v2431
      %v2622 = vmul.f32 %v2431, %v2621
      %v2623 = vsub.f32 1.0, %v2622
      %v2624 = vmul.f32 %v2621, %v2623
      %v2625 = vadd.f32 %v2621, %v2624
      %vm2626 = vweird.f32 %v2431
      %vm2627 = vweird.f32 %v2621
      %vm2628 = vmor %vm2626, %vm2627
      %v2629 = vsel %vm2628, %v2621, %v2625
      %v2630 = vand.u32 2147483647, %v2431
      %vm2631 = vcmp.eq.f32.partialorder %v2630, 8.507059e+37
      %v2632 = vand.u32 %v2431, 2147483648
      %v2633 = vor.u32 1.1754944e-38, %v2632
      %v2634 = vsel %vm2631, %v2633, %v2629
      %v2635 = vmul.f32 %v2386, %v2634
      %v2636 = vrcp.pop %v2434
      %v2637 = vmul.f32 %v2434, %v2636
      %v2638 = vsub.f32 1.0, %v2637
      %v2639 = vmul.f32 %v2636, %v2638
      %v2640 = vadd.f32 %v2636, %v2639
      %vm2641 = vweird.f32 %v2434
      %vm2642 = vweird.f32 %v2636
      %vm2643 = vmor %vm2641, %vm2642
      %v2644 = vsel %vm2643, %v2636, %v2640
      %v2645 = vand.u32 2147483647, %v2434
      %vm2646 = vcmp.eq.f32.partialorder %v2645, 8.507059e+37
      %v2647 = vand.u32 %v2434, 2147483648
      %v2648 = vor.u32 1.1754944e-38, %v2647
      %v2649 = vsel %vm2646, %v2648, %v2644
      %v2650 = vmul.f32 %v2388, %v2649
      %v2651 = vrcp.pop %v2437
      %v2652 = vmul.f32 %v2437, %v2651
      %v2653 = vsub.f32 1.0, %v2652
      %v2654 = vmul.f32 %v2651, %v2653
      %v2655 = vadd.f32 %v2651, %v2654
      %vm2656 = vweird.f32 %v2437
      %vm2657 = vweird.f32 %v2651
      %vm2658 = vmor %vm2656, %vm2657
      %v2659 = vsel %vm2658, %v2651, %v2655
      %v2660 = vand.u32 2147483647, %v2437
      %vm2661 = vcmp.eq.f32.partialorder %v2660, 8.507059e+37
      %v2662 = vand.u32 %v2437, 2147483648
      %v2663 = vor.u32 1.1754944e-38, %v2662
      %v2664 = vsel %vm2661, %v2663, %v2659
      %v2665 = vmul.f32 %v2390, %v2664
      %v2666 = vrcp.pop %v2440
      %v2667 = vmul.f32 %v2440, %v2666
      %v2668 = vsub.f32 1.0, %v2667
      %v2669 = vmul.f32 %v2666, %v2668
      %v2670 = vadd.f32 %v2666, %v2669
      %vm2671 = vweird.f32 %v2440
      %vm2672 = vweird.f32 %v2666
      %vm2673 = vmor %vm2671, %vm2672
      %v2674 = vsel %vm2673, %v2666, %v2670
      %v2675 = vand.u32 2147483647, %v2440
      %vm2676 = vcmp.eq.f32.partialorder %v2675, 8.507059e+37
      %v2677 = vand.u32 %v2440, 2147483648
      %v2678 = vor.u32 1.1754944e-38, %v2677
      %v2679 = vsel %vm2676, %v2678, %v2674
      %v2680 = vmul.f32 %v2392, %v2679
      %2681 = vrot.lane.b32.xlu0 %v1982, 64
      %v2682 = vpop.permute.xlu0 %2681
      %2683 = vrot.lane.b32.xlu0 %v1985, 64
      %v2684 = vpop.permute.xlu0 %2683
      %2685 = vrot.lane.b32.xlu0 %v1988, 64
      %v2686 = vpop.permute.xlu0 %2685
      %2687 = vrot.lane.b32.xlu0 %v1991, 64
      %v2688 = vpop.permute.xlu0 %2687
      %v2694 = vsel %vm282, %v2455, 0
      %v2697 = vsel %vm282, %v2470, 0
      %v2700 = vsel %vm282, %v2485, 0
      %v2703 = vsel %vm282, %v2500, 0
      %2705 = vmatpush.msra.mxu0 0.0
      %2706 = vmatpush.msra.mxu0 0.0
      %2707 = vmatpush.msra.mxu0 0.0
      %2708 = vmatpush.msra.mxu0 0.0
      %2709 = vmatpush.msra.mxu0 0.0
      %2710 = vmatpush.msra.mxu0 0.0
      %2711 = vmatpush.msra.mxu0 0.0
      %2712 = vmatpush.msra.mxu0 0.0
      %2713 = vmatpush.msra.mxu0 0.0
      %2714 = vmatpush.msra.mxu0 0.0
      %2715 = vmatpush.msra.mxu0 0.0
      %2716 = vmatpush.msra.mxu0 0.0
      %2717 = vmatpush.msra.mxu0 %v2688
      %2718 = vmatpush.msra.mxu0 %v2686
      %2719 = vmatpush.msra.mxu0 %v2684
      %2720 = vmatpush.msra.mxu0 %v2682
      %2721 = vmatmul.f32.gmra.mxu0 %v2694
      %v2722 = vpop.f32.mrf.mxu0
      %v2723 = vadd.f32 0.0, %v2722
      %2724 = vmatmul.f32.gmra.mxu0 %v2697
      %v2725 = vpop.f32.mrf.mxu0
      %v2726 = vadd.f32 0.0, %v2725
      %2727 = vmatmul.f32.gmra.mxu0 %v2700
      %v2728 = vpop.f32.mrf.mxu0
      %v2729 = vadd.f32 0.0, %v2728
      %2730 = vmatmul.f32.gmra.mxu0 %v2703
      %v2731 = vpop.f32.mrf.mxu0
      %v2732 = vadd.f32 0.0, %v2731
      %2733 = vdwg.mxu0
      %2734 = vst.msk [vmem:[#allocation3] sm:$0xff] %vm442, %v2723
      %2735 = vst.msk [vmem:[#allocation3 + $0x8] sm:$0xff] %vm442, %v2726
      %2736 = vst.msk [vmem:[#allocation3 + $0x10] sm:$0xff] %vm442, %v2729
      %2737 = vst.msk [vmem:[#allocation3 + $0x18] sm:$0xff] %vm442, %v2732
      %2738 = vrot.lane.b32.xlu0 %v1982, 56
      %v2739 = vpop.permute.xlu0 %2738
      %2740 = vrot.lane.b32.xlu0 %v1985, 56
      %v2741 = vpop.permute.xlu0 %2740
      %2742 = vrot.lane.b32.xlu0 %v1988, 56
      %v2743 = vpop.permute.xlu0 %2742
      %2744 = vrot.lane.b32.xlu0 %v1991, 56
      %v2745 = vpop.permute.xlu0 %2744
      %v2751 = vsel %vm282, %v2515, 0
      %v2754 = vsel %vm282, %v2530, 0
      %v2757 = vsel %vm282, %v2545, 0
      %v2760 = vsel %vm282, %v2560, 0
      %2762 = vmatpush.msra.mxu0 0.0
      %2763 = vmatpush.msra.mxu0 0.0
      %2764 = vmatpush.msra.mxu0 0.0
      %2765 = vmatpush.msra.mxu0 0.0
      %2766 = vmatpush.msra.mxu0 0.0
      %2767 = vmatpush.msra.mxu0 0.0
      %2768 = vmatpush.msra.mxu0 0.0
      %2769 = vmatpush.msra.mxu0 0.0
      %2770 = vmatpush.msra.mxu0 0.0
      %2771 = vmatpush.msra.mxu0 0.0
      %2772 = vmatpush.msra.mxu0 0.0
      %2773 = vmatpush.msra.mxu0 0.0
      %2774 = vmatpush.msra.mxu0 %v2745
      %2775 = vmatpush.msra.mxu0 %v2743
      %2776 = vmatpush.msra.mxu0 %v2741
      %2777 = vmatpush.msra.mxu0 %v2739
      %2778 = vmatmul.f32.gmra.mxu0 %v2751
      %v2779 = vpop.f32.mrf.mxu0
      %v2780 = vadd.f32 0.0, %v2779
      %2781 = vmatmul.f32.gmra.mxu0 %v2754
      %v2782 = vpop.f32.mrf.mxu0
      %v2783 = vadd.f32 0.0, %v2782
      %2784 = vmatmul.f32.gmra.mxu0 %v2757
      %v2785 = vpop.f32.mrf.mxu0
      %v2786 = vadd.f32 0.0, %v2785
      %2787 = vmatmul.f32.gmra.mxu0 %v2760
      %v2788 = vpop.f32.mrf.mxu0
      %v2789 = vadd.f32 0.0, %v2788
      %2790 = vdwg.mxu0
      %2795 = vrot.lane.b32.xlu0 %v2780, 8
      %v2796 = vpop.permute.xlu0 %2795
      %2797 = vrot.lane.b32.xlu0 %v2783, 8
      %v2798 = vpop.permute.xlu0 %2797
      %2799 = vrot.lane.b32.xlu0 %v2786, 8
      %v2800 = vpop.permute.xlu0 %2799
      %2801 = vrot.lane.b32.xlu0 %v2789, 8
      %v2802 = vpop.permute.xlu0 %2801
      %2807 = vst.msk [vmem:[#allocation3] sm:$0xff] %vm1248, %v2796
      %2808 = vst.msk [vmem:[#allocation3 + $0x8] sm:$0xff] %vm1248, %v2798
      %2809 = vst.msk [vmem:[#allocation3 + $0x10] sm:$0xff] %vm1248, %v2800
      %2810 = vst.msk [vmem:[#allocation3 + $0x18] sm:$0xff] %vm1248, %v2802
      %2811 = vrot.lane.b32.xlu0 %v1982, 48
      %v2812 = vpop.permute.xlu0 %2811
      %2813 = vrot.lane.b32.xlu0 %v1985, 48
      %v2814 = vpop.permute.xlu0 %2813
      %2815 = vrot.lane.b32.xlu0 %v1988, 48
      %v2816 = vpop.permute.xlu0 %2815
      %2817 = vrot.lane.b32.xlu0 %v1991, 48
      %v2818 = vpop.permute.xlu0 %2817
      %v2824 = vsel %vm282, %v2575, 0
      %v2827 = vsel %vm282, %v2590, 0
      %v2830 = vsel %vm282, %v2605, 0
      %v2833 = vsel %vm282, %v2620, 0
      %2835 = vmatpush.msra.mxu0 0.0
      %2836 = vmatpush.msra.mxu0 0.0
      %2837 = vmatpush.msra.mxu0 0.0
      %2838 = vmatpush.msra.mxu0 0.0
      %2839 = vmatpush.msra.mxu0 0.0
      %2840 = vmatpush.msra.mxu0 0.0
      %2841 = vmatpush.msra.mxu0 0.0
      %2842 = vmatpush.msra.mxu0 0.0
      %2843 = vmatpush.msra.mxu0 0.0
      %2844 = vmatpush.msra.mxu0 0.0
      %2845 = vmatpush.msra.mxu0 0.0
      %2846 = vmatpush.msra.mxu0 0.0
      %2847 = vmatpush.msra.mxu0 %v2818
      %2848 = vmatpush.msra.mxu0 %v2816
      %2849 = vmatpush.msra.mxu0 %v2814
      %2850 = vmatpush.msra.mxu0 %v2812
      %2851 = vmatmul.f32.gmra.mxu0 %v2824
      %v2852 = vpop.f32.mrf.mxu0
      %v2853 = vadd.f32 0.0, %v2852
      %2854 = vmatmul.f32.gmra.mxu0 %v2827
      %v2855 = vpop.f32.mrf.mxu0
      %v2856 = vadd.f32 0.0, %v2855
      %2857 = vmatmul.f32.gmra.mxu0 %v2830
      %v2858 = vpop.f32.mrf.mxu0
      %v2859 = vadd.f32 0.0, %v2858
      %2860 = vmatmul.f32.gmra.mxu0 %v2833
      %v2861 = vpop.f32.mrf.mxu0
      %v2862 = vadd.f32 0.0, %v2861
      %2863 = vdwg.mxu0
      %2868 = vrot.lane.b32.xlu0 %v2853, 16
      %v2869 = vpop.permute.xlu0 %2868
      %2870 = vrot.lane.b32.xlu0 %v2856, 16
      %v2871 = vpop.permute.xlu0 %2870
      %2872 = vrot.lane.b32.xlu0 %v2859, 16
      %v2873 = vpop.permute.xlu0 %2872
      %2874 = vrot.lane.b32.xlu0 %v2862, 16
      %v2875 = vpop.permute.xlu0 %2874
      %2880 = vst.msk [vmem:[#allocation3] sm:$0xff] %vm1322, %v2869
      %2881 = vst.msk [vmem:[#allocation3 + $0x8] sm:$0xff] %vm1322, %v2871
      %2882 = vst.msk [vmem:[#allocation3 + $0x10] sm:$0xff] %vm1322, %v2873
      %2883 = vst.msk [vmem:[#allocation3 + $0x18] sm:$0xff] %vm1322, %v2875
      %2884 = vrot.lane.b32.xlu0 %v1982, 40
      %v2885 = vpop.permute.xlu0 %2884
      %2886 = vrot.lane.b32.xlu0 %v1985, 40
      %v2887 = vpop.permute.xlu0 %2886
      %2888 = vrot.lane.b32.xlu0 %v1988, 40
      %v2889 = vpop.permute.xlu0 %2888
      %2890 = vrot.lane.b32.xlu0 %v1991, 40
      %v2891 = vpop.permute.xlu0 %2890
      %v2897 = vsel %vm282, %v2635, 0
      %v2900 = vsel %vm282, %v2650, 0
      %v2903 = vsel %vm282, %v2665, 0
      %v2906 = vsel %vm282, %v2680, 0
      %2908 = vmatpush.msra.mxu0 0.0
      %2909 = vmatpush.msra.mxu0 0.0
      %2910 = vmatpush.msra.mxu0 0.0
      %2911 = vmatpush.msra.mxu0 0.0
      %2912 = vmatpush.msra.mxu0 0.0
      %2913 = vmatpush.msra.mxu0 0.0
      %2914 = vmatpush.msra.mxu0 0.0
      %2915 = vmatpush.msra.mxu0 0.0
      %2916 = vmatpush.msra.mxu0 0.0
      %2917 = vmatpush.msra.mxu0 0.0
      %2918 = vmatpush.msra.mxu0 0.0
      %2919 = vmatpush.msra.mxu0 0.0
      %2920 = vmatpush.msra.mxu0 %v2891
      %2921 = vmatpush.msra.mxu0 %v2889
      %2922 = vmatpush.msra.mxu0 %v2887
      %2923 = vmatpush.msra.mxu0 %v2885
      %2924 = vmatmul.f32.gmra.mxu0 %v2897
      %v2925 = vpop.f32.mrf.mxu0
      %v2926 = vadd.f32 0.0, %v2925
      %2927 = vmatmul.f32.gmra.mxu0 %v2900
      %v2928 = vpop.f32.mrf.mxu0
      %v2929 = vadd.f32 0.0, %v2928
      %2930 = vmatmul.f32.gmra.mxu0 %v2903
      %v2931 = vpop.f32.mrf.mxu0
      %v2932 = vadd.f32 0.0, %v2931
      %2933 = vmatmul.f32.gmra.mxu0 %v2906
      %v2934 = vpop.f32.mrf.mxu0
      %v2935 = vadd.f32 0.0, %v2934
      %2936 = vdwg.mxu0
      %2941 = vrot.lane.b32.xlu0 %v2926, 24
      %v2942 = vpop.permute.xlu0 %2941
      %2943 = vrot.lane.b32.xlu0 %v2929, 24
      %v2944 = vpop.permute.xlu0 %2943
      %2945 = vrot.lane.b32.xlu0 %v2932, 24
      %v2946 = vpop.permute.xlu0 %2945
      %2947 = vrot.lane.b32.xlu0 %v2935, 24
      %v2948 = vpop.permute.xlu0 %2947
      %2953 = vst.msk [vmem:[#allocation3] sm:$0xff] %vm1396, %v2942
      %2954 = vst.msk [vmem:[#allocation3 + $0x8] sm:$0xff] %vm1396, %v2944
      %2955 = vst.msk [vmem:[#allocation3 + $0x10] sm:$0xff] %vm1396, %v2946
      %2956 = vst.msk [vmem:[#allocation3 + $0x18] sm:$0xff] %vm1396, %v2948
      %v2957 = vld [vmem:[#allocation3] sm:$0xff]
      %v2958 = vld [vmem:[#allocation3 + $0x8] sm:$0xff]
      %v2959 = vld [vmem:[#allocation3 + $0x10] sm:$0xff]
      %v2960 = vld [vmem:[#allocation3 + $0x18] sm:$0xff]
      %2965 = vrot.lane.b32.xlu0 %v1826, 32
      %v2966 = vpop.permute.xlu0 %2965
      %2967 = vrot.lane.b32.xlu0 %v1828, 32
      %v2968 = vpop.permute.xlu0 %2967
      %2969 = vrot.lane.b32.xlu0 %v1830, 32
      %v2970 = vpop.permute.xlu0 %2969
      %2971 = vrot.lane.b32.xlu0 %v1832, 32
      %v2972 = vpop.permute.xlu0 %2971
      %v2978 = vsel %vm282, %v2957, 0
      %v2981 = vsel %vm282, %v2958, 0
      %v2984 = vsel %vm282, %v2959, 0
      %v2987 = vsel %vm282, %v2960, 0
      %2989 = vmatpush.msra.mxu0 0.0
      %2990 = vmatpush.msra.mxu0 0.0
      %2991 = vmatpush.msra.mxu0 0.0
      %2992 = vmatpush.msra.mxu0 0.0
      %2993 = vmatpush.msra.mxu0 0.0
      %2994 = vmatpush.msra.mxu0 0.0
      %2995 = vmatpush.msra.mxu0 0.0
      %2996 = vmatpush.msra.mxu0 0.0
      %2997 = vmatpush.msra.mxu0 0.0
      %2998 = vmatpush.msra.mxu0 0.0
      %2999 = vmatpush.msra.mxu0 0.0
      %3000 = vmatpush.msra.mxu0 0.0
      %3001 = vmatpush.msra.mxu0 %v2972
      %3002 = vmatpush.msra.mxu0 %v2970
      %3003 = vmatpush.msra.mxu0 %v2968
      %3004 = vmatpush.msra.mxu0 %v2966
      %3005 = vmatmul.f32.gmra.mxu0 %v2978
      %v3006 = vpop.f32.mrf.mxu0
      %v3007 = vadd.f32 0.0, %v3006
      %3008 = vmatmul.f32.gmra.mxu0 %v2981
      %v3009 = vpop.f32.mrf.mxu0
      %v3010 = vadd.f32 0.0, %v3009
      %3011 = vmatmul.f32.gmra.mxu0 %v2984
      %v3012 = vpop.f32.mrf.mxu0
      %v3013 = vadd.f32 0.0, %v3012
      %3014 = vmatmul.f32.gmra.mxu0 %v2987
      %v3015 = vpop.f32.mrf.mxu0
      %v3016 = vadd.f32 0.0, %v3015
      %3017 = vdwg.mxu0
      %v3018 = vadd.f32 %v1821, %v3007
      %v3019 = vadd.f32 %v1822, %v3010
      %v3020 = vadd.f32 %v1823, %v3013
      %v3021 = vadd.f32 %v1824, %v3016
      %v3022 = vperm.slane %v1852, 3
      %v3023 = vadd.f32 %v3018, %v3022
      %v3024 = vadd.f32 %v3019, %v3022
      %v3025 = vadd.f32 %v3020, %v3022
      %v3026 = vadd.f32 %v3021, %v3022
      %v3027 = vsel %vm282, %v3023, 0.0
      %3028 = vadd.xlane.f32.xlu0 %v3027
      %v3029 = vpop.xlane.xlu0 %3028
      %v3030 = vsel %vm282, %v3024, 0.0
      %3031 = vadd.xlane.f32.xlu0 %v3030
      %v3032 = vpop.xlane.xlu0 %3031
      %v3033 = vsel %vm282, %v3025, 0.0
      %3034 = vadd.xlane.f32.xlu0 %v3033
      %v3035 = vpop.xlane.xlu0 %3034
      %v3036 = vsel %vm282, %v3026, 0.0
      %3037 = vadd.xlane.f32.xlu0 %v3036
      %v3038 = vpop.xlane.xlu0 %3037
      %v3039 = vmul.f32 %v3029, %v301
      %v3040 = vmul.f32 %v3032, %v301
      %v3041 = vmul.f32 %v3035, %v301
      %v3042 = vmul.f32 %v3038, %v301
      %v3043 = vsub.f32 %v3023, %v3039
      %v3044 = vsub.f32 %v3024, %v3040
      %v3045 = vsub.f32 %v3025, %v3041
      %v3046 = vsub.f32 %v3026, %v3042
      %v3047 = vmul.f32 %v3043, %v3043
      %v3048 = vmul.f32 %v3044, %v3044
      %v3049 = vmul.f32 %v3045, %v3045
      %v3050 = vmul.f32 %v3046, %v3046
      %v3051 = vsel %vm282, %v3047, 0.0
      %3052 = vadd.xlane.f32.xlu0 %v3051
      %v3053 = vpop.xlane.xlu0 %3052
      %v3054 = vsel %vm282, %v3048, 0.0
      %3055 = vadd.xlane.f32.xlu0 %v3054
      %v3056 = vpop.xlane.xlu0 %3055
      %v3057 = vsel %vm282, %v3049, 0.0
      %3058 = vadd.xlane.f32.xlu0 %v3057
      %v3059 = vpop.xlane.xlu0 %3058
      %v3060 = vsel %vm282, %v3050, 0.0
      %3061 = vadd.xlane.f32.xlu0 %v3060
      %v3062 = vpop.xlane.xlu0 %3061
      %v3063 = vmul.f32 %v3053, %v301
      %v3064 = vmul.f32 %v3056, %v301
      %v3065 = vmul.f32 %v3059, %v301
      %v3066 = vmul.f32 %v3062, %v301
      %v3067 = vadd.f32 %v3063, 1e-05
      %v3068 = vadd.f32 %v3064, 1e-05
      %v3069 = vadd.f32 %v3065, 1e-05
      %v3070 = vadd.f32 %v3066, 1e-05
      %v3071 = vrsqrt.pop %v3067
      %v3072 = vmul.f32 %v3071, %v3067
      %v3073 = vmul.f32 %v3072, %v3071
      %v3074 = vmul.f32 0.5, %v3073
      %v3075 = vsub.f32 1.5, %v3074
      %v3076 = vmul.f32 %v3071, %v3075
      %vm3077 = vweird.f32 %v3067
      %vm3078 = vweird.f32 %v3071
      %vm3079 = vmor %vm3077, %vm3078
      %v3080 = vsel %vm3079, %v3071, %v3076
      %v3081 = vrsqrt.pop %v3068
      %v3082 = vmul.f32 %v3081, %v3068
      %v3083 = vmul.f32 %v3082, %v3081
      %v3084 = vmul.f32 0.5, %v3083
      %v3085 = vsub.f32 1.5, %v3084
      %v3086 = vmul.f32 %v3081, %v3085
      %vm3087 = vweird.f32 %v3068
      %vm3088 = vweird.f32 %v3081
      %vm3089 = vmor %vm3087, %vm3088
      %v3090 = vsel %vm3089, %v3081, %v3086
      %v3091 = vrsqrt.pop %v3069
      %v3092 = vmul.f32 %v3091, %v3069
      %v3093 = vmul.f32 %v3092, %v3091
      %v3094 = vmul.f32 0.5, %v3093
      %v3095 = vsub.f32 1.5, %v3094
      %v3096 = vmul.f32 %v3091, %v3095
      %vm3097 = vweird.f32 %v3069
      %vm3098 = vweird.f32 %v3091
      %vm3099 = vmor %vm3097, %vm3098
      %v3100 = vsel %vm3099, %v3091, %v3096
      %v3101 = vrsqrt.pop %v3070
      %v3102 = vmul.f32 %v3101, %v3070
      %v3103 = vmul.f32 %v3102, %v3101
      %v3104 = vmul.f32 0.5, %v3103
      %v3105 = vsub.f32 1.5, %v3104
      %v3106 = vmul.f32 %v3101, %v3105
      %vm3107 = vweird.f32 %v3070
      %vm3108 = vweird.f32 %v3101
      %vm3109 = vmor %vm3107, %vm3108
      %v3110 = vsel %vm3109, %v3101, %v3106
      %v3111 = vmul.f32 %v3043, %v3080
      %v3112 = vmul.f32 %v3044, %v3090
      %v3113 = vmul.f32 %v3045, %v3100
      %v3114 = vmul.f32 %v3046, %v3110
      %v3115 = vperm.slane %v1852, 4
      %v3116 = vmul.f32 %v3111, %v3115
      %v3117 = vmul.f32 %v3112, %v3115
      %v3118 = vmul.f32 %v3113, %v3115
      %v3119 = vmul.f32 %v3114, %v3115
      %v3120 = vperm.slane %v1852, 5
      %v3121 = vadd.f32 %v3116, %v3120
      %v3122 = vadd.f32 %v3117, %v3120
      %v3123 = vadd.f32 %v3118, %v3120
      %v3124 = vadd.f32 %v3119, %v3120
      %v3125 = vperm.slane %v1852, 6
      %v3127 = vsel %vm282, %v3121, 0
      %v3130 = vsel %vm282, %v3122, 0
      %v3133 = vsel %vm282, %v3123, 0
      %v3136 = vsel %vm282, %v3124, 0
      %3138 = vmatpush.msra.mxu0 0.0
      %3139 = vmatpush.msra.mxu0 0.0
      %3140 = vmatpush.msra.mxu0 0.0
      %3141 = vmatpush.msra.mxu0 0.0
      %3142 = vmatpush.msra.mxu0 0.0
      %3143 = vmatpush.msra.mxu0 0.0
      %3144 = vmatpush.msra.mxu0 0.0
      %3145 = vmatpush.msra.mxu0 0.0
      %3146 = vmatpush.msra.mxu0 0.0
      %3147 = vmatpush.msra.mxu0 0.0
      %3148 = vmatpush.msra.mxu0 0.0
      %3149 = vmatpush.msra.mxu0 0.0
      %3150 = vmatpush.msra.mxu0 %v1833
      %3151 = vmatpush.msra.mxu0 %v1831
      %3152 = vmatpush.msra.mxu0 %v1829
      %3153 = vmatpush.msra.mxu0 %v1827
      %3154 = vmatmul.f32.gmra.mxu0 %v3127
      %v3155 = vpop.f32.mrf.mxu0
      %v3156 = vadd.f32 %v3125, %v3155
      %3157 = vmatmul.f32.gmra.mxu0 %v3130
      %v3158 = vpop.f32.mrf.mxu0
      %v3159 = vadd.f32 %v3125, %v3158
      %3160 = vmatmul.f32.gmra.mxu0 %v3133
      %v3161 = vpop.f32.mrf.mxu0
      %v3162 = vadd.f32 %v3125, %v3161
      %3163 = vmatmul.f32.gmra.mxu0 %v3136
      %v3164 = vpop.f32.mrf.mxu0
      %v3165 = vadd.f32 %v3125, %v3164
      %3166 = vdwg.mxu0
      %v3167 = vmul.f32 %v3156, 0.5
      %v3168 = vmul.f32 %v3159, 0.5
      %v3169 = vmul.f32 %v3162, 0.5
      %v3170 = vmul.f32 %v3165, 0.5
      %v3171 = vmul.f32 %v3156, 0.70710677
      %v3172 = vmul.f32 %v3159, 0.70710677
      %v3173 = vmul.f32 %v3162, 0.70710677
      %v3174 = vmul.f32 %v3165, 0.70710677
      %v3175 = vmul.f32 %v3171, %v3171
      %v3176 = vmin.f32 16.0, %v3175
      %v3177 = vmul.f32 %v3176, 2.1237322e-06
      %v3178 = vadd.f32 %v3177, 0.00028619796
      %v3179 = vmul.f32 %v3176, %v3178
      %v3180 = vadd.f32 %v3179, 0.0036580483
      %v3181 = vmul.f32 %v3176, %v3180
      %v3182 = vadd.f32 %v3181, 0.05243302
      %v3183 = vmul.f32 %v3176, %v3182
      %v3184 = vadd.f32 %v3183, 0.18741608
      %v3185 = vmul.f32 %v3176, %v3184
      %v3186 = vadd.f32 %v3185, 1.1283791
      %v3187 = vmul.f32 %v3171, %v3186
      %v3188 = vmul.f32 %v3176, 3.8918573e-05
      %v3189 = vadd.f32 %v3188, 0.001143296
      %v3190 = vmul.f32 %v3176, %v3189
      %v3191 = vadd.f32 %v3190, 0.014752088
      %v3192 = vmul.f32 %v3176, %v3191
      %v3193 = vadd.f32 %v3192, 0.112945676
      %v3194 = vmul.f32 %v3176, %v3193
      %v3195 = vadd.f32 %v3194, 0.4994258
      %v3196 = vmul.f32 %v3176, %v3195
      %v3197 = vadd.f32 %v3196, 1.0
      %v3198 = vrcp.pop %v3197
      %v3199 = vmul.f32 %v3197, %v3198
      %v3200 = vsub.f32 1.0, %v3199
      %v3201 = vmul.f32 %v3198, %v3200
      %v3202 = vadd.f32 %v3198, %v3201
      %vm3203 = vweird.f32 %v3197
      %vm3204 = vweird.f32 %v3198
      %vm3205 = vmor %vm3203, %vm3204
      %v3206 = vsel %vm3205, %v3198, %v3202
      %v3207 = vand.u32 2147483647, %v3197
      %vm3208 = vcmp.eq.f32.partialorder %v3207, 8.507059e+37
      %v3209 = vand.u32 %v3197, 2147483648
      %v3210 = vor.u32 1.1754944e-38, %v3209
      %v3211 = vsel %vm3208, %v3210, %v3206
      %v3212 = vmul.f32 %v3187, %v3211
      %v3213 = vmin.f32 %v3212, 1.0
      %v3214 = vmax.f32 %v3213, -1.0
      %v3215 = vmul.f32 %v3172, %v3172
      %v3216 = vmin.f32 16.0, %v3215
      %v3217 = vmul.f32 %v3216, 2.1237322e-06
      %v3218 = vadd.f32 %v3217, 0.00028619796
      %v3219 = vmul.f32 %v3216, %v3218
      %v3220 = vadd.f32 %v3219, 0.0036580483
      %v3221 = vmul.f32 %v3216, %v3220
      %v3222 = vadd.f32 %v3221, 0.05243302
      %v3223 = vmul.f32 %v3216, %v3222
      %v3224 = vadd.f32 %v3223, 0.18741608
      %v3225 = vmul.f32 %v3216, %v3224
      %v3226 = vadd.f32 %v3225, 1.1283791
      %v3227 = vmul.f32 %v3172, %v3226
      %v3228 = vmul.f32 %v3216, 3.8918573e-05
      %v3229 = vadd.f32 %v3228, 0.001143296
      %v3230 = vmul.f32 %v3216, %v3229
      %v3231 = vadd.f32 %v3230, 0.014752088
      %v3232 = vmul.f32 %v3216, %v3231
      %v3233 = vadd.f32 %v3232, 0.112945676
      %v3234 = vmul.f32 %v3216, %v3233
      %v3235 = vadd.f32 %v3234, 0.4994258
      %v3236 = vmul.f32 %v3216, %v3235
      %v3237 = vadd.f32 %v3236, 1.0
      %v3238 = vrcp.pop %v3237
      %v3239 = vmul.f32 %v3237, %v3238
      %v3240 = vsub.f32 1.0, %v3239
      %v3241 = vmul.f32 %v3238, %v3240
      %v3242 = vadd.f32 %v3238, %v3241
      %vm3243 = vweird.f32 %v3237
      %vm3244 = vweird.f32 %v3238
      %vm3245 = vmor %vm3243, %vm3244
      %v3246 = vsel %vm3245, %v3238, %v3242
      %v3247 = vand.u32 2147483647, %v3237
      %vm3248 = vcmp.eq.f32.partialorder %v3247, 8.507059e+37
      %v3249 = vand.u32 %v3237, 2147483648
      %v3250 = vor.u32 1.1754944e-38, %v3249
      %v3251 = vsel %vm3248, %v3250, %v3246
      %v3252 = vmul.f32 %v3227, %v3251
      %v3253 = vmin.f32 %v3252, 1.0
      %v3254 = vmax.f32 %v3253, -1.0
      %v3255 = vmul.f32 %v3173, %v3173
      %v3256 = vmin.f32 16.0, %v3255
      %v3257 = vmul.f32 %v3256, 2.1237322e-06
      %v3258 = vadd.f32 %v3257, 0.00028619796
      %v3259 = vmul.f32 %v3256, %v3258
      %v3260 = vadd.f32 %v3259, 0.0036580483
      %v3261 = vmul.f32 %v3256, %v3260
      %v3262 = vadd.f32 %v3261, 0.05243302
      %v3263 = vmul.f32 %v3256, %v3262
      %v3264 = vadd.f32 %v3263, 0.18741608
      %v3265 = vmul.f32 %v3256, %v3264
      %v3266 = vadd.f32 %v3265, 1.1283791
      %v3267 = vmul.f32 %v3173, %v3266
      %v3268 = vmul.f32 %v3256, 3.8918573e-05
      %v3269 = vadd.f32 %v3268, 0.001143296
      %v3270 = vmul.f32 %v3256, %v3269
      %v3271 = vadd.f32 %v3270, 0.014752088
      %v3272 = vmul.f32 %v3256, %v3271
      %v3273 = vadd.f32 %v3272, 0.112945676
      %v3274 = vmul.f32 %v3256, %v3273
      %v3275 = vadd.f32 %v3274, 0.4994258
      %v3276 = vmul.f32 %v3256, %v3275
      %v3277 = vadd.f32 %v3276, 1.0
      %v3278 = vrcp.pop %v3277
      %v3279 = vmul.f32 %v3277, %v3278
      %v3280 = vsub.f32 1.0, %v3279
      %v3281 = vmul.f32 %v3278, %v3280
      %v3282 = vadd.f32 %v3278, %v3281
      %vm3283 = vweird.f32 %v3277
      %vm3284 = vweird.f32 %v3278
      %vm3285 = vmor %vm3283, %vm3284
      %v3286 = vsel %vm3285, %v3278, %v3282
      %v3287 = vand.u32 2147483647, %v3277
      %vm3288 = vcmp.eq.f32.partialorder %v3287, 8.507059e+37
      %v3289 = vand.u32 %v3277, 2147483648
      %v3290 = vor.u32 1.1754944e-38, %v3289
      %v3291 = vsel %vm3288, %v3290, %v3286
      %v3292 = vmul.f32 %v3267, %v3291
      %v3293 = vmin.f32 %v3292, 1.0
      %v3294 = vmax.f32 %v3293, -1.0
      %v3295 = vmul.f32 %v3174, %v3174
      %v3296 = vmin.f32 16.0, %v3295
      %v3297 = vmul.f32 %v3296, 2.1237322e-06
      %v3298 = vadd.f32 %v3297, 0.00028619796
      %v3299 = vmul.f32 %v3296, %v3298
      %v3300 = vadd.f32 %v3299, 0.0036580483
      %v3301 = vmul.f32 %v3296, %v3300
      %v3302 = vadd.f32 %v3301, 0.05243302
      %v3303 = vmul.f32 %v3296, %v3302
      %v3304 = vadd.f32 %v3303, 0.18741608
      %v3305 = vmul.f32 %v3296, %v3304
      %v3306 = vadd.f32 %v3305, 1.1283791
      %v3307 = vmul.f32 %v3174, %v3306
      %v3308 = vmul.f32 %v3296, 3.8918573e-05
      %v3309 = vadd.f32 %v3308, 0.001143296
      %v3310 = vmul.f32 %v3296, %v3309
      %v3311 = vadd.f32 %v3310, 0.014752088
      %v3312 = vmul.f32 %v3296, %v3311
      %v3313 = vadd.f32 %v3312, 0.112945676
      %v3314 = vmul.f32 %v3296, %v3313
      %v3315 = vadd.f32 %v3314, 0.4994258
      %v3316 = vmul.f32 %v3296, %v3315
      %v3317 = vadd.f32 %v3316, 1.0
      %v3318 = vrcp.pop %v3317
      %v3319 = vmul.f32 %v3317, %v3318
      %v3320 = vsub.f32 1.0, %v3319
      %v3321 = vmul.f32 %v3318, %v3320
      %v3322 = vadd.f32 %v3318, %v3321
      %vm3323 = vweird.f32 %v3317
      %vm3324 = vweird.f32 %v3318
      %vm3325 = vmor %vm3323, %vm3324
      %v3326 = vsel %vm3325, %v3318, %v3322
      %v3327 = vand.u32 2147483647, %v3317
      %vm3328 = vcmp.eq.f32.partialorder %v3327, 8.507059e+37
      %v3329 = vand.u32 %v3317, 2147483648
      %v3330 = vor.u32 1.1754944e-38, %v3329
      %v3331 = vsel %vm3328, %v3330, %v3326
      %v3332 = vmul.f32 %v3307, %v3331
      %v3333 = vmin.f32 %v3332, 1.0
      %v3334 = vmax.f32 %v3333, -1.0
      %v3335 = vadd.f32 %v3214, 1.0
      %v3336 = vadd.f32 %v3254, 1.0
      %v3337 = vadd.f32 %v3294, 1.0
      %v3338 = vadd.f32 %v3334, 1.0
      %v3339 = vmul.f32 %v3167, %v3335
      %v3340 = vmul.f32 %v3168, %v3336
      %v3341 = vmul.f32 %v3169, %v3337
      %v3342 = vmul.f32 %v3170, %v3338
      %3343 = vmatpush.msra.mxu0 %v1850
      %3344 = vmatpush.msra.mxu0 %v1849
      %3345 = vmatpush.msra.mxu0 %v1848
      %3346 = vmatpush.msra.mxu0 %v1847
      %3347 = vmatpush.msra.mxu0 %v1846
      %3348 = vmatpush.msra.mxu0 %v1845
      %3349 = vmatpush.msra.mxu0 %v1844
      %3350 = vmatpush.msra.mxu0 %v1843
      %3351 = vmatpush.msra.mxu0 %v1842
      %3352 = vmatpush.msra.mxu0 %v1841
      %3353 = vmatpush.msra.mxu0 %v1840
      %3354 = vmatpush.msra.mxu0 %v1839
      %3355 = vmatpush.msra.mxu0 %v1838
      %3356 = vmatpush.msra.mxu0 %v1837
      %3357 = vmatpush.msra.mxu0 %v1836
      %3358 = vmatpush.msra.mxu0 %v1835
      %3359 = vmatmul.f32.gmra.mxu0 %v3339
      %v3360 = vpop.f32.mrf.mxu0
      %v3361 = vadd.f32 0.0, %v3360
      %3362 = vmatmul.f32.gmra.mxu0 %v3340
      %v3363 = vpop.f32.mrf.mxu0
      %v3364 = vadd.f32 0.0, %v3363
      %3365 = vmatmul.f32.gmra.mxu0 %v3341
      %v3366 = vpop.f32.mrf.mxu0
      %v3367 = vadd.f32 0.0, %v3366
      %3368 = vmatmul.f32.gmra.mxu0 %v3342
      %v3369 = vpop.f32.mrf.mxu0
      %v3370 = vadd.f32 0.0, %v3369
      %3371 = vdwg.mxu0
      %v3372 = vadd.f32 %v3023, %v3361
      %v3373 = vadd.f32 %v3024, %v3364
      %v3374 = vadd.f32 %v3025, %v3367
      %v3375 = vadd.f32 %v3026, %v3370
      %v3376 = vperm.slane %v1852, 7
      %v3377 = vadd.f32 %v3372, %v3376
      %v3378 = vadd.f32 %v3373, %v3376
      %v3379 = vadd.f32 %v3374, %v3376
      %v3380 = vadd.f32 %v3375, %v3376
      %v3381 = vld [vmem:[%s5] sm:$0x1]
      %v3382 = vld [vmem:[%s5 + $0x1] sm:$0x1]
      %v3383 = vsel %vm282, %v3377, 0.0
      %3384 = vadd.xlane.f32.xlu0 %v3383
      %v3385 = vpop.xlane.xlu0 %3384
      %v3386 = vsel %vm282, %v3378, 0.0
      %3387 = vadd.xlane.f32.xlu0 %v3386
      %v3388 = vpop.xlane.xlu0 %3387
      %v3389 = vsel %vm282, %v3379, 0.0
      %3390 = vadd.xlane.f32.xlu0 %v3389
      %v3391 = vpop.xlane.xlu0 %3390
      %v3392 = vsel %vm282, %v3380, 0.0
      %3393 = vadd.xlane.f32.xlu0 %v3392
      %v3394 = vpop.xlane.xlu0 %3393
      %v3395 = vmul.f32 %v3385, %v301
      %v3396 = vmul.f32 %v3388, %v301
      %v3397 = vmul.f32 %v3391, %v301
      %v3398 = vmul.f32 %v3394, %v301
      %v3399 = vsub.f32 %v3377, %v3395
      %v3400 = vsub.f32 %v3378, %v3396
      %v3401 = vsub.f32 %v3379, %v3397
      %v3402 = vsub.f32 %v3380, %v3398
      %v3403 = vmul.f32 %v3399, %v3399
      %v3404 = vmul.f32 %v3400, %v3400
      %v3405 = vmul.f32 %v3401, %v3401
      %v3406 = vmul.f32 %v3402, %v3402
      %v3407 = vsel %vm282, %v3403, 0.0
      %3408 = vadd.xlane.f32.xlu0 %v3407
      %v3409 = vpop.xlane.xlu0 %3408
      %v3410 = vsel %vm282, %v3404, 0.0
      %3411 = vadd.xlane.f32.xlu0 %v3410
      %v3412 = vpop.xlane.xlu0 %3411
      %v3413 = vsel %vm282, %v3405, 0.0
      %3414 = vadd.xlane.f32.xlu0 %v3413
      %v3415 = vpop.xlane.xlu0 %3414
      %v3416 = vsel %vm282, %v3406, 0.0
      %3417 = vadd.xlane.f32.xlu0 %v3416
      %v3418 = vpop.xlane.xlu0 %3417
      %v3419 = vmul.f32 %v3409, %v301
      %v3420 = vmul.f32 %v3412, %v301
      %v3421 = vmul.f32 %v3415, %v301
      %v3422 = vmul.f32 %v3418, %v301
      %v3423 = vadd.f32 %v3419, 1e-05
      %v3424 = vadd.f32 %v3420, 1e-05
      %v3425 = vadd.f32 %v3421, 1e-05
      %v3426 = vadd.f32 %v3422, 1e-05
      %v3427 = vrsqrt.pop %v3423
      %v3428 = vmul.f32 %v3427, %v3423
      %v3429 = vmul.f32 %v3428, %v3427
      %v3430 = vmul.f32 0.5, %v3429
      %v3431 = vsub.f32 1.5, %v3430
      %v3432 = vmul.f32 %v3427, %v3431
      %vm3433 = vweird.f32 %v3423
      %vm3434 = vweird.f32 %v3427
      %vm3435 = vmor %vm3433, %vm3434
      %v3436 = vsel %vm3435, %v3427, %v3432
      %v3437 = vrsqrt.pop %v3424
      %v3438 = vmul.f32 %v3437, %v3424
      %v3439 = vmul.f32 %v3438, %v3437
      %v3440 = vmul.f32 0.5, %v3439
      %v3441 = vsub.f32 1.5, %v3440
      %v3442 = vmul.f32 %v3437, %v3441
      %vm3443 = vweird.f32 %v3424
      %vm3444 = vweird.f32 %v3437
      %vm3445 = vmor %vm3443, %vm3444
      %v3446 = vsel %vm3445, %v3437, %v3442
      %v3447 = vrsqrt.pop %v3425
      %v3448 = vmul.f32 %v3447, %v3425
      %v3449 = vmul.f32 %v3448, %v3447
      %v3450 = vmul.f32 0.5, %v3449
      %v3451 = vsub.f32 1.5, %v3450
      %v3452 = vmul.f32 %v3447, %v3451
      %vm3453 = vweird.f32 %v3425
      %vm3454 = vweird.f32 %v3447
      %vm3455 = vmor %vm3453, %vm3454
      %v3456 = vsel %vm3455, %v3447, %v3452
      %v3457 = vrsqrt.pop %v3426
      %v3458 = vmul.f32 %v3457, %v3426
      %v3459 = vmul.f32 %v3458, %v3457
      %v3460 = vmul.f32 0.5, %v3459
      %v3461 = vsub.f32 1.5, %v3460
      %v3462 = vmul.f32 %v3457, %v3461
      %vm3463 = vweird.f32 %v3426
      %vm3464 = vweird.f32 %v3457
      %vm3465 = vmor %vm3463, %vm3464
      %v3466 = vsel %vm3465, %v3457, %v3462
      %v3467 = vmul.f32 %v3399, %v3436
      %v3468 = vmul.f32 %v3400, %v3446
      %v3469 = vmul.f32 %v3401, %v3456
      %v3470 = vmul.f32 %v3402, %v3466
      %v3471 = vperm.slane %v3381, 0
      %v3472 = vmul.f32 %v3467, %v3471
      %v3473 = vmul.f32 %v3468, %v3471
      %v3474 = vmul.f32 %v3469, %v3471
      %v3475 = vmul.f32 %v3470, %v3471
      %v3476 = vperm.slane %v3382, 0
      %v3477 = vadd.f32 %v3472, %v3476
      %v3478 = vadd.f32 %v3473, %v3476
      %v3479 = vadd.f32 %v3474, %v3476
      %v3480 = vadd.f32 %v3475, %v3476
      %3481 = vst.msk [vmem:[%s251] sm:$0xff] %vm282, %v3477
      %3482 = vst.msk [vmem:[%s251 + $0x8] sm:$0xff] %vm282, %v3478
      %3483 = vst.msk [vmem:[%s251 + $0x10] sm:$0xff] %vm282, %v3479
      %3484 = vst.msk [vmem:[%s251 + $0x18] sm:$0xff] %vm282, %v3480
      %p3485 = scmp.lt.s32.totalorder %s17, 1
      %s3486 = scalar_select %p3485, %s17, 1
      %s3487 = smul.addr %s3486, 4
      %s3488 = smul.addr %s3487, 8
      %s3489 = scalar_lea.vmem %s6, %s3488
      // Predicated region
      $region45: #{_lambda_.1} parent=43 // pred_check
        %p3490 = pneg %p166
      $region46: #{_lambda_.1} parent=43 // pred_check_branch
        %3492 = sbr.rel (%p3490) target = $region48
      $region47: #{_lambda_.1} parent=43 // pred_region
        _
      $region48: #{_lambda_.1} parent=43 // pred_fallthru
        _
    $region44: #{_lambda_.1} parent=5 // pred_fallthru
      _
    %p3493 = scmp.le.s32.totalorder 2, %s12
    // Predicated region
    $region49: #{_lambda_.1} parent=5 // pred_check
      %p3494 = pneg %p3493
    $region50: #{_lambda_.1} parent=5 // pred_check_branch
      %3496 = sbr.rel (%p3494) target = $region52
    $region51: #{_lambda_.1} parent=5 // pred_region
      %s3497 = ssub.s32 %s12, 2
      // Predicated region
      $region53: #{_lambda_.1} parent=51 // pred_check
        %p3498 = pneg %p172
      $region54: #{_lambda_.1} parent=51 // pred_check_branch
        %3500 = sbr.rel (%p3498) target = $region56
      $region55: #{_lambda_.1} parent=51 // pred_region
        %p3501 = scmp.lt.s32.totalorder %s18, 1
        %s3502 = scalar_select %p3501, %s18, 1
        %s3503 = smul.addr %s3502, 4
        %s3504 = smul.addr %s3503, 8
        %s3505 = scalar_lea.vmem %s6, %s3504
      $region56: #{_lambda_.1} parent=51 // pred_fallthru
        _
    $region52: #{_lambda_.1} parent=5 // pred_fallthru
      _
  $region6: #{_lambda_.1} parent=0 // loop_footer
    %s16 = sadd.s32 1, %s12
  $region7: #{_lambda_.1} parent=0 // loop_footer_branch
    %11 = sbr.rel target = $region3
  $region8: #{_lambda_.1} parent=0 // loop_exit
    _

</llo_original>
